<compile_context>
chip_gen: v7x
topology: tpu7x:2x2x1
jax: 0.10.0
libtpu: 0.0.40
codegen_flags: <defaults>
</compile_context>

<pallas_src>
import numpy as np
import jax
import jax.numpy as jnp
from jax import lax
from jax.experimental import pallas as pl
from jax.experimental.pallas import tpu as pltpu  # noqa: F401  (TPU backend)

EPS = 1e-5
K = 3          # kernel size of every ConvTranspose2d
STRIDE = 2

# (Hin, Hout, pad, Cin, Cout) for tconv1..3 ; spatial dims are square.
LAYER_CFG = [
    (4, 8, 1, 64, 32),
    (8, 14, 2, 32, 16),
    (14, 28, 1, 16, 1),
]


# ---------------------------------------------------------------------------
# The single fused Pallas kernel
# ---------------------------------------------------------------------------
def decoder_kernel(z_ref, wl_ref, bl_ref, e_ref,
                   r1_ref, m1_ref, t1_ref,
                   r2_ref, m2_ref, t2_ref,
                   r3_ref, m3_ref, t3_ref,
                   o_ref):
    f32 = jnp.float32

    # Linear: (B, latent) @ (latent, 1024) + bias.  Columns were pre-permuted
    # to (h, w, c) order so the "view(-1, 64, 4, 4)" of the PyTorch module is
    # pure row bookkeeping below (no in-kernel relayout).
    y = jnp.dot(z_ref[...], wl_ref[...], preferred_element_type=f32) + bl_ref[...]

    # Build A0 of shape (B*4, 4*64): row (b, h) <- y[b, h*256:(h+1)*256].
    # Done with 4 tiny 0/1 row-embedding matmuls on 128-aligned lane slices
    # (no reshape across the lane dimension inside the kernel).
    n_h = e_ref.shape[0]
    chunk = bl_ref.shape[1] // n_h
    a = None
    for h in range(n_h):
        piece = jnp.dot(e_ref[h], y[:, h * chunk:(h + 1) * chunk],
                        preferred_element_type=f32)
        a = piece if a is None else a + piece

    def tconv(a, r_ref, m_ref, t_ref, act):
        # A_out = act( sum_kh R_kh @ (A_in @ M_kh) + shift_row )
        acc = None
        for kh in range(K):                      # static unroll (K=3)
            am = jnp.dot(a, m_ref[kh], preferred_element_type=f32)
            term = jnp.dot(r_ref[kh], am, preferred_element_type=f32)
            acc = term if acc is None else acc + term
        acc = acc + t_ref[...]
        if act == "relu":
            return jnp.maximum(acc, 0.0)
        return jax.nn.sigmoid(acc)

    a = tconv(a, r1_ref, m1_ref, t1_ref, "relu")      # (B*8,  8*32)
    a = tconv(a, r2_ref, m2_ref, t2_ref, "relu")      # (B*14, 14*16)
    a = tconv(a, r3_ref, m3_ref, t3_ref, "sigmoid")   # (B*28, 28*1)
    o_ref[...] = a


# ---------------------------------------------------------------------------
# One-time operand preparation (numpy for 0/1 maps, tiny jnp folds for weights)
# ---------------------------------------------------------------------------
def _row_select(Hin, Hout, pad, batch):
    """R_kh[(b, oh), (b, ih)] = 1  iff  oh = ih*stride - pad + kh."""
    r = np.zeros((K, batch * Hout, batch * Hin), np.float32)
    for kh in range(K):
        for ih in range(Hin):
            oh = ih * STRIDE - pad + kh
            if 0 <= oh < Hout:
                for b in range(batch):
                    r[kh, b * Hout + oh, b * Hin + ih] = 1.0
    return r


def _col_indicator(Win, Wout, pad):
    """ind[iw, ow, kw] = 1  iff  ow = iw*stride - pad + kw."""
    ind = np.zeros((Win, Wout, K), np.float32)
    for iw in range(Win):
        for kw in range(K):
            ow = iw * STRIDE - pad + kw
            if 0 <= ow < Wout:
                ind[iw, ow, kw] = 1.0
    return ind


def _linear_perm():
    # new column (h*4 + w)*64 + c  <-  old column c*16 + h*4 + w  (NCHW view)
    perm = np.zeros(1024, np.int32)
    for h in range(4):
        for w in range(4):
            for c in range(64):
                perm[(h * 4 + w) * 64 + c] = c * 16 + h * 4 + w
    return perm


def _embed_rows(batch, n_h):
    """E_h[(b, h'), b'] = 1  iff  h' == h and b' == b."""
    e = np.zeros((n_h, batch * n_h, batch), np.float32)
    for h in range(n_h):
        for b in range(batch):
            e[h, b * n_h + h, b] = 1.0
    return e


def precompute_operands(params, batch):
    """Fold weights / bias / BN into the R, M, shift operands of the kernel."""
    perm = _linear_perm()
    ops = {
        "wl": params["lin_w"].T[:, perm],          # (latent, 1024), permuted
        "bl": params["lin_b"][perm][None, :],      # (1, 1024)
        "E": jnp.asarray(_embed_rows(batch, 4)),   # (4, B*4, B)
    }
    names = [("w1", "b1", "bn1"), ("w2", "b2", "bn2"), ("w3", "b3", None)]
    for idx, ((wn, bname, bnn), (Hin, Hout, pad, Cin, Cout)) in enumerate(
            zip(names, LAYER_CFG), start=1):
        w_t = params[wn]                            # (Cin, Cout, K, K)
        bias = params[bname]                        # (Cout,)
        if bnn is not None:
            g, be, mu, var = params[bnn]
            scale = g / jnp.sqrt(var + EPS)
            bn_shift = be - mu * scale
        else:
            scale = jnp.ones((Cout,), jnp.float32)
            bn_shift = jnp.zeros((Cout,), jnp.float32)
        ind = _col_indicator(Hin, Hout, pad)        # (Win, Wout, K)
        w_s = w_t * scale[None, :, None, None]      # BN scale folded into M
        # M[kh, iw*Cin + c, ow*Cout + d] = sum_kw ind[iw, ow, kw] * w_s[c, d, kh, kw]
        m = jnp.einsum("xok,cdhk->hxcod", jnp.asarray(ind), w_s)
        m = m.reshape(K, Hin * Cin, Hout * Cout)
        ops[f"r{idx}"] = jnp.asarray(_row_select(Hin, Hout, pad, batch))
        ops[f"m{idx}"] = m
        ops[f"t{idx}"] = jnp.tile(bias * scale + bn_shift, Hout)[None, :]
    return ops


# ---------------------------------------------------------------------------
# Forward: a single pallas_call, all operands resident in VMEM, no grid
# ---------------------------------------------------------------------------
@jax.jit
def decoder_forward(z, ops):
    batch = z.shape[0]
    out2d = pl.pallas_call(
        decoder_kernel,
        out_shape=jax.ShapeDtypeStruct((batch * 28, 28), jnp.float32),
    )(z, ops["wl"], ops["bl"], ops["E"],
      ops["r1"], ops["m1"], ops["t1"],
      ops["r2"], ops["m2"], ops["t2"],
      ops["r3"], ops["m3"], ops["t3"])
    # (B*28, 28) is row-major identical to NHWC (B,28,28,1) -> NCHW (B,1,28,28)
    return out2d.reshape(batch, 1, 28, 28)


# ---------------------------------------------------------------------------
# Pure-JAX reference (XLA conv with lhs_dilation) for correctness checking
# ---------------------------------------------------------------------------
def ref_forward(z, params):
    y = jnp.dot(z, params["lin_w"].T, precision=lax.Precision.HIGHEST) + params["lin_b"]
    x = y.reshape(-1, 64, 4, 4).transpose(0, 2, 3, 1)

    def tconv(x, w_t, stride, pad, out_pad):
        k = w_t.shape[2]
        w_hwio = jnp.flip(w_t, axis=(2, 3)).transpose(2, 3, 0, 1)
        return lax.conv_general_dilated(
            x, w_hwio, window_strides=(1, 1),
            padding=[(k - 1 - pad, k - 1 - pad + out_pad)] * 2,
            lhs_dilation=(stride, stride),
            dimension_numbers=("NHWC", "HWIO", "NHWC"),
            precision=lax.Precision.HIGHEST)

    g, be, m, v = params["bn1"]
    x = tconv(x, params["w1"], 2, 1, 1) + params["b1"]
    x = (x - m) / jnp.sqrt(v + EPS) * g + be
    x = jnp.maximum(x, 0.0)
    g, be, m, v = params["bn2"]
    x = tconv(x, params["w2"], 2, 2, 1) + params["b2"]
    x = (x - m) / jnp.sqrt(v + EPS) * g + be
    x = jnp.maximum(x, 0.0)
    x = tconv(x, params["w3"], 2, 1, 1) + params["b3"]
    x = jax.nn.sigmoid(x)
    return x.transpose(0, 3, 1, 2)


# ---------------------------------------------------------------------------
# Deterministic parameter init (shapes from Decoder.__init__)
# ---------------------------------------------------------------------------
def init_params(key, latent_dim):
    ks = jax.random.split(key, 16)
    p = {}
    p["lin_w"] = 0.05 * jax.random.normal(ks[0], (1024, latent_dim), jnp.float32)
    p["lin_b"] = 0.05 * jax.random.normal(ks[1], (1024,), jnp.float32)

    def tconv_params(kw_, kb_, cin, cout):
        w = 0.05 * jax.random.normal(kw_, (cin, cout, 3, 3), jnp.float32)
        b = 0.05 * jax.random.normal(kb_, (cout,), jnp.float32)
        return w, b

    p["w1"], p["b1"] = tconv_params(ks[2], ks[3], 64, 32)
    p["w2"], p["b2"] = tconv_params(ks[4], ks[5], 32, 16)
    p["w3"], p["b3"] = tconv_params(ks[6], ks[7], 16, 1)

    def bn_params(kg, kb, km, kv, c):
        gamma = 1.0 + 0.1 * jax.random.normal(kg, (c,), jnp.float32)
        beta = 0.1 * jax.random.normal(kb, (c,), jnp.float32)
        mean = 0.1 * jax.random.normal(km, (c,), jnp.float32)
        var = 1.0 + 0.1 * jnp.abs(jax.random.normal(kv, (c,), jnp.float32))
        return gamma, beta, mean, var

    p["bn1"] = bn_params(ks[8], ks[9], ks[10], ks[11], 32)
    p["bn2"] = bn_params(ks[12], ks[13], ks[14], ks[15], 16)
    return p


if __name__ == "__main__":
    latent_dim = 8
    batch = 2
    key = jax.random.PRNGKey(0)
    kz, kp = jax.random.split(key)
    params = init_params(kp, latent_dim)
    z = jax.random.normal(kz, (batch, latent_dim), jnp.float32)

    ops = precompute_operands(params, batch)      # one-time weight folding
    out = jax.block_until_ready(decoder_forward(z, ops))
    assert out.shape == (batch, 1, 28, 28), out.shape

    ref = ref_forward(z, params)
    np.testing.assert_allclose(np.asarray(out), np.asarray(ref), rtol=5e-3, atol=5e-3)

    print("KERNEL_OK")
</pallas_src>

<mosaic_0001>
module attributes {stable_mosaic.version = 11 : i64} {
  func.func @decoder_kernel(%arg0: memref<2x8xf32, #tpu.memory_space<vmem>>, %arg1: memref<8x1024xf32, #tpu.memory_space<vmem>>, %arg2: memref<1x1024xf32, #tpu.memory_space<vmem>>, %arg3: memref<4x8x2xf32, #tpu.memory_space<vmem>>, %arg4: memref<3x16x8xf32, #tpu.memory_space<vmem>>, %arg5: memref<3x256x256xf32, #tpu.memory_space<vmem>>, %arg6: memref<1x256xf32, #tpu.memory_space<vmem>>, %arg7: memref<3x28x16xf32, #tpu.memory_space<vmem>>, %arg8: memref<3x256x224xf32, #tpu.memory_space<vmem>>, %arg9: memref<1x224xf32, #tpu.memory_space<vmem>>, %arg10: memref<3x56x28xf32, #tpu.memory_space<vmem>>, %arg11: memref<3x224x28xf32, #tpu.memory_space<vmem>>, %arg12: memref<1x28xf32, #tpu.memory_space<vmem>>, %arg13: memref<56x28xf32, #tpu.memory_space<vmem>>) attributes {dimension_semantics = [], scalar_prefetch = 0 : i64, scratch_operands = 0 : i64, tpu.core_type = #tpu.core_type<tc>} {
    %c0 = arith.constant 0 : index
    %c0_0 = arith.constant 0 : index
    %0 = vector.load %arg0[%c0, %c0_0] : memref<2x8xf32, #tpu.memory_space<vmem>>, vector<2x8xf32>
    %c0_1 = arith.constant 0 : index
    %c0_2 = arith.constant 0 : index
    %1 = vector.load %arg1[%c0_1, %c0_2] : memref<8x1024xf32, #tpu.memory_space<vmem>>, vector<8x1024xf32>
    %cst = arith.constant dense<0.000000e+00> : vector<2x1024xf32>
    %2 = tpu.matmul %0, %1, %cst {dimension_numbers = #tpu.dot_dimension_numbers<[1], [0], [0], [1], [0, 0, 1, 1], [], []>} : vector<2x8xf32>, vector<8x1024xf32>, vector<2x1024xf32> -> vector<2x1024xf32>
    %c0_3 = arith.constant 0 : index
    %c0_4 = arith.constant 0 : index
    %3 = vector.load %arg2[%c0_3, %c0_4] : memref<1x1024xf32, #tpu.memory_space<vmem>>, vector<1x1024xf32>
    %4 = vector.broadcast %3 : vector<1x1024xf32> to vector<2x1024xf32>
    %5 = arith.addf %2, %4 : vector<2x1024xf32>
    %c0_5 = arith.constant 0 : index
    %c0_6 = arith.constant 0 : index
    %c0_7 = arith.constant 0 : index
    %6 = vector.load %arg3[%c0_5, %c0_6, %c0_7] : memref<4x8x2xf32, #tpu.memory_space<vmem>>, vector<1x8x2xf32>
    %7 = vector.shape_cast %6 : vector<1x8x2xf32> to vector<8x2xf32>
    %8 = vector.extract_strided_slice %5 {offsets = [0, 0], sizes = [2, 256], strides = [1, 1]} : vector<2x1024xf32> to vector<2x256xf32>
    %cst_8 = arith.constant dense<0.000000e+00> : vector<8x256xf32>
    %9 = tpu.matmul %7, %8, %cst_8 {dimension_numbers = #tpu.dot_dimension_numbers<[1], [0], [0], [1], [0, 0, 1, 1], [], []>} : vector<8x2xf32>, vector<2x256xf32>, vector<8x256xf32> -> vector<8x256xf32>
    %c1 = arith.constant 1 : index
    %c0_9 = arith.constant 0 : index
    %c0_10 = arith.constant 0 : index
    %10 = vector.load %arg3[%c1, %c0_9, %c0_10] : memref<4x8x2xf32, #tpu.memory_space<vmem>>, vector<1x8x2xf32>
    %11 = vector.shape_cast %10 : vector<1x8x2xf32> to vector<8x2xf32>
    %12 = vector.extract_strided_slice %5 {offsets = [0, 256], sizes = [2, 256], strides = [1, 1]} : vector<2x1024xf32> to vector<2x256xf32>
    %cst_11 = arith.constant dense<0.000000e+00> : vector<8x256xf32>
    %13 = tpu.matmul %11, %12, %cst_11 {dimension_numbers = #tpu.dot_dimension_numbers<[1], [0], [0], [1], [0, 0, 1, 1], [], []>} : vector<8x2xf32>, vector<2x256xf32>, vector<8x256xf32> -> vector<8x256xf32>
    %14 = arith.addf %9, %13 : vector<8x256xf32>
    %c2 = arith.constant 2 : index
    %c0_12 = arith.constant 0 : index
    %c0_13 = arith.constant 0 : index
    %15 = vector.load %arg3[%c2, %c0_12, %c0_13] : memref<4x8x2xf32, #tpu.memory_space<vmem>>, vector<1x8x2xf32>
    %16 = vector.shape_cast %15 : vector<1x8x2xf32> to vector<8x2xf32>
    %17 = vector.extract_strided_slice %5 {offsets = [0, 512], sizes = [2, 256], strides = [1, 1]} : vector<2x1024xf32> to vector<2x256xf32>
    %cst_14 = arith.constant dense<0.000000e+00> : vector<8x256xf32>
    %18 = tpu.matmul %16, %17, %cst_14 {dimension_numbers = #tpu.dot_dimension_numbers<[1], [0], [0], [1], [0, 0, 1, 1], [], []>} : vector<8x2xf32>, vector<2x256xf32>, vector<8x256xf32> -> vector<8x256xf32>
    %19 = arith.addf %14, %18 : vector<8x256xf32>
    %c3 = arith.constant 3 : index
    %c0_15 = arith.constant 0 : index
    %c0_16 = arith.constant 0 : index
    %20 = vector.load %arg3[%c3, %c0_15, %c0_16] : memref<4x8x2xf32, #tpu.memory_space<vmem>>, vector<1x8x2xf32>
    %21 = vector.shape_cast %20 : vector<1x8x2xf32> to vector<8x2xf32>
    %22 = vector.extract_strided_slice %5 {offsets = [0, 768], sizes = [2, 256], strides = [1, 1]} : vector<2x1024xf32> to vector<2x256xf32>
    %cst_17 = arith.constant dense<0.000000e+00> : vector<8x256xf32>
    %23 = tpu.matmul %21, %22, %cst_17 {dimension_numbers = #tpu.dot_dimension_numbers<[1], [0], [0], [1], [0, 0, 1, 1], [], []>} : vector<8x2xf32>, vector<2x256xf32>, vector<8x256xf32> -> vector<8x256xf32>
    %24 = arith.addf %19, %23 : vector<8x256xf32>
    %c0_18 = arith.constant 0 : index
    %c0_19 = arith.constant 0 : index
    %c0_20 = arith.constant 0 : index
    %25 = vector.load %arg5[%c0_18, %c0_19, %c0_20] : memref<3x256x256xf32, #tpu.memory_space<vmem>>, vector<1x256x256xf32>
    %26 = vector.shape_cast %25 : vector<1x256x256xf32> to vector<256x256xf32>
    %cst_21 = arith.constant dense<0.000000e+00> : vector<8x256xf32>
    %27 = tpu.matmul %24, %26, %cst_21 {dimension_numbers = #tpu.dot_dimension_numbers<[1], [0], [0], [1], [0, 0, 1, 1], [], []>} : vector<8x256xf32>, vector<256x256xf32>, vector<8x256xf32> -> vector<8x256xf32>
    %c0_22 = arith.constant 0 : index
    %c0_23 = arith.constant 0 : index
    %c0_24 = arith.constant 0 : index
    %28 = vector.load %arg4[%c0_22, %c0_23, %c0_24] : memref<3x16x8xf32, #tpu.memory_space<vmem>>, vector<1x16x8xf32>
    %29 = vector.shape_cast %28 : vector<1x16x8xf32> to vector<16x8xf32>
    %cst_25 = arith.constant dense<0.000000e+00> : vector<16x256xf32>
    %30 = tpu.matmul %29, %27, %cst_25 {dimension_numbers = #tpu.dot_dimension_numbers<[1], [0], [0], [1], [0, 0, 1, 1], [], []>} : vector<16x8xf32>, vector<8x256xf32>, vector<16x256xf32> -> vector<16x256xf32>
    %c1_26 = arith.constant 1 : index
    %c0_27 = arith.constant 0 : index
    %c0_28 = arith.constant 0 : index
    %31 = vector.load %arg5[%c1_26, %c0_27, %c0_28] : memref<3x256x256xf32, #tpu.memory_space<vmem>>, vector<1x256x256xf32>
    %32 = vector.shape_cast %31 : vector<1x256x256xf32> to vector<256x256xf32>
    %cst_29 = arith.constant dense<0.000000e+00> : vector<8x256xf32>
    %33 = tpu.matmul %24, %32, %cst_29 {dimension_numbers = #tpu.dot_dimension_numbers<[1], [0], [0], [1], [0, 0, 1, 1], [], []>} : vector<8x256xf32>, vector<256x256xf32>, vector<8x256xf32> -> vector<8x256xf32>
    %c1_30 = arith.constant 1 : index
    %c0_31 = arith.constant 0 : index
    %c0_32 = arith.constant 0 : index
    %34 = vector.load %arg4[%c1_30, %c0_31, %c0_32] : memref<3x16x8xf32, #tpu.memory_space<vmem>>, vector<1x16x8xf32>
    %35 = vector.shape_cast %34 : vector<1x16x8xf32> to vector<16x8xf32>
    %cst_33 = arith.constant dense<0.000000e+00> : vector<16x256xf32>
    %36 = tpu.matmul %35, %33, %cst_33 {dimension_numbers = #tpu.dot_dimension_numbers<[1], [0], [0], [1], [0, 0, 1, 1], [], []>} : vector<16x8xf32>, vector<8x256xf32>, vector<16x256xf32> -> vector<16x256xf32>
    %37 = arith.addf %30, %36 : vector<16x256xf32>
    %c2_34 = arith.constant 2 : index
    %c0_35 = arith.constant 0 : index
    %c0_36 = arith.constant 0 : index
    %38 = vector.load %arg5[%c2_34, %c0_35, %c0_36] : memref<3x256x256xf32, #tpu.memory_space<vmem>>, vector<1x256x256xf32>
    %39 = vector.shape_cast %38 : vector<1x256x256xf32> to vector<256x256xf32>
    %cst_37 = arith.constant dense<0.000000e+00> : vector<8x256xf32>
    %40 = tpu.matmul %24, %39, %cst_37 {dimension_numbers = #tpu.dot_dimension_numbers<[1], [0], [0], [1], [0, 0, 1, 1], [], []>} : vector<8x256xf32>, vector<256x256xf32>, vector<8x256xf32> -> vector<8x256xf32>
    %c2_38 = arith.constant 2 : index
    %c0_39 = arith.constant 0 : index
    %c0_40 = arith.constant 0 : index
    %41 = vector.load %arg4[%c2_38, %c0_39, %c0_40] : memref<3x16x8xf32, #tpu.memory_space<vmem>>, vector<1x16x8xf32>
    %42 = vector.shape_cast %41 : vector<1x16x8xf32> to vector<16x8xf32>
    %cst_41 = arith.constant dense<0.000000e+00> : vector<16x256xf32>
    %43 = tpu.matmul %42, %40, %cst_41 {dimension_numbers = #tpu.dot_dimension_numbers<[1], [0], [0], [1], [0, 0, 1, 1], [], []>} : vector<16x8xf32>, vector<8x256xf32>, vector<16x256xf32> -> vector<16x256xf32>
    %44 = arith.addf %37, %43 : vector<16x256xf32>
    %c0_42 = arith.constant 0 : index
    %c0_43 = arith.constant 0 : index
    %45 = vector.load %arg6[%c0_42, %c0_43] : memref<1x256xf32, #tpu.memory_space<vmem>>, vector<1x256xf32>
    %46 = vector.broadcast %45 : vector<1x256xf32> to vector<16x256xf32>
    %47 = arith.addf %44, %46 : vector<16x256xf32>
    %cst_44 = arith.constant 0.000000e+00 : f32
    %48 = vector.broadcast %cst_44 : f32 to vector<16x256xf32>
    %49 = arith.maximumf %47, %48 : vector<16x256xf32>
    %c0_45 = arith.constant 0 : index
    %c0_46 = arith.constant 0 : index
    %c0_47 = arith.constant 0 : index
    %50 = vector.load %arg8[%c0_45, %c0_46, %c0_47] : memref<3x256x224xf32, #tpu.memory_space<vmem>>, vector<1x256x224xf32>
    %51 = vector.shape_cast %50 : vector<1x256x224xf32> to vector<256x224xf32>
    %cst_48 = arith.constant dense<0.000000e+00> : vector<16x224xf32>
    %52 = tpu.matmul %49, %51, %cst_48 {dimension_numbers = #tpu.dot_dimension_numbers<[1], [0], [0], [1], [0, 0, 1, 1], [], []>} : vector<16x256xf32>, vector<256x224xf32>, vector<16x224xf32> -> vector<16x224xf32>
    %c0_49 = arith.constant 0 : index
    %c0_50 = arith.constant 0 : index
    %c0_51 = arith.constant 0 : index
    %53 = vector.load %arg7[%c0_49, %c0_50, %c0_51] : memref<3x28x16xf32, #tpu.memory_space<vmem>>, vector<1x28x16xf32>
    %54 = vector.shape_cast %53 : vector<1x28x16xf32> to vector<28x16xf32>
    %cst_52 = arith.constant dense<0.000000e+00> : vector<28x224xf32>
    %55 = tpu.matmul %54, %52, %cst_52 {dimension_numbers = #tpu.dot_dimension_numbers<[1], [0], [0], [1], [0, 0, 1, 1], [], []>} : vector<28x16xf32>, vector<16x224xf32>, vector<28x224xf32> -> vector<28x224xf32>
    %c1_53 = arith.constant 1 : index
    %c0_54 = arith.constant 0 : index
    %c0_55 = arith.constant 0 : index
    %56 = vector.load %arg8[%c1_53, %c0_54, %c0_55] : memref<3x256x224xf32, #tpu.memory_space<vmem>>, vector<1x256x224xf32>
    %57 = vector.shape_cast %56 : vector<1x256x224xf32> to vector<256x224xf32>
    %cst_56 = arith.constant dense<0.000000e+00> : vector<16x224xf32>
    %58 = tpu.matmul %49, %57, %cst_56 {dimension_numbers = #tpu.dot_dimension_numbers<[1], [0], [0], [1], [0, 0, 1, 1], [], []>} : vector<16x256xf32>, vector<256x224xf32>, vector<16x224xf32> -> vector<16x224xf32>
    %c1_57 = arith.constant 1 : index
    %c0_58 = arith.constant 0 : index
    %c0_59 = arith.constant 0 : index
    %59 = vector.load %arg7[%c1_57, %c0_58, %c0_59] : memref<3x28x16xf32, #tpu.memory_space<vmem>>, vector<1x28x16xf32>
    %60 = vector.shape_cast %59 : vector<1x28x16xf32> to vector<28x16xf32>
    %cst_60 = arith.constant dense<0.000000e+00> : vector<28x224xf32>
    %61 = tpu.matmul %60, %58, %cst_60 {dimension_numbers = #tpu.dot_dimension_numbers<[1], [0], [0], [1], [0, 0, 1, 1], [], []>} : vector<28x16xf32>, vector<16x224xf32>, vector<28x224xf32> -> vector<28x224xf32>
    %62 = arith.addf %55, %61 : vector<28x224xf32>
    %c2_61 = arith.constant 2 : index
    %c0_62 = arith.constant 0 : index
    %c0_63 = arith.constant 0 : index
    %63 = vector.load %arg8[%c2_61, %c0_62, %c0_63] : memref<3x256x224xf32, #tpu.memory_space<vmem>>, vector<1x256x224xf32>
    %64 = vector.shape_cast %63 : vector<1x256x224xf32> to vector<256x224xf32>
    %cst_64 = arith.constant dense<0.000000e+00> : vector<16x224xf32>
    %65 = tpu.matmul %49, %64, %cst_64 {dimension_numbers = #tpu.dot_dimension_numbers<[1], [0], [0], [1], [0, 0, 1, 1], [], []>} : vector<16x256xf32>, vector<256x224xf32>, vector<16x224xf32> -> vector<16x224xf32>
    %c2_65 = arith.constant 2 : index
    %c0_66 = arith.constant 0 : index
    %c0_67 = arith.constant 0 : index
    %66 = vector.load %arg7[%c2_65, %c0_66, %c0_67] : memref<3x28x16xf32, #tpu.memory_space<vmem>>, vector<1x28x16xf32>
    %67 = vector.shape_cast %66 : vector<1x28x16xf32> to vector<28x16xf32>
    %cst_68 = arith.constant dense<0.000000e+00> : vector<28x224xf32>
    %68 = tpu.matmul %67, %65, %cst_68 {dimension_numbers = #tpu.dot_dimension_numbers<[1], [0], [0], [1], [0, 0, 1, 1], [], []>} : vector<28x16xf32>, vector<16x224xf32>, vector<28x224xf32> -> vector<28x224xf32>
    %69 = arith.addf %62, %68 : vector<28x224xf32>
    %c0_69 = arith.constant 0 : index
    %c0_70 = arith.constant 0 : index
    %70 = vector.load %arg9[%c0_69, %c0_70] : memref<1x224xf32, #tpu.memory_space<vmem>>, vector<1x224xf32>
    %71 = vector.broadcast %70 : vector<1x224xf32> to vector<28x224xf32>
    %72 = arith.addf %69, %71 : vector<28x224xf32>
    %cst_71 = arith.constant 0.000000e+00 : f32
    %73 = vector.broadcast %cst_71 : f32 to vector<28x224xf32>
    %74 = arith.maximumf %72, %73 : vector<28x224xf32>
    %c0_72 = arith.constant 0 : index
    %c0_73 = arith.constant 0 : index
    %c0_74 = arith.constant 0 : index
    %75 = vector.load %arg11[%c0_72, %c0_73, %c0_74] : memref<3x224x28xf32, #tpu.memory_space<vmem>>, vector<1x224x28xf32>
    %76 = vector.shape_cast %75 : vector<1x224x28xf32> to vector<224x28xf32>
    %cst_75 = arith.constant dense<0.000000e+00> : vector<28x28xf32>
    %77 = tpu.matmul %74, %76, %cst_75 {dimension_numbers = #tpu.dot_dimension_numbers<[1], [0], [0], [1], [0, 0, 1, 1], [], []>} : vector<28x224xf32>, vector<224x28xf32>, vector<28x28xf32> -> vector<28x28xf32>
    %c0_76 = arith.constant 0 : index
    %c0_77 = arith.constant 0 : index
    %c0_78 = arith.constant 0 : index
    %78 = vector.load %arg10[%c0_76, %c0_77, %c0_78] : memref<3x56x28xf32, #tpu.memory_space<vmem>>, vector<1x56x28xf32>
    %79 = vector.shape_cast %78 : vector<1x56x28xf32> to vector<56x28xf32>
    %cst_79 = arith.constant dense<0.000000e+00> : vector<56x28xf32>
    %80 = tpu.matmul %79, %77, %cst_79 {dimension_numbers = #tpu.dot_dimension_numbers<[1], [0], [0], [1], [0, 0, 1, 1], [], []>} : vector<56x28xf32>, vector<28x28xf32>, vector<56x28xf32> -> vector<56x28xf32>
    %c1_80 = arith.constant 1 : index
    %c0_81 = arith.constant 0 : index
    %c0_82 = arith.constant 0 : index
    %81 = vector.load %arg11[%c1_80, %c0_81, %c0_82] : memref<3x224x28xf32, #tpu.memory_space<vmem>>, vector<1x224x28xf32>
    %82 = vector.shape_cast %81 : vector<1x224x28xf32> to vector<224x28xf32>
    %cst_83 = arith.constant dense<0.000000e+00> : vector<28x28xf32>
    %83 = tpu.matmul %74, %82, %cst_83 {dimension_numbers = #tpu.dot_dimension_numbers<[1], [0], [0], [1], [0, 0, 1, 1], [], []>} : vector<28x224xf32>, vector<224x28xf32>, vector<28x28xf32> -> vector<28x28xf32>
    %c1_84 = arith.constant 1 : index
    %c0_85 = arith.constant 0 : index
    %c0_86 = arith.constant 0 : index
    %84 = vector.load %arg10[%c1_84, %c0_85, %c0_86] : memref<3x56x28xf32, #tpu.memory_space<vmem>>, vector<1x56x28xf32>
    %85 = vector.shape_cast %84 : vector<1x56x28xf32> to vector<56x28xf32>
    %cst_87 = arith.constant dense<0.000000e+00> : vector<56x28xf32>
    %86 = tpu.matmul %85, %83, %cst_87 {dimension_numbers = #tpu.dot_dimension_numbers<[1], [0], [0], [1], [0, 0, 1, 1], [], []>} : vector<56x28xf32>, vector<28x28xf32>, vector<56x28xf32> -> vector<56x28xf32>
    %87 = arith.addf %80, %86 : vector<56x28xf32>
    %c2_88 = arith.constant 2 : index
    %c0_89 = arith.constant 0 : index
    %c0_90 = arith.constant 0 : index
    %88 = vector.load %arg11[%c2_88, %c0_89, %c0_90] : memref<3x224x28xf32, #tpu.memory_space<vmem>>, vector<1x224x28xf32>
    %89 = vector.shape_cast %88 : vector<1x224x28xf32> to vector<224x28xf32>
    %cst_91 = arith.constant dense<0.000000e+00> : vector<28x28xf32>
    %90 = tpu.matmul %74, %89, %cst_91 {dimension_numbers = #tpu.dot_dimension_numbers<[1], [0], [0], [1], [0, 0, 1, 1], [], []>} : vector<28x224xf32>, vector<224x28xf32>, vector<28x28xf32> -> vector<28x28xf32>
    %c2_92 = arith.constant 2 : index
    %c0_93 = arith.constant 0 : index
    %c0_94 = arith.constant 0 : index
    %91 = vector.load %arg10[%c2_92, %c0_93, %c0_94] : memref<3x56x28xf32, #tpu.memory_space<vmem>>, vector<1x56x28xf32>
    %92 = vector.shape_cast %91 : vector<1x56x28xf32> to vector<56x28xf32>
    %cst_95 = arith.constant dense<0.000000e+00> : vector<56x28xf32>
    %93 = tpu.matmul %92, %90, %cst_95 {dimension_numbers = #tpu.dot_dimension_numbers<[1], [0], [0], [1], [0, 0, 1, 1], [], []>} : vector<56x28xf32>, vector<28x28xf32>, vector<56x28xf32> -> vector<56x28xf32>
    %94 = arith.addf %87, %93 : vector<56x28xf32>
    %c0_96 = arith.constant 0 : index
    %c0_97 = arith.constant 0 : index
    %95 = vector.load %arg12[%c0_96, %c0_97] : memref<1x28xf32, #tpu.memory_space<vmem>>, vector<1x28xf32>
    %96 = vector.broadcast %95 : vector<1x28xf32> to vector<56x28xf32>
    %97 = arith.addf %94, %96 : vector<56x28xf32>
    %98 = arith.negf %97 : vector<56x28xf32>
    %99 = math.exp %98 : vector<56x28xf32>
    %cst_98 = arith.constant 1.000000e+00 : f32
    %100 = vector.broadcast %cst_98 : f32 to vector<56x28xf32>
    %101 = arith.addf %100, %99 : vector<56x28xf32>
    %102 = arith.divf %100, %101 : vector<56x28xf32>
    %c0_99 = arith.constant 0 : index
    %c0_100 = arith.constant 0 : index
    %103 = vector.load %arg13[%c0_99, %c0_100] : memref<56x28xf32, #tpu.memory_space<vmem>>, vector<56x28xf32>
    tpu.vector_store %arg13[%c0_99, %c0_100], %102 {strides = array<i32>} : memref<56x28xf32, #tpu.memory_space<vmem>>, vector<56x28xf32>,
    return
  }
}

</mosaic_0001>

<llo_original>
// kernel: decoder_forward.1
$region0: #{decoder_forward.1}
  #allocation0 [shape = 'u32[]', space=smem, size = 0x4, offset = 0x4, fixed_abs, tag = 'smem constant byte address 0x4 - core index']
  #allocation1 [shape = 'u32[144,128]{1,0:T(1,128)}', space=vmem, size = 0x12000, scoped, tag = 'internal scratch']
  %s0 = inlined_call_operand.vmem [shape: f32[2,8], index: 0, kind: input, shape index: {}]
  %s1 = inlined_call_operand.vmem [shape: f32[8,1024], index: 1, kind: input, shape index: {}]
  %s2 = inlined_call_operand.vmem [shape: f32[1,1024], index: 2, kind: input, shape index: {}]
  %s3 = inlined_call_operand.vmem [shape: f32[4,8,2], index: 3, kind: input, shape index: {}]
  %s4 = inlined_call_operand.vmem [shape: f32[3,16,8], index: 4, kind: input, shape index: {}]
  %s5 = inlined_call_operand.vmem [shape: f32[3,256,256], index: 5, kind: input, shape index: {}]
  %s6 = inlined_call_operand.vmem [shape: f32[1,256], index: 6, kind: input, shape index: {}]
  %s7 = inlined_call_operand.vmem [shape: f32[3,28,16], index: 7, kind: input, shape index: {}]
  %s8 = inlined_call_operand.vmem [shape: f32[3,256,224], index: 8, kind: input, shape index: {}]
  %s9 = inlined_call_operand.vmem [shape: f32[1,224], index: 9, kind: input, shape index: {}]
  %s10 = inlined_call_operand.vmem [shape: f32[3,56,28], index: 10, kind: input, shape index: {}]
  %s11 = inlined_call_operand.vmem [shape: f32[3,224,28], index: 11, kind: input, shape index: {}]
  %s12 = inlined_call_operand.vmem [shape: f32[1,28], index: 12, kind: input, shape index: {}]
  %s13 = inlined_call_operand.hbm [shape: f32[56,28], index: 13, kind: output, shape index: {}]
  %s14 = sld [smem:[#allocation0]]
  $region62: #{decoder_forward.1} parent=0
    _
  %s16 = ssub.s32 1, %s14
  %s17 = scalar_select 0, %s16, %s14
  $region1: #{decoder_forward.1} parent=0
    #allocation2 [shape = 'u8[28672]{0}', space=vmem, size = 0x7000, scoped, tag = 'output window, operand 0, single buffered']
    #allocation3 [shape = 's32[1]{0}', space=sflag, size = 0x4, scoped, tag = 'scoped memory for decoder_forward.1']
    %18 = vsyncpa [#allocation3], 0
    // Predicated region
    $region2: #{decoder_forward.1} parent=1 // pred_check
      _
    $region3: #{decoder_forward.1} parent=1 // pred_check_branch
      %20 = sbr.rel (0) target = $region5
    $region4: #{decoder_forward.1} parent=1 // pred_region
      _
    $region5: #{decoder_forward.1} parent=1 // pred_fallthru
      _
    // Predicated region
    $region6: #{decoder_forward.1} parent=1 // pred_check
      _
    $region7: #{decoder_forward.1} parent=1 // pred_check_branch
      %22 = sbr.rel (0) target = $region9
    $region8: #{decoder_forward.1} parent=1 // pred_region
      _
    $region9: #{decoder_forward.1} parent=1 // pred_fallthru
      _
    // Predicated region
    $region10: #{decoder_forward.1} parent=1 // pred_check
      _
    $region11: #{decoder_forward.1} parent=1 // pred_check_branch
      %24 = sbr.rel (0) target = $region13
    $region12: #{decoder_forward.1} parent=1 // pred_region
      _
    $region13: #{decoder_forward.1} parent=1 // pred_fallthru
      _
    // Predicated region
    $region14: #{decoder_forward.1} parent=1 // pred_check
      _
    $region15: #{decoder_forward.1} parent=1 // pred_check_branch
      %26 = sbr.rel (0) target = $region17
    $region16: #{decoder_forward.1} parent=1 // pred_region
      _
    $region17: #{decoder_forward.1} parent=1 // pred_fallthru
      _
    // Predicated region
    $region18: #{decoder_forward.1} parent=1 // pred_check
      _
    $region19: #{decoder_forward.1} parent=1 // pred_check_branch
      %28 = sbr.rel (0) target = $region21
    $region20: #{decoder_forward.1} parent=1 // pred_region
      _
    $region21: #{decoder_forward.1} parent=1 // pred_fallthru
      _
    // Predicated region
    $region22: #{decoder_forward.1} parent=1 // pred_check
      _
    $region23: #{decoder_forward.1} parent=1 // pred_check_branch
      %30 = sbr.rel (0) target = $region25
    $region24: #{decoder_forward.1} parent=1 // pred_region
      _
    $region25: #{decoder_forward.1} parent=1 // pred_fallthru
      _
    // Predicated region
    $region26: #{decoder_forward.1} parent=1 // pred_check
      _
    $region27: #{decoder_forward.1} parent=1 // pred_check_branch
      %32 = sbr.rel (0) target = $region29
    $region28: #{decoder_forward.1} parent=1 // pred_region
      _
    $region29: #{decoder_forward.1} parent=1 // pred_fallthru
      _
    // Predicated region
    $region30: #{decoder_forward.1} parent=1 // pred_check
      _
    $region31: #{decoder_forward.1} parent=1 // pred_check_branch
      %34 = sbr.rel (0) target = $region33
    $region32: #{decoder_forward.1} parent=1 // pred_region
      _
    $region33: #{decoder_forward.1} parent=1 // pred_fallthru
      _
    // Predicated region
    $region34: #{decoder_forward.1} parent=1 // pred_check
      _
    $region35: #{decoder_forward.1} parent=1 // pred_check_branch
      %36 = sbr.rel (0) target = $region37
    $region36: #{decoder_forward.1} parent=1 // pred_region
      _
    $region37: #{decoder_forward.1} parent=1 // pred_fallthru
      _
    // Predicated region
    $region38: #{decoder_forward.1} parent=1 // pred_check
      _
    $region39: #{decoder_forward.1} parent=1 // pred_check_branch
      %38 = sbr.rel (0) target = $region41
    $region40: #{decoder_forward.1} parent=1 // pred_region
      _
    $region41: #{decoder_forward.1} parent=1 // pred_fallthru
      _
    // Predicated region
    $region42: #{decoder_forward.1} parent=1 // pred_check
      _
    $region43: #{decoder_forward.1} parent=1 // pred_check_branch
      %40 = sbr.rel (0) target = $region45
    $region44: #{decoder_forward.1} parent=1 // pred_region
      _
    $region45: #{decoder_forward.1} parent=1 // pred_fallthru
      _
    // Predicated region
    $region46: #{decoder_forward.1} parent=1 // pred_check
      _
    $region47: #{decoder_forward.1} parent=1 // pred_check_branch
      %42 = sbr.rel (0) target = $region49
    $region48: #{decoder_forward.1} parent=1 // pred_region
      _
    $region49: #{decoder_forward.1} parent=1 // pred_fallthru
      _
    // Predicated region
    $region50: #{decoder_forward.1} parent=1 // pred_check
      _
    $region51: #{decoder_forward.1} parent=1 // pred_check_branch
      %44 = sbr.rel (0) target = $region53
    $region52: #{decoder_forward.1} parent=1 // pred_region
      _
    $region53: #{decoder_forward.1} parent=1 // pred_fallthru
      _
    %v45 = vld [vmem:[%s0] sm:$0x3]
    %v46 = vld [vmem:[%s1] sm:$0xff]
    %v47 = vld [vmem:[%s1 + $0x8] sm:$0xff]
    %v48 = vld [vmem:[%s1 + $0x10] sm:$0xff]
    %v49 = vld [vmem:[%s1 + $0x18] sm:$0xff]
    %v50 = vld [vmem:[%s1 + $0x20] sm:$0xff]
    %v51 = vld [vmem:[%s1 + $0x28] sm:$0xff]
    %v52 = vld [vmem:[%s1 + $0x30] sm:$0xff]
    %v53 = vld [vmem:[%s1 + $0x38] sm:$0xff]
    %v54 = vld [vmem:[%s2] sm:$0xff]
    %v56 = vlaneseq
    %v57 = vshrl.u32 %v56, 7
    %v58 = vsub.s32 0, %v57
    %v59 = vrot.slane %v54, %v58
    %v60 = vlaneseq
    %v61 = vshrl.u32 %v60, 7
    %v62 = vsub.s32 1, %v61
    %v63 = vrot.slane %v54, %v62
    %v64 = vlaneseq
    %v65 = vshrl.u32 %v64, 7
    %v66 = vsub.s32 2, %v65
    %v67 = vrot.slane %v54, %v66
    %v68 = vlaneseq
    %v69 = vshrl.u32 %v68, 7
    %v70 = vsub.s32 3, %v69
    %v71 = vrot.slane %v54, %v70
    %v72 = vlaneseq
    %v73 = vshrl.u32 %v72, 7
    %v74 = vsub.s32 4, %v73
    %v75 = vrot.slane %v54, %v74
    %v76 = vlaneseq
    %v77 = vshrl.u32 %v76, 7
    %v78 = vsub.s32 5, %v77
    %v79 = vrot.slane %v54, %v78
    %v80 = vlaneseq
    %v81 = vshrl.u32 %v80, 7
    %v82 = vsub.s32 6, %v81
    %v83 = vrot.slane %v54, %v82
    %v84 = vlaneseq
    %v85 = vshrl.u32 %v84, 7
    %v86 = vsub.s32 7, %v85
    %v87 = vrot.slane %v54, %v86
    %vm96 = vcmask 64512
    %v98 = vsel %vm96, %v45, 0
    %100 = vmatprep.subr.mxu0 %v47
    %101 = vmatpush1.msra.mxu0 %v46
    %102 = vmatprep.subr.mxu0 0.0
    %103 = vmatpush1.msra.mxu0 0.0
    %104 = vmatprep.subr.mxu0 0.0
    %105 = vmatpush1.msra.mxu0 0.0
    %106 = vmatprep.subr.mxu0 0.0
    %107 = vmatpush1.msra.mxu0 0.0
    %108 = vmatprep.subr.mxu0 0.0
    %109 = vmatpush1.msra.mxu0 0.0
    %110 = vmatprep.subr.mxu0 0.0
    %111 = vmatpush1.msra.mxu0 0.0
    %112 = vmatprep.subr.mxu0 0.0
    %113 = vmatpush1.msra.mxu0 0.0
    %114 = vmatprep.subr.mxu0 0.0
    %115 = vmatpush1.msra.mxu0 0.0
    %116 = vmatprep.subr.mxu0 0.0
    %117 = vmatpush1.msra.mxu0 0.0
    %118 = vmatprep.subr.mxu0 0.0
    %119 = vmatpush1.msra.mxu0 0.0
    %120 = vmatprep.subr.mxu0 0.0
    %121 = vmatpush1.msra.mxu0 0.0
    %122 = vmatprep.subr.mxu0 0.0
    %123 = vmatpush1.msra.mxu0 0.0
    %124 = vmatprep.subr.mxu0 0.0
    %125 = vmatpush1.msra.mxu0 0.0
    %126 = vmatprep.subr.mxu0 0.0
    %127 = vmatpush1.msra.mxu0 0.0
    %128 = vmatprep.subr.mxu0 0.0
    %129 = vmatpush1.msra.mxu0 0.0
    %130 = vmatprep.subr.mxu0 0.0
    %131 = vmatpush1.msra.mxu0 0.0
    %132 = vmatprep.subr.mxu0 0.0
    %133 = vmatpush1.msra.mxu0 0.0
    %134 = vmatprep.subr.mxu0 0.0
    %135 = vmatpush1.msra.mxu0 0.0
    %136 = vmatprep.subr.mxu0 0.0
    %137 = vmatpush1.msra.mxu0 0.0
    %138 = vmatprep.subr.mxu0 0.0
    %139 = vmatpush1.msra.mxu0 0.0
    %140 = vmatprep.subr.mxu0 0.0
    %141 = vmatpush1.msra.mxu0 0.0
    %142 = vmatprep.subr.mxu0 0.0
    %143 = vmatpush1.msra.mxu0 0.0
    %144 = vmatprep.subr.mxu0 0.0
    %145 = vmatpush1.msra.mxu0 0.0
    %146 = vmatprep.subr.mxu0 0.0
    %147 = vmatpush1.msra.mxu0 0.0
    %148 = vmatprep.subr.mxu0 0.0
    %149 = vmatpush1.msra.mxu0 0.0
    %150 = vmatprep.subr.mxu0 0.0
    %151 = vmatpush1.msra.mxu0 0.0
    %152 = vmatprep.subr.mxu0 0.0
    %153 = vmatpush1.msra.mxu0 0.0
    %154 = vmatprep.subr.mxu0 0.0
    %155 = vmatpush1.msra.mxu0 0.0
    %156 = vmatprep.subr.mxu0 0.0
    %157 = vmatpush1.msra.mxu0 0.0
    %158 = vmatprep.subr.mxu0 0.0
    %159 = vmatpush1.msra.mxu0 0.0
    %160 = vmatprep.subr.mxu0 0.0
    %161 = vmatpush1.msra.mxu0 0.0
    %162 = vmatprep.subr.mxu0 0.0
    %163 = vmatpush1.msra.mxu0 0.0
    %164 = vmatprep.mubr.f32.mxu0 0.0
    %165 = vmatmul.mubr.f32.gmra.mrb[0].mxu0 %v98
    %v166 = vpop.f32.mrb[0].mxu0
    %v167 = vadd.f32 %v59, %v166
    %v168 = vpop.f32.mrb[0].mxu0
    %v169 = vadd.f32 %v63, %v168
    %170 = vdwg.mxu0
    %171 = vmatprep.subr.mxu0 %v49
    %172 = vmatpush1.msra.mxu0 %v48
    %173 = vmatprep.subr.mxu0 0.0
    %174 = vmatpush1.msra.mxu0 0.0
    %175 = vmatprep.subr.mxu0 0.0
    %176 = vmatpush1.msra.mxu0 0.0
    %177 = vmatprep.subr.mxu0 0.0
    %178 = vmatpush1.msra.mxu0 0.0
    %179 = vmatprep.subr.mxu0 0.0
    %180 = vmatpush1.msra.mxu0 0.0
    %181 = vmatprep.subr.mxu0 0.0
    %182 = vmatpush1.msra.mxu0 0.0
    %183 = vmatprep.subr.mxu0 0.0
    %184 = vmatpush1.msra.mxu0 0.0
    %185 = vmatprep.subr.mxu0 0.0
    %186 = vmatpush1.msra.mxu0 0.0
    %187 = vmatprep.subr.mxu0 0.0
    %188 = vmatpush1.msra.mxu0 0.0
    %189 = vmatprep.subr.mxu0 0.0
    %190 = vmatpush1.msra.mxu0 0.0
    %191 = vmatprep.subr.mxu0 0.0
    %192 = vmatpush1.msra.mxu0 0.0
    %193 = vmatprep.subr.mxu0 0.0
    %194 = vmatpush1.msra.mxu0 0.0
    %195 = vmatprep.subr.mxu0 0.0
    %196 = vmatpush1.msra.mxu0 0.0
    %197 = vmatprep.subr.mxu0 0.0
    %198 = vmatpush1.msra.mxu0 0.0
    %199 = vmatprep.subr.mxu0 0.0
    %200 = vmatpush1.msra.mxu0 0.0
    %201 = vmatprep.subr.mxu0 0.0
    %202 = vmatpush1.msra.mxu0 0.0
    %203 = vmatprep.subr.mxu0 0.0
    %204 = vmatpush1.msra.mxu0 0.0
    %205 = vmatprep.subr.mxu0 0.0
    %206 = vmatpush1.msra.mxu0 0.0
    %207 = vmatprep.subr.mxu0 0.0
    %208 = vmatpush1.msra.mxu0 0.0
    %209 = vmatprep.subr.mxu0 0.0
    %210 = vmatpush1.msra.mxu0 0.0
    %211 = vmatprep.subr.mxu0 0.0
    %212 = vmatpush1.msra.mxu0 0.0
    %213 = vmatprep.subr.mxu0 0.0
    %214 = vmatpush1.msra.mxu0 0.0
    %215 = vmatprep.subr.mxu0 0.0
    %216 = vmatpush1.msra.mxu0 0.0
    %217 = vmatprep.subr.mxu0 0.0
    %218 = vmatpush1.msra.mxu0 0.0
    %219 = vmatprep.subr.mxu0 0.0
    %220 = vmatpush1.msra.mxu0 0.0
    %221 = vmatprep.subr.mxu0 0.0
    %222 = vmatpush1.msra.mxu0 0.0
    %223 = vmatprep.subr.mxu0 0.0
    %224 = vmatpush1.msra.mxu0 0.0
    %225 = vmatprep.subr.mxu0 0.0
    %226 = vmatpush1.msra.mxu0 0.0
    %227 = vmatprep.subr.mxu0 0.0
    %228 = vmatpush1.msra.mxu0 0.0
    %229 = vmatprep.subr.mxu0 0.0
    %230 = vmatpush1.msra.mxu0 0.0
    %231 = vmatprep.subr.mxu0 0.0
    %232 = vmatpush1.msra.mxu0 0.0
    %233 = vmatprep.subr.mxu0 0.0
    %234 = vmatpush1.msra.mxu0 0.0
    %235 = vmatprep.mubr.f32.mxu0 0.0
    %236 = vmatmul.mubr.f32.gmra.mrb[0].mxu0 %v98
    %v237 = vpop.f32.mrb[0].mxu0
    %v238 = vadd.f32 %v67, %v237
    %v239 = vpop.f32.mrb[0].mxu0
    %v240 = vadd.f32 %v71, %v239
    %241 = vdwg.mxu0
    %242 = vmatprep.subr.mxu0 %v51
    %243 = vmatpush1.msra.mxu0 %v50
    %244 = vmatprep.subr.mxu0 0.0
    %245 = vmatpush1.msra.mxu0 0.0
    %246 = vmatprep.subr.mxu0 0.0
    %247 = vmatpush1.msra.mxu0 0.0
    %248 = vmatprep.subr.mxu0 0.0
    %249 = vmatpush1.msra.mxu0 0.0
    %250 = vmatprep.subr.mxu0 0.0
    %251 = vmatpush1.msra.mxu0 0.0
    %252 = vmatprep.subr.mxu0 0.0
    %253 = vmatpush1.msra.mxu0 0.0
    %254 = vmatprep.subr.mxu0 0.0
    %255 = vmatpush1.msra.mxu0 0.0
    %256 = vmatprep.subr.mxu0 0.0
    %257 = vmatpush1.msra.mxu0 0.0
    %258 = vmatprep.subr.mxu0 0.0
    %259 = vmatpush1.msra.mxu0 0.0
    %260 = vmatprep.subr.mxu0 0.0
    %261 = vmatpush1.msra.mxu0 0.0
    %262 = vmatprep.subr.mxu0 0.0
    %263 = vmatpush1.msra.mxu0 0.0
    %264 = vmatprep.subr.mxu0 0.0
    %265 = vmatpush1.msra.mxu0 0.0
    %266 = vmatprep.subr.mxu0 0.0
    %267 = vmatpush1.msra.mxu0 0.0
    %268 = vmatprep.subr.mxu0 0.0
    %269 = vmatpush1.msra.mxu0 0.0
    %270 = vmatprep.subr.mxu0 0.0
    %271 = vmatpush1.msra.mxu0 0.0
    %272 = vmatprep.subr.mxu0 0.0
    %273 = vmatpush1.msra.mxu0 0.0
    %274 = vmatprep.subr.mxu0 0.0
    %275 = vmatpush1.msra.mxu0 0.0
    %276 = vmatprep.subr.mxu0 0.0
    %277 = vmatpush1.msra.mxu0 0.0
    %278 = vmatprep.subr.mxu0 0.0
    %279 = vmatpush1.msra.mxu0 0.0
    %280 = vmatprep.subr.mxu0 0.0
    %281 = vmatpush1.msra.mxu0 0.0
    %282 = vmatprep.subr.mxu0 0.0
    %283 = vmatpush1.msra.mxu0 0.0
    %284 = vmatprep.subr.mxu0 0.0
    %285 = vmatpush1.msra.mxu0 0.0
    %286 = vmatprep.subr.mxu0 0.0
    %287 = vmatpush1.msra.mxu0 0.0
    %288 = vmatprep.subr.mxu0 0.0
    %289 = vmatpush1.msra.mxu0 0.0
    %290 = vmatprep.subr.mxu0 0.0
    %291 = vmatpush1.msra.mxu0 0.0
    %292 = vmatprep.subr.mxu0 0.0
    %293 = vmatpush1.msra.mxu0 0.0
    %294 = vmatprep.subr.mxu0 0.0
    %295 = vmatpush1.msra.mxu0 0.0
    %296 = vmatprep.subr.mxu0 0.0
    %297 = vmatpush1.msra.mxu0 0.0
    %298 = vmatprep.subr.mxu0 0.0
    %299 = vmatpush1.msra.mxu0 0.0
    %300 = vmatprep.subr.mxu0 0.0
    %301 = vmatpush1.msra.mxu0 0.0
    %302 = vmatprep.subr.mxu0 0.0
    %303 = vmatpush1.msra.mxu0 0.0
    %304 = vmatprep.subr.mxu0 0.0
    %305 = vmatpush1.msra.mxu0 0.0
    %306 = vmatprep.mubr.f32.mxu0 0.0
    %307 = vmatmul.mubr.f32.gmra.mrb[0].mxu0 %v98
    %v308 = vpop.f32.mrb[0].mxu0
    %v309 = vadd.f32 %v75, %v308
    %v310 = vpop.f32.mrb[0].mxu0
    %v311 = vadd.f32 %v79, %v310
    %312 = vdwg.mxu0
    %313 = vmatprep.subr.mxu0 %v53
    %314 = vmatpush1.msra.mxu0 %v52
    %315 = vmatprep.subr.mxu0 0.0
    %316 = vmatpush1.msra.mxu0 0.0
    %317 = vmatprep.subr.mxu0 0.0
    %318 = vmatpush1.msra.mxu0 0.0
    %319 = vmatprep.subr.mxu0 0.0
    %320 = vmatpush1.msra.mxu0 0.0
    %321 = vmatprep.subr.mxu0 0.0
    %322 = vmatpush1.msra.mxu0 0.0
    %323 = vmatprep.subr.mxu0 0.0
    %324 = vmatpush1.msra.mxu0 0.0
    %325 = vmatprep.subr.mxu0 0.0
    %326 = vmatpush1.msra.mxu0 0.0
    %327 = vmatprep.subr.mxu0 0.0
    %328 = vmatpush1.msra.mxu0 0.0
    %329 = vmatprep.subr.mxu0 0.0
    %330 = vmatpush1.msra.mxu0 0.0
    %331 = vmatprep.subr.mxu0 0.0
    %332 = vmatpush1.msra.mxu0 0.0
    %333 = vmatprep.subr.mxu0 0.0
    %334 = vmatpush1.msra.mxu0 0.0
    %335 = vmatprep.subr.mxu0 0.0
    %336 = vmatpush1.msra.mxu0 0.0
    %337 = vmatprep.subr.mxu0 0.0
    %338 = vmatpush1.msra.mxu0 0.0
    %339 = vmatprep.subr.mxu0 0.0
    %340 = vmatpush1.msra.mxu0 0.0
    %341 = vmatprep.subr.mxu0 0.0
    %342 = vmatpush1.msra.mxu0 0.0
    %343 = vmatprep.subr.mxu0 0.0
    %344 = vmatpush1.msra.mxu0 0.0
    %345 = vmatprep.subr.mxu0 0.0
    %346 = vmatpush1.msra.mxu0 0.0
    %347 = vmatprep.subr.mxu0 0.0
    %348 = vmatpush1.msra.mxu0 0.0
    %349 = vmatprep.subr.mxu0 0.0
    %350 = vmatpush1.msra.mxu0 0.0
    %351 = vmatprep.subr.mxu0 0.0
    %352 = vmatpush1.msra.mxu0 0.0
    %353 = vmatprep.subr.mxu0 0.0
    %354 = vmatpush1.msra.mxu0 0.0
    %355 = vmatprep.subr.mxu0 0.0
    %356 = vmatpush1.msra.mxu0 0.0
    %357 = vmatprep.subr.mxu0 0.0
    %358 = vmatpush1.msra.mxu0 0.0
    %359 = vmatprep.subr.mxu0 0.0
    %360 = vmatpush1.msra.mxu0 0.0
    %361 = vmatprep.subr.mxu0 0.0
    %362 = vmatpush1.msra.mxu0 0.0
    %363 = vmatprep.subr.mxu0 0.0
    %364 = vmatpush1.msra.mxu0 0.0
    %365 = vmatprep.subr.mxu0 0.0
    %366 = vmatpush1.msra.mxu0 0.0
    %367 = vmatprep.subr.mxu0 0.0
    %368 = vmatpush1.msra.mxu0 0.0
    %369 = vmatprep.subr.mxu0 0.0
    %370 = vmatpush1.msra.mxu0 0.0
    %371 = vmatprep.subr.mxu0 0.0
    %372 = vmatpush1.msra.mxu0 0.0
    %373 = vmatprep.subr.mxu0 0.0
    %374 = vmatpush1.msra.mxu0 0.0
    %375 = vmatprep.subr.mxu0 0.0
    %376 = vmatpush1.msra.mxu0 0.0
    %377 = vmatprep.mubr.f32.mxu0 0.0
    %378 = vmatmul.mubr.f32.gmra.mrb[0].mxu0 %v98
    %v379 = vpop.f32.mrb[0].mxu0
    %v380 = vadd.f32 %v83, %v379
    %v381 = vpop.f32.mrb[0].mxu0
    %v382 = vadd.f32 %v87, %v381
    %383 = vdwg.mxu0
    %v384 = vld [vmem:[%s3] sm:$0xff]
    %s385 = scalar_lea.vmem %s3, 8
    %v386 = vld [vmem:[%s385] sm:$0xff]
    %vm387 = vcmask 15360
    %v389 = vsel %vm387, %v386, 0
    %vm391 = vcmask 1041408
    %v393 = vsel %vm391, %v238, 0
    %v396 = vsel %vm391, %v240, 0
    %398 = vmatprep.subr.mxu0 %v396
    %399 = vmatpush1.msra.mxu0 %v393
    %400 = vmatprep.subr.mxu0 0.0
    %401 = vmatpush1.msra.mxu0 0.0
    %402 = vmatprep.subr.mxu0 0.0
    %403 = vmatpush1.msra.mxu0 0.0
    %404 = vmatprep.subr.mxu0 0.0
    %405 = vmatpush1.msra.mxu0 0.0
    %406 = vmatprep.subr.mxu0 0.0
    %407 = vmatpush1.msra.mxu0 0.0
    %408 = vmatprep.subr.mxu0 0.0
    %409 = vmatpush1.msra.mxu0 0.0
    %410 = vmatprep.subr.mxu0 0.0
    %411 = vmatpush1.msra.mxu0 0.0
    %412 = vmatprep.subr.mxu0 0.0
    %413 = vmatpush1.msra.mxu0 0.0
    %414 = vmatprep.subr.mxu0 0.0
    %415 = vmatpush1.msra.mxu0 0.0
    %416 = vmatprep.subr.mxu0 0.0
    %417 = vmatpush1.msra.mxu0 0.0
    %418 = vmatprep.subr.mxu0 0.0
    %419 = vmatpush1.msra.mxu0 0.0
    %420 = vmatprep.subr.mxu0 0.0
    %421 = vmatpush1.msra.mxu0 0.0
    %422 = vmatprep.subr.mxu0 0.0
    %423 = vmatpush1.msra.mxu0 0.0
    %424 = vmatprep.subr.mxu0 0.0
    %425 = vmatpush1.msra.mxu0 0.0
    %426 = vmatprep.subr.mxu0 0.0
    %427 = vmatpush1.msra.mxu0 0.0
    %428 = vmatprep.subr.mxu0 0.0
    %429 = vmatpush1.msra.mxu0 0.0
    %430 = vmatprep.subr.mxu0 0.0
    %431 = vmatpush1.msra.mxu0 0.0
    %432 = vmatprep.subr.mxu0 0.0
    %433 = vmatpush1.msra.mxu0 0.0
    %434 = vmatprep.subr.mxu0 0.0
    %435 = vmatpush1.msra.mxu0 0.0
    %436 = vmatprep.subr.mxu0 0.0
    %437 = vmatpush1.msra.mxu0 0.0
    %438 = vmatprep.subr.mxu0 0.0
    %439 = vmatpush1.msra.mxu0 0.0
    %440 = vmatprep.subr.mxu0 0.0
    %441 = vmatpush1.msra.mxu0 0.0
    %442 = vmatprep.subr.mxu0 0.0
    %443 = vmatpush1.msra.mxu0 0.0
    %444 = vmatprep.subr.mxu0 0.0
    %445 = vmatpush1.msra.mxu0 0.0
    %446 = vmatprep.subr.mxu0 0.0
    %447 = vmatpush1.msra.mxu0 0.0
    %448 = vmatprep.subr.mxu0 0.0
    %449 = vmatpush1.msra.mxu0 0.0
    %450 = vmatprep.subr.mxu0 0.0
    %451 = vmatpush1.msra.mxu0 0.0
    %452 = vmatprep.subr.mxu0 0.0
    %453 = vmatpush1.msra.mxu0 0.0
    %454 = vmatprep.subr.mxu0 0.0
    %455 = vmatpush1.msra.mxu0 0.0
    %456 = vmatprep.subr.mxu0 0.0
    %457 = vmatpush1.msra.mxu0 0.0
    %458 = vmatprep.subr.mxu0 0.0
    %459 = vmatpush1.msra.mxu0 0.0
    %460 = vmatprep.subr.mxu0 0.0
    %461 = vmatpush1.msra.mxu0 0.0
    %462 = vmatprep.mubr.f32.mxu0 0.0
    %463 = vmatmul.mubr.f32.gmra.mrb[0].mxu0 %v389
    %v464 = vpop.f32.mrb[0].mxu0
    %v465 = vadd.f32 0.0, %v464
    %v466 = vpop.f32.mrb[0].mxu0
    %v467 = vadd.f32 0.0, %v466
    %468 = vdwg.mxu0
    %v470 = vsel %vm387, %v384, 0
    %v473 = vsel %vm391, %v167, 0
    %v476 = vsel %vm391, %v169, 0
    %478 = vmatprep.subr.mxu0 %v476
    %479 = vmatpush1.msra.mxu0 %v473
    %480 = vmatprep.subr.mxu0 0.0
    %481 = vmatpush1.msra.mxu0 0.0
    %482 = vmatprep.subr.mxu0 0.0
    %483 = vmatpush1.msra.mxu0 0.0
    %484 = vmatprep.subr.mxu0 0.0
    %485 = vmatpush1.msra.mxu0 0.0
    %486 = vmatprep.subr.mxu0 0.0
    %487 = vmatpush1.msra.mxu0 0.0
    %488 = vmatprep.subr.mxu0 0.0
    %489 = vmatpush1.msra.mxu0 0.0
    %490 = vmatprep.subr.mxu0 0.0
    %491 = vmatpush1.msra.mxu0 0.0
    %492 = vmatprep.subr.mxu0 0.0
    %493 = vmatpush1.msra.mxu0 0.0
    %494 = vmatprep.subr.mxu0 0.0
    %495 = vmatpush1.msra.mxu0 0.0
    %496 = vmatprep.subr.mxu0 0.0
    %497 = vmatpush1.msra.mxu0 0.0
    %498 = vmatprep.subr.mxu0 0.0
    %499 = vmatpush1.msra.mxu0 0.0
    %500 = vmatprep.subr.mxu0 0.0
    %501 = vmatpush1.msra.mxu0 0.0
    %502 = vmatprep.subr.mxu0 0.0
    %503 = vmatpush1.msra.mxu0 0.0
    %504 = vmatprep.subr.mxu0 0.0
    %505 = vmatpush1.msra.mxu0 0.0
    %506 = vmatprep.subr.mxu0 0.0
    %507 = vmatpush1.msra.mxu0 0.0
    %508 = vmatprep.subr.mxu0 0.0
    %509 = vmatpush1.msra.mxu0 0.0
    %510 = vmatprep.subr.mxu0 0.0
    %511 = vmatpush1.msra.mxu0 0.0
    %512 = vmatprep.subr.mxu0 0.0
    %513 = vmatpush1.msra.mxu0 0.0
    %514 = vmatprep.subr.mxu0 0.0
    %515 = vmatpush1.msra.mxu0 0.0
    %516 = vmatprep.subr.mxu0 0.0
    %517 = vmatpush1.msra.mxu0 0.0
    %518 = vmatprep.subr.mxu0 0.0
    %519 = vmatpush1.msra.mxu0 0.0
    %520 = vmatprep.subr.mxu0 0.0
    %521 = vmatpush1.msra.mxu0 0.0
    %522 = vmatprep.subr.mxu0 0.0
    %523 = vmatpush1.msra.mxu0 0.0
    %524 = vmatprep.subr.mxu0 0.0
    %525 = vmatpush1.msra.mxu0 0.0
    %526 = vmatprep.subr.mxu0 0.0
    %527 = vmatpush1.msra.mxu0 0.0
    %528 = vmatprep.subr.mxu0 0.0
    %529 = vmatpush1.msra.mxu0 0.0
    %530 = vmatprep.subr.mxu0 0.0
    %531 = vmatpush1.msra.mxu0 0.0
    %532 = vmatprep.subr.mxu0 0.0
    %533 = vmatpush1.msra.mxu0 0.0
    %534 = vmatprep.subr.mxu0 0.0
    %535 = vmatpush1.msra.mxu0 0.0
    %536 = vmatprep.subr.mxu0 0.0
    %537 = vmatpush1.msra.mxu0 0.0
    %538 = vmatprep.subr.mxu0 0.0
    %539 = vmatpush1.msra.mxu0 0.0
    %540 = vmatprep.subr.mxu0 0.0
    %541 = vmatpush1.msra.mxu0 0.0
    %542 = vmatprep.mubr.f32.mxu0 0.0
    %543 = vmatmul.mubr.f32.gmra.mrb[0].mxu0 %v470
    %v544 = vpop.f32.mrb[0].mxu0
    %v545 = vadd.f32 %v465, %v544
    %v546 = vpop.f32.mrb[0].mxu0
    %v547 = vadd.f32 %v467, %v546
    %548 = vdwg.mxu0
    %s549 = scalar_lea.vmem %s3, 16
    %v550 = vld [vmem:[%s549] sm:$0xff]
    %v552 = vsel %vm387, %v550, 0
    %v555 = vsel %vm391, %v309, 0
    %v558 = vsel %vm391, %v311, 0
    %560 = vmatprep.subr.mxu0 %v558
    %561 = vmatpush1.msra.mxu0 %v555
    %562 = vmatprep.subr.mxu0 0.0
    %563 = vmatpush1.msra.mxu0 0.0
    %564 = vmatprep.subr.mxu0 0.0
    %565 = vmatpush1.msra.mxu0 0.0
    %566 = vmatprep.subr.mxu0 0.0
    %567 = vmatpush1.msra.mxu0 0.0
    %568 = vmatprep.subr.mxu0 0.0
    %569 = vmatpush1.msra.mxu0 0.0
    %570 = vmatprep.subr.mxu0 0.0
    %571 = vmatpush1.msra.mxu0 0.0
    %572 = vmatprep.subr.mxu0 0.0
    %573 = vmatpush1.msra.mxu0 0.0
    %574 = vmatprep.subr.mxu0 0.0
    %575 = vmatpush1.msra.mxu0 0.0
    %576 = vmatprep.subr.mxu0 0.0
    %577 = vmatpush1.msra.mxu0 0.0
    %578 = vmatprep.subr.mxu0 0.0
    %579 = vmatpush1.msra.mxu0 0.0
    %580 = vmatprep.subr.mxu0 0.0
    %581 = vmatpush1.msra.mxu0 0.0
    %582 = vmatprep.subr.mxu0 0.0
    %583 = vmatpush1.msra.mxu0 0.0
    %584 = vmatprep.subr.mxu0 0.0
    %585 = vmatpush1.msra.mxu0 0.0
    %586 = vmatprep.subr.mxu0 0.0
    %587 = vmatpush1.msra.mxu0 0.0
    %588 = vmatprep.subr.mxu0 0.0
    %589 = vmatpush1.msra.mxu0 0.0
    %590 = vmatprep.subr.mxu0 0.0
    %591 = vmatpush1.msra.mxu0 0.0
    %592 = vmatprep.subr.mxu0 0.0
    %593 = vmatpush1.msra.mxu0 0.0
    %594 = vmatprep.subr.mxu0 0.0
    %595 = vmatpush1.msra.mxu0 0.0
    %596 = vmatprep.subr.mxu0 0.0
    %597 = vmatpush1.msra.mxu0 0.0
    %598 = vmatprep.subr.mxu0 0.0
    %599 = vmatpush1.msra.mxu0 0.0
    %600 = vmatprep.subr.mxu0 0.0
    %601 = vmatpush1.msra.mxu0 0.0
    %602 = vmatprep.subr.mxu0 0.0
    %603 = vmatpush1.msra.mxu0 0.0
    %604 = vmatprep.subr.mxu0 0.0
    %605 = vmatpush1.msra.mxu0 0.0
    %606 = vmatprep.subr.mxu0 0.0
    %607 = vmatpush1.msra.mxu0 0.0
    %608 = vmatprep.subr.mxu0 0.0
    %609 = vmatpush1.msra.mxu0 0.0
    %610 = vmatprep.subr.mxu0 0.0
    %611 = vmatpush1.msra.mxu0 0.0
    %612 = vmatprep.subr.mxu0 0.0
    %613 = vmatpush1.msra.mxu0 0.0
    %614 = vmatprep.subr.mxu0 0.0
    %615 = vmatpush1.msra.mxu0 0.0
    %616 = vmatprep.subr.mxu0 0.0
    %617 = vmatpush1.msra.mxu0 0.0
    %618 = vmatprep.subr.mxu0 0.0
    %619 = vmatpush1.msra.mxu0 0.0
    %620 = vmatprep.subr.mxu0 0.0
    %621 = vmatpush1.msra.mxu0 0.0
    %622 = vmatprep.subr.mxu0 0.0
    %623 = vmatpush1.msra.mxu0 0.0
    %624 = vmatprep.mubr.f32.mxu0 0.0
    %625 = vmatmul.mubr.f32.gmra.mrb[0].mxu0 %v552
    %v626 = vpop.f32.mrb[0].mxu0
    %v627 = vadd.f32 0.0, %v626
    %v628 = vpop.f32.mrb[0].mxu0
    %v629 = vadd.f32 0.0, %v628
    %630 = vdwg.mxu0
    %v631 = vadd.f32 %v545, %v627
    %v632 = vadd.f32 %v547, %v629
    %s633 = scalar_lea.vmem %s3, 24
    %v634 = vld [vmem:[%s633] sm:$0xff]
    %v636 = vsel %vm387, %v634, 0
    %v639 = vsel %vm391, %v380, 0
    %v642 = vsel %vm391, %v382, 0
    %644 = vmatprep.subr.mxu0 %v642
    %645 = vmatpush1.msra.mxu0 %v639
    %646 = vmatprep.subr.mxu0 0.0
    %647 = vmatpush1.msra.mxu0 0.0
    %648 = vmatprep.subr.mxu0 0.0
    %649 = vmatpush1.msra.mxu0 0.0
    %650 = vmatprep.subr.mxu0 0.0
    %651 = vmatpush1.msra.mxu0 0.0
    %652 = vmatprep.subr.mxu0 0.0
    %653 = vmatpush1.msra.mxu0 0.0
    %654 = vmatprep.subr.mxu0 0.0
    %655 = vmatpush1.msra.mxu0 0.0
    %656 = vmatprep.subr.mxu0 0.0
    %657 = vmatpush1.msra.mxu0 0.0
    %658 = vmatprep.subr.mxu0 0.0
    %659 = vmatpush1.msra.mxu0 0.0
    %660 = vmatprep.subr.mxu0 0.0
    %661 = vmatpush1.msra.mxu0 0.0
    %662 = vmatprep.subr.mxu0 0.0
    %663 = vmatpush1.msra.mxu0 0.0
    %664 = vmatprep.subr.mxu0 0.0
    %665 = vmatpush1.msra.mxu0 0.0
    %666 = vmatprep.subr.mxu0 0.0
    %667 = vmatpush1.msra.mxu0 0.0
    %668 = vmatprep.subr.mxu0 0.0
    %669 = vmatpush1.msra.mxu0 0.0
    %670 = vmatprep.subr.mxu0 0.0
    %671 = vmatpush1.msra.mxu0 0.0
    %672 = vmatprep.subr.mxu0 0.0
    %673 = vmatpush1.msra.mxu0 0.0
    %674 = vmatprep.subr.mxu0 0.0
    %675 = vmatpush1.msra.mxu0 0.0
    %676 = vmatprep.subr.mxu0 0.0
    %677 = vmatpush1.msra.mxu0 0.0
    %678 = vmatprep.subr.mxu0 0.0
    %679 = vmatpush1.msra.mxu0 0.0
    %680 = vmatprep.subr.mxu0 0.0
    %681 = vmatpush1.msra.mxu0 0.0
    %682 = vmatprep.subr.mxu0 0.0
    %683 = vmatpush1.msra.mxu0 0.0
    %684 = vmatprep.subr.mxu0 0.0
    %685 = vmatpush1.msra.mxu0 0.0
    %686 = vmatprep.subr.mxu0 0.0
    %687 = vmatpush1.msra.mxu0 0.0
    %688 = vmatprep.subr.mxu0 0.0
    %689 = vmatpush1.msra.mxu0 0.0
    %690 = vmatprep.subr.mxu0 0.0
    %691 = vmatpush1.msra.mxu0 0.0
    %692 = vmatprep.subr.mxu0 0.0
    %693 = vmatpush1.msra.mxu0 0.0
    %694 = vmatprep.subr.mxu0 0.0
    %695 = vmatpush1.msra.mxu0 0.0
    %696 = vmatprep.subr.mxu0 0.0
    %697 = vmatpush1.msra.mxu0 0.0
    %698 = vmatprep.subr.mxu0 0.0
    %699 = vmatpush1.msra.mxu0 0.0
    %700 = vmatprep.subr.mxu0 0.0
    %701 = vmatpush1.msra.mxu0 0.0
    %702 = vmatprep.subr.mxu0 0.0
    %703 = vmatpush1.msra.mxu0 0.0
    %704 = vmatprep.subr.mxu0 0.0
    %705 = vmatpush1.msra.mxu0 0.0
    %706 = vmatprep.subr.mxu0 0.0
    %707 = vmatpush1.msra.mxu0 0.0
    %708 = vmatprep.mubr.f32.mxu0 0.0
    %709 = vmatmul.mubr.f32.gmra.mrb[0].mxu0 %v636
    %v710 = vpop.f32.mrb[0].mxu0
    %v711 = vadd.f32 0.0, %v710
    %v712 = vpop.f32.mrb[0].mxu0
    %v713 = vadd.f32 0.0, %v712
    %714 = vdwg.mxu0
    %v715 = vadd.f32 %v631, %v711
    %v716 = vadd.f32 %v632, %v713
    %v717 = vld [vmem:[%s5] sm:$0xff]
    %v718 = vld [vmem:[%s5 + $0x8] sm:$0xff]
    %v719 = vld [vmem:[%s5 + $0x10] sm:$0xff]
    %v720 = vld [vmem:[%s5 + $0x18] sm:$0xff]
    %v721 = vld [vmem:[%s5 + $0x20] sm:$0xff]
    %v722 = vld [vmem:[%s5 + $0x28] sm:$0xff]
    %v723 = vld [vmem:[%s5 + $0x30] sm:$0xff]
    %v724 = vld [vmem:[%s5 + $0x38] sm:$0xff]
    %v725 = vld [vmem:[%s5 + $0x40] sm:$0xff]
    %v726 = vld [vmem:[%s5 + $0x48] sm:$0xff]
    %v727 = vld [vmem:[%s5 + $0x50] sm:$0xff]
    %v728 = vld [vmem:[%s5 + $0x58] sm:$0xff]
    %v729 = vld [vmem:[%s5 + $0x60] sm:$0xff]
    %v730 = vld [vmem:[%s5 + $0x68] sm:$0xff]
    %v731 = vld [vmem:[%s5 + $0x70] sm:$0xff]
    %v732 = vld [vmem:[%s5 + $0x78] sm:$0xff]
    %v733 = vld [vmem:[%s5 + $0x80] sm:$0xff]
    %v734 = vld [vmem:[%s5 + $0x88] sm:$0xff]
    %v735 = vld [vmem:[%s5 + $0x90] sm:$0xff]
    %v736 = vld [vmem:[%s5 + $0x98] sm:$0xff]
    %v737 = vld [vmem:[%s5 + $0xa0] sm:$0xff]
    %v738 = vld [vmem:[%s5 + $0xa8] sm:$0xff]
    %v739 = vld [vmem:[%s5 + $0xb0] sm:$0xff]
    %v740 = vld [vmem:[%s5 + $0xb8] sm:$0xff]
    %v741 = vld [vmem:[%s5 + $0xc0] sm:$0xff]
    %v742 = vld [vmem:[%s5 + $0xc8] sm:$0xff]
    %v743 = vld [vmem:[%s5 + $0xd0] sm:$0xff]
    %v744 = vld [vmem:[%s5 + $0xd8] sm:$0xff]
    %v745 = vld [vmem:[%s5 + $0xe0] sm:$0xff]
    %v746 = vld [vmem:[%s5 + $0xe8] sm:$0xff]
    %v747 = vld [vmem:[%s5 + $0xf0] sm:$0xff]
    %v748 = vld [vmem:[%s5 + $0xf8] sm:$0xff]
    %v749 = vld [vmem:[%s5 + $0x100] sm:$0xff]
    %v750 = vld [vmem:[%s5 + $0x108] sm:$0xff]
    %v751 = vld [vmem:[%s5 + $0x110] sm:$0xff]
    %v752 = vld [vmem:[%s5 + $0x118] sm:$0xff]
    %v753 = vld [vmem:[%s5 + $0x120] sm:$0xff]
    %v754 = vld [vmem:[%s5 + $0x128] sm:$0xff]
    %v755 = vld [vmem:[%s5 + $0x130] sm:$0xff]
    %v756 = vld [vmem:[%s5 + $0x138] sm:$0xff]
    %v757 = vld [vmem:[%s5 + $0x140] sm:$0xff]
    %v758 = vld [vmem:[%s5 + $0x148] sm:$0xff]
    %v759 = vld [vmem:[%s5 + $0x150] sm:$0xff]
    %v760 = vld [vmem:[%s5 + $0x158] sm:$0xff]
    %v761 = vld [vmem:[%s5 + $0x160] sm:$0xff]
    %v762 = vld [vmem:[%s5 + $0x168] sm:$0xff]
    %v763 = vld [vmem:[%s5 + $0x170] sm:$0xff]
    %v764 = vld [vmem:[%s5 + $0x178] sm:$0xff]
    %v765 = vld [vmem:[%s5 + $0x180] sm:$0xff]
    %v766 = vld [vmem:[%s5 + $0x188] sm:$0xff]
    %v767 = vld [vmem:[%s5 + $0x190] sm:$0xff]
    %v768 = vld [vmem:[%s5 + $0x198] sm:$0xff]
    %v769 = vld [vmem:[%s5 + $0x1a0] sm:$0xff]
    %v770 = vld [vmem:[%s5 + $0x1a8] sm:$0xff]
    %v771 = vld [vmem:[%s5 + $0x1b0] sm:$0xff]
    %v772 = vld [vmem:[%s5 + $0x1b8] sm:$0xff]
    %v773 = vld [vmem:[%s5 + $0x1c0] sm:$0xff]
    %v774 = vld [vmem:[%s5 + $0x1c8] sm:$0xff]
    %v775 = vld [vmem:[%s5 + $0x1d0] sm:$0xff]
    %v776 = vld [vmem:[%s5 + $0x1d8] sm:$0xff]
    %v777 = vld [vmem:[%s5 + $0x1e0] sm:$0xff]
    %v778 = vld [vmem:[%s5 + $0x1e8] sm:$0xff]
    %v779 = vld [vmem:[%s5 + $0x1f0] sm:$0xff]
    %v780 = vld [vmem:[%s5 + $0x1f8] sm:$0xff]
    %781 = vmatprep.subr.mxu0 %v718
    %782 = vmatpush1.msra.mxu0 %v717
    %783 = vmatprep.subr.mxu0 %v720
    %784 = vmatpush1.msra.mxu0 %v719
    %785 = vmatprep.subr.mxu0 %v722
    %786 = vmatpush1.msra.mxu0 %v721
    %787 = vmatprep.subr.mxu0 %v724
    %788 = vmatpush1.msra.mxu0 %v723
    %789 = vmatprep.subr.mxu0 %v726
    %790 = vmatpush1.msra.mxu0 %v725
    %791 = vmatprep.subr.mxu0 %v728
    %792 = vmatpush1.msra.mxu0 %v727
    %793 = vmatprep.subr.mxu0 %v730
    %794 = vmatpush1.msra.mxu0 %v729
    %795 = vmatprep.subr.mxu0 %v732
    %796 = vmatpush1.msra.mxu0 %v731
    %797 = vmatprep.subr.mxu0 %v734
    %798 = vmatpush1.msra.mxu0 %v733
    %799 = vmatprep.subr.mxu0 %v736
    %800 = vmatpush1.msra.mxu0 %v735
    %801 = vmatprep.subr.mxu0 %v738
    %802 = vmatpush1.msra.mxu0 %v737
    %803 = vmatprep.subr.mxu0 %v740
    %804 = vmatpush1.msra.mxu0 %v739
    %805 = vmatprep.subr.mxu0 %v742
    %806 = vmatpush1.msra.mxu0 %v741
    %807 = vmatprep.subr.mxu0 %v744
    %808 = vmatpush1.msra.mxu0 %v743
    %809 = vmatprep.subr.mxu0 %v746
    %810 = vmatpush1.msra.mxu0 %v745
    %811 = vmatprep.subr.mxu0 %v748
    %812 = vmatpush1.msra.mxu0 %v747
    %813 = vmatprep.subr.mxu0 %v750
    %814 = vmatpush1.msra.mxu0 %v749
    %815 = vmatprep.subr.mxu0 %v752
    %816 = vmatpush1.msra.mxu0 %v751
    %817 = vmatprep.subr.mxu0 %v754
    %818 = vmatpush1.msra.mxu0 %v753
    %819 = vmatprep.subr.mxu0 %v756
    %820 = vmatpush1.msra.mxu0 %v755
    %821 = vmatprep.subr.mxu0 %v758
    %822 = vmatpush1.msra.mxu0 %v757
    %823 = vmatprep.subr.mxu0 %v760
    %824 = vmatpush1.msra.mxu0 %v759
    %825 = vmatprep.subr.mxu0 %v762
    %826 = vmatpush1.msra.mxu0 %v761
    %827 = vmatprep.subr.mxu0 %v764
    %828 = vmatpush1.msra.mxu0 %v763
    %829 = vmatprep.subr.mxu0 %v766
    %830 = vmatpush1.msra.mxu0 %v765
    %831 = vmatprep.subr.mxu0 %v768
    %832 = vmatpush1.msra.mxu0 %v767
    %833 = vmatprep.subr.mxu0 %v770
    %834 = vmatpush1.msra.mxu0 %v769
    %835 = vmatprep.subr.mxu0 %v772
    %836 = vmatpush1.msra.mxu0 %v771
    %837 = vmatprep.subr.mxu0 %v774
    %838 = vmatpush1.msra.mxu0 %v773
    %839 = vmatprep.subr.mxu0 %v776
    %840 = vmatpush1.msra.mxu0 %v775
    %841 = vmatprep.subr.mxu0 %v778
    %842 = vmatpush1.msra.mxu0 %v777
    %843 = vmatprep.subr.mxu0 %v780
    %844 = vmatpush1.msra.mxu0 %v779
    %845 = vmatprep.mubr.f32.mxu0 %v716
    %846 = vmatmul.mubr.f32.gmra.mrb[0].mxu0 %v715
    %v847 = vpop.f32.mrb[0].mxu0
    %v848 = vadd.f32 0.0, %v847
    %v849 = vpop.f32.mrb[0].mxu0
    %v850 = vadd.f32 0.0, %v849
    %851 = vdwg.mxu0
    %v852 = vld [vmem:[%s4] sm:$0xff]
    %v853 = vld [vmem:[%s4 + $0x8] sm:$0xff]
    %s854 = scalar_lea.vmem %s5, 512
    %v855 = vld [vmem:[%s854] sm:$0xff]
    %v856 = vld [vmem:[%s854 + $0x8] sm:$0xff]
    %v857 = vld [vmem:[%s854 + $0x10] sm:$0xff]
    %v858 = vld [vmem:[%s854 + $0x18] sm:$0xff]
    %v859 = vld [vmem:[%s854 + $0x20] sm:$0xff]
    %v860 = vld [vmem:[%s854 + $0x28] sm:$0xff]
    %v861 = vld [vmem:[%s854 + $0x30] sm:$0xff]
    %v862 = vld [vmem:[%s854 + $0x38] sm:$0xff]
    %v863 = vld [vmem:[%s854 + $0x40] sm:$0xff]
    %v864 = vld [vmem:[%s854 + $0x48] sm:$0xff]
    %v865 = vld [vmem:[%s854 + $0x50] sm:$0xff]
    %v866 = vld [vmem:[%s854 + $0x58] sm:$0xff]
    %v867 = vld [vmem:[%s854 + $0x60] sm:$0xff]
    %v868 = vld [vmem:[%s854 + $0x68] sm:$0xff]
    %v869 = vld [vmem:[%s854 + $0x70] sm:$0xff]
    %v870 = vld [vmem:[%s854 + $0x78] sm:$0xff]
    %v871 = vld [vmem:[%s854 + $0x80] sm:$0xff]
    %v872 = vld [vmem:[%s854 + $0x88] sm:$0xff]
    %v873 = vld [vmem:[%s854 + $0x90] sm:$0xff]
    %v874 = vld [vmem:[%s854 + $0x98] sm:$0xff]
    %v875 = vld [vmem:[%s854 + $0xa0] sm:$0xff]
    %v876 = vld [vmem:[%s854 + $0xa8] sm:$0xff]
    %v877 = vld [vmem:[%s854 + $0xb0] sm:$0xff]
    %v878 = vld [vmem:[%s854 + $0xb8] sm:$0xff]
    %v879 = vld [vmem:[%s854 + $0xc0] sm:$0xff]
    %v880 = vld [vmem:[%s854 + $0xc8] sm:$0xff]
    %v881 = vld [vmem:[%s854 + $0xd0] sm:$0xff]
    %v882 = vld [vmem:[%s854 + $0xd8] sm:$0xff]
    %v883 = vld [vmem:[%s854 + $0xe0] sm:$0xff]
    %v884 = vld [vmem:[%s854 + $0xe8] sm:$0xff]
    %v885 = vld [vmem:[%s854 + $0xf0] sm:$0xff]
    %v886 = vld [vmem:[%s854 + $0xf8] sm:$0xff]
    %v887 = vld [vmem:[%s854 + $0x100] sm:$0xff]
    %v888 = vld [vmem:[%s854 + $0x108] sm:$0xff]
    %v889 = vld [vmem:[%s854 + $0x110] sm:$0xff]
    %v890 = vld [vmem:[%s854 + $0x118] sm:$0xff]
    %v891 = vld [vmem:[%s854 + $0x120] sm:$0xff]
    %v892 = vld [vmem:[%s854 + $0x128] sm:$0xff]
    %v893 = vld [vmem:[%s854 + $0x130] sm:$0xff]
    %v894 = vld [vmem:[%s854 + $0x138] sm:$0xff]
    %v895 = vld [vmem:[%s854 + $0x140] sm:$0xff]
    %v896 = vld [vmem:[%s854 + $0x148] sm:$0xff]
    %v897 = vld [vmem:[%s854 + $0x150] sm:$0xff]
    %v898 = vld [vmem:[%s854 + $0x158] sm:$0xff]
    %v899 = vld [vmem:[%s854 + $0x160] sm:$0xff]
    %v900 = vld [vmem:[%s854 + $0x168] sm:$0xff]
    %v901 = vld [vmem:[%s854 + $0x170] sm:$0xff]
    %v902 = vld [vmem:[%s854 + $0x178] sm:$0xff]
    %v903 = vld [vmem:[%s854 + $0x180] sm:$0xff]
    %v904 = vld [vmem:[%s854 + $0x188] sm:$0xff]
    %v905 = vld [vmem:[%s854 + $0x190] sm:$0xff]
    %v906 = vld [vmem:[%s854 + $0x198] sm:$0xff]
    %v907 = vld [vmem:[%s854 + $0x1a0] sm:$0xff]
    %v908 = vld [vmem:[%s854 + $0x1a8] sm:$0xff]
    %v909 = vld [vmem:[%s854 + $0x1b0] sm:$0xff]
    %v910 = vld [vmem:[%s854 + $0x1b8] sm:$0xff]
    %v911 = vld [vmem:[%s854 + $0x1c0] sm:$0xff]
    %v912 = vld [vmem:[%s854 + $0x1c8] sm:$0xff]
    %v913 = vld [vmem:[%s854 + $0x1d0] sm:$0xff]
    %v914 = vld [vmem:[%s854 + $0x1d8] sm:$0xff]
    %v915 = vld [vmem:[%s854 + $0x1e0] sm:$0xff]
    %v916 = vld [vmem:[%s854 + $0x1e8] sm:$0xff]
    %v917 = vld [vmem:[%s854 + $0x1f0] sm:$0xff]
    %v918 = vld [vmem:[%s854 + $0x1f8] sm:$0xff]
    %919 = vmatprep.subr.mxu0 %v856
    %920 = vmatpush1.msra.mxu0 %v855
    %921 = vmatprep.subr.mxu0 %v858
    %922 = vmatpush1.msra.mxu0 %v857
    %923 = vmatprep.subr.mxu0 %v860
    %924 = vmatpush1.msra.mxu0 %v859
    %925 = vmatprep.subr.mxu0 %v862
    %926 = vmatpush1.msra.mxu0 %v861
    %927 = vmatprep.subr.mxu0 %v864
    %928 = vmatpush1.msra.mxu0 %v863
    %929 = vmatprep.subr.mxu0 %v866
    %930 = vmatpush1.msra.mxu0 %v865
    %931 = vmatprep.subr.mxu0 %v868
    %932 = vmatpush1.msra.mxu0 %v867
    %933 = vmatprep.subr.mxu0 %v870
    %934 = vmatpush1.msra.mxu0 %v869
    %935 = vmatprep.subr.mxu0 %v872
    %936 = vmatpush1.msra.mxu0 %v871
    %937 = vmatprep.subr.mxu0 %v874
    %938 = vmatpush1.msra.mxu0 %v873
    %939 = vmatprep.subr.mxu0 %v876
    %940 = vmatpush1.msra.mxu0 %v875
    %941 = vmatprep.subr.mxu0 %v878
    %942 = vmatpush1.msra.mxu0 %v877
    %943 = vmatprep.subr.mxu0 %v880
    %944 = vmatpush1.msra.mxu0 %v879
    %945 = vmatprep.subr.mxu0 %v882
    %946 = vmatpush1.msra.mxu0 %v881
    %947 = vmatprep.subr.mxu0 %v884
    %948 = vmatpush1.msra.mxu0 %v883
    %949 = vmatprep.subr.mxu0 %v886
    %950 = vmatpush1.msra.mxu0 %v885
    %951 = vmatprep.subr.mxu0 %v888
    %952 = vmatpush1.msra.mxu0 %v887
    %953 = vmatprep.subr.mxu0 %v890
    %954 = vmatpush1.msra.mxu0 %v889
    %955 = vmatprep.subr.mxu0 %v892
    %956 = vmatpush1.msra.mxu0 %v891
    %957 = vmatprep.subr.mxu0 %v894
    %958 = vmatpush1.msra.mxu0 %v893
    %959 = vmatprep.subr.mxu0 %v896
    %960 = vmatpush1.msra.mxu0 %v895
    %961 = vmatprep.subr.mxu0 %v898
    %962 = vmatpush1.msra.mxu0 %v897
    %963 = vmatprep.subr.mxu0 %v900
    %964 = vmatpush1.msra.mxu0 %v899
    %965 = vmatprep.subr.mxu0 %v902
    %966 = vmatpush1.msra.mxu0 %v901
    %967 = vmatprep.subr.mxu0 %v904
    %968 = vmatpush1.msra.mxu0 %v903
    %969 = vmatprep.subr.mxu0 %v906
    %970 = vmatpush1.msra.mxu0 %v905
    %971 = vmatprep.subr.mxu0 %v908
    %972 = vmatpush1.msra.mxu0 %v907
    %973 = vmatprep.subr.mxu0 %v910
    %974 = vmatpush1.msra.mxu0 %v909
    %975 = vmatprep.subr.mxu0 %v912
    %976 = vmatpush1.msra.mxu0 %v911
    %977 = vmatprep.subr.mxu0 %v914
    %978 = vmatpush1.msra.mxu0 %v913
    %979 = vmatprep.subr.mxu0 %v916
    %980 = vmatpush1.msra.mxu0 %v915
    %981 = vmatprep.subr.mxu0 %v918
    %982 = vmatpush1.msra.mxu0 %v917
    %983 = vmatprep.mubr.f32.mxu0 %v716
    %984 = vmatmul.mubr.f32.gmra.mrb[0].mxu0 %v715
    %v985 = vpop.f32.mrb[0].mxu0
    %v986 = vadd.f32 0.0, %v985
    %v987 = vpop.f32.mrb[0].mxu0
    %v988 = vadd.f32 0.0, %v987
    %989 = vdwg.mxu0
    %s990 = scalar_lea.vmem %s4, 16
    %v991 = vld [vmem:[%s990] sm:$0xff]
    %v992 = vld [vmem:[%s990 + $0x8] sm:$0xff]
    %v994 = vsel %vm96, %v991, 0
    %v997 = vsel %vm96, %v992, 0
    %999 = vmatprep.subr.mxu0 %v988
    %1000 = vmatpush1.msra.mxu0 %v986
    %1001 = vmatprep.subr.mxu0 0.0
    %1002 = vmatpush1.msra.mxu0 0.0
    %1003 = vmatprep.subr.mxu0 0.0
    %1004 = vmatpush1.msra.mxu0 0.0
    %1005 = vmatprep.subr.mxu0 0.0
    %1006 = vmatpush1.msra.mxu0 0.0
    %1007 = vmatprep.subr.mxu0 0.0
    %1008 = vmatpush1.msra.mxu0 0.0
    %1009 = vmatprep.subr.mxu0 0.0
    %1010 = vmatpush1.msra.mxu0 0.0
    %1011 = vmatprep.subr.mxu0 0.0
    %1012 = vmatpush1.msra.mxu0 0.0
    %1013 = vmatprep.subr.mxu0 0.0
    %1014 = vmatpush1.msra.mxu0 0.0
    %1015 = vmatprep.subr.mxu0 0.0
    %1016 = vmatpush1.msra.mxu0 0.0
    %1017 = vmatprep.subr.mxu0 0.0
    %1018 = vmatpush1.msra.mxu0 0.0
    %1019 = vmatprep.subr.mxu0 0.0
    %1020 = vmatpush1.msra.mxu0 0.0
    %1021 = vmatprep.subr.mxu0 0.0
    %1022 = vmatpush1.msra.mxu0 0.0
    %1023 = vmatprep.subr.mxu0 0.0
    %1024 = vmatpush1.msra.mxu0 0.0
    %1025 = vmatprep.subr.mxu0 0.0
    %1026 = vmatpush1.msra.mxu0 0.0
    %1027 = vmatprep.subr.mxu0 0.0
    %1028 = vmatpush1.msra.mxu0 0.0
    %1029 = vmatprep.subr.mxu0 0.0
    %1030 = vmatpush1.msra.mxu0 0.0
    %1031 = vmatprep.subr.mxu0 0.0
    %1032 = vmatpush1.msra.mxu0 0.0
    %1033 = vmatprep.subr.mxu0 0.0
    %1034 = vmatpush1.msra.mxu0 0.0
    %1035 = vmatprep.subr.mxu0 0.0
    %1036 = vmatpush1.msra.mxu0 0.0
    %1037 = vmatprep.subr.mxu0 0.0
    %1038 = vmatpush1.msra.mxu0 0.0
    %1039 = vmatprep.subr.mxu0 0.0
    %1040 = vmatpush1.msra.mxu0 0.0
    %1041 = vmatprep.subr.mxu0 0.0
    %1042 = vmatpush1.msra.mxu0 0.0
    %1043 = vmatprep.subr.mxu0 0.0
    %1044 = vmatpush1.msra.mxu0 0.0
    %1045 = vmatprep.subr.mxu0 0.0
    %1046 = vmatpush1.msra.mxu0 0.0
    %1047 = vmatprep.subr.mxu0 0.0
    %1048 = vmatpush1.msra.mxu0 0.0
    %1049 = vmatprep.subr.mxu0 0.0
    %1050 = vmatpush1.msra.mxu0 0.0
    %1051 = vmatprep.subr.mxu0 0.0
    %1052 = vmatpush1.msra.mxu0 0.0
    %1053 = vmatprep.subr.mxu0 0.0
    %1054 = vmatpush1.msra.mxu0 0.0
    %1055 = vmatprep.subr.mxu0 0.0
    %1056 = vmatpush1.msra.mxu0 0.0
    %1057 = vmatprep.subr.mxu0 0.0
    %1058 = vmatpush1.msra.mxu0 0.0
    %1059 = vmatprep.subr.mxu0 0.0
    %1060 = vmatpush1.msra.mxu0 0.0
    %1061 = vmatprep.subr.mxu0 0.0
    %1062 = vmatpush1.msra.mxu0 0.0
    %1063 = vmatprep.mubr.f32.mxu0 0.0
    %1064 = vmatmul.mubr.f32.gmra.mrb[0].mxu0 %v994
    %v1065 = vpop.f32.mrb[0].mxu0
    %v1066 = vadd.f32 0.0, %v1065
    %v1067 = vpop.f32.mrb[0].mxu0
    %v1068 = vadd.f32 0.0, %v1067
    %1069 = vmatprep.mubr.f32.mxu0 0.0
    %1070 = vmatmul.mubr.f32.gmra.mrb[0].mxu0 %v997
    %v1071 = vpop.f32.mrb[0].mxu0
    %v1072 = vadd.f32 0.0, %v1071
    %v1073 = vpop.f32.mrb[0].mxu0
    %v1074 = vadd.f32 0.0, %v1073
    %1075 = vdwg.mxu0
    %v1077 = vsel %vm96, %v852, 0
    %v1080 = vsel %vm96, %v853, 0
    %1082 = vmatprep.subr.mxu0 %v850
    %1083 = vmatpush1.msra.mxu0 %v848
    %1084 = vmatprep.subr.mxu0 0.0
    %1085 = vmatpush1.msra.mxu0 0.0
    %1086 = vmatprep.subr.mxu0 0.0
    %1087 = vmatpush1.msra.mxu0 0.0
    %1088 = vmatprep.subr.mxu0 0.0
    %1089 = vmatpush1.msra.mxu0 0.0
    %1090 = vmatprep.subr.mxu0 0.0
    %1091 = vmatpush1.msra.mxu0 0.0
    %1092 = vmatprep.subr.mxu0 0.0
    %1093 = vmatpush1.msra.mxu0 0.0
    %1094 = vmatprep.subr.mxu0 0.0
    %1095 = vmatpush1.msra.mxu0 0.0
    %1096 = vmatprep.subr.mxu0 0.0
    %1097 = vmatpush1.msra.mxu0 0.0
    %1098 = vmatprep.subr.mxu0 0.0
    %1099 = vmatpush1.msra.mxu0 0.0
    %1100 = vmatprep.subr.mxu0 0.0
    %1101 = vmatpush1.msra.mxu0 0.0
    %1102 = vmatprep.subr.mxu0 0.0
    %1103 = vmatpush1.msra.mxu0 0.0
    %1104 = vmatprep.subr.mxu0 0.0
    %1105 = vmatpush1.msra.mxu0 0.0
    %1106 = vmatprep.subr.mxu0 0.0
    %1107 = vmatpush1.msra.mxu0 0.0
    %1108 = vmatprep.subr.mxu0 0.0
    %1109 = vmatpush1.msra.mxu0 0.0
    %1110 = vmatprep.subr.mxu0 0.0
    %1111 = vmatpush1.msra.mxu0 0.0
    %1112 = vmatprep.subr.mxu0 0.0
    %1113 = vmatpush1.msra.mxu0 0.0
    %1114 = vmatprep.subr.mxu0 0.0
    %1115 = vmatpush1.msra.mxu0 0.0
    %1116 = vmatprep.subr.mxu0 0.0
    %1117 = vmatpush1.msra.mxu0 0.0
    %1118 = vmatprep.subr.mxu0 0.0
    %1119 = vmatpush1.msra.mxu0 0.0
    %1120 = vmatprep.subr.mxu0 0.0
    %1121 = vmatpush1.msra.mxu0 0.0
    %1122 = vmatprep.subr.mxu0 0.0
    %1123 = vmatpush1.msra.mxu0 0.0
    %1124 = vmatprep.subr.mxu0 0.0
    %1125 = vmatpush1.msra.mxu0 0.0
    %1126 = vmatprep.subr.mxu0 0.0
    %1127 = vmatpush1.msra.mxu0 0.0
    %1128 = vmatprep.subr.mxu0 0.0
    %1129 = vmatpush1.msra.mxu0 0.0
    %1130 = vmatprep.subr.mxu0 0.0
    %1131 = vmatpush1.msra.mxu0 0.0
    %1132 = vmatprep.subr.mxu0 0.0
    %1133 = vmatpush1.msra.mxu0 0.0
    %1134 = vmatprep.subr.mxu0 0.0
    %1135 = vmatpush1.msra.mxu0 0.0
    %1136 = vmatprep.subr.mxu0 0.0
    %1137 = vmatpush1.msra.mxu0 0.0
    %1138 = vmatprep.subr.mxu0 0.0
    %1139 = vmatpush1.msra.mxu0 0.0
    %1140 = vmatprep.subr.mxu0 0.0
    %1141 = vmatpush1.msra.mxu0 0.0
    %1142 = vmatprep.subr.mxu0 0.0
    %1143 = vmatpush1.msra.mxu0 0.0
    %1144 = vmatprep.subr.mxu0 0.0
    %1145 = vmatpush1.msra.mxu0 0.0
    %1146 = vmatprep.mubr.f32.mxu0 0.0
    %1147 = vmatmul.mubr.f32.gmra.mrb[0].mxu0 %v1077
    %v1148 = vpop.f32.mrb[0].mxu0
    %v1149 = vadd.f32 %v1066, %v1148
    %v1150 = vpop.f32.mrb[0].mxu0
    %v1151 = vadd.f32 %v1068, %v1150
    %1152 = vmatprep.mubr.f32.mxu0 0.0
    %1153 = vmatmul.mubr.f32.gmra.mrb[0].mxu0 %v1080
    %v1154 = vpop.f32.mrb[0].mxu0
    %v1155 = vadd.f32 %v1072, %v1154
    %v1156 = vpop.f32.mrb[0].mxu0
    %v1157 = vadd.f32 %v1074, %v1156
    %1158 = vdwg.mxu0
    %s1159 = scalar_lea.vmem %s5, 1024
    %v1160 = vld [vmem:[%s1159] sm:$0xff]
    %v1161 = vld [vmem:[%s1159 + $0x8] sm:$0xff]
    %v1162 = vld [vmem:[%s1159 + $0x10] sm:$0xff]
    %v1163 = vld [vmem:[%s1159 + $0x18] sm:$0xff]
    %v1164 = vld [vmem:[%s1159 + $0x20] sm:$0xff]
    %v1165 = vld [vmem:[%s1159 + $0x28] sm:$0xff]
    %v1166 = vld [vmem:[%s1159 + $0x30] sm:$0xff]
    %v1167 = vld [vmem:[%s1159 + $0x38] sm:$0xff]
    %v1168 = vld [vmem:[%s1159 + $0x40] sm:$0xff]
    %v1169 = vld [vmem:[%s1159 + $0x48] sm:$0xff]
    %v1170 = vld [vmem:[%s1159 + $0x50] sm:$0xff]
    %v1171 = vld [vmem:[%s1159 + $0x58] sm:$0xff]
    %v1172 = vld [vmem:[%s1159 + $0x60] sm:$0xff]
    %v1173 = vld [vmem:[%s1159 + $0x68] sm:$0xff]
    %v1174 = vld [vmem:[%s1159 + $0x70] sm:$0xff]
    %v1175 = vld [vmem:[%s1159 + $0x78] sm:$0xff]
    %v1176 = vld [vmem:[%s1159 + $0x80] sm:$0xff]
    %v1177 = vld [vmem:[%s1159 + $0x88] sm:$0xff]
    %v1178 = vld [vmem:[%s1159 + $0x90] sm:$0xff]
    %v1179 = vld [vmem:[%s1159 + $0x98] sm:$0xff]
    %v1180 = vld [vmem:[%s1159 + $0xa0] sm:$0xff]
    %v1181 = vld [vmem:[%s1159 + $0xa8] sm:$0xff]
    %v1182 = vld [vmem:[%s1159 + $0xb0] sm:$0xff]
    %v1183 = vld [vmem:[%s1159 + $0xb8] sm:$0xff]
    %v1184 = vld [vmem:[%s1159 + $0xc0] sm:$0xff]
    %v1185 = vld [vmem:[%s1159 + $0xc8] sm:$0xff]
    %v1186 = vld [vmem:[%s1159 + $0xd0] sm:$0xff]
    %v1187 = vld [vmem:[%s1159 + $0xd8] sm:$0xff]
    %v1188 = vld [vmem:[%s1159 + $0xe0] sm:$0xff]
    %v1189 = vld [vmem:[%s1159 + $0xe8] sm:$0xff]
    %v1190 = vld [vmem:[%s1159 + $0xf0] sm:$0xff]
    %v1191 = vld [vmem:[%s1159 + $0xf8] sm:$0xff]
    %v1192 = vld [vmem:[%s1159 + $0x100] sm:$0xff]
    %v1193 = vld [vmem:[%s1159 + $0x108] sm:$0xff]
    %v1194 = vld [vmem:[%s1159 + $0x110] sm:$0xff]
    %v1195 = vld [vmem:[%s1159 + $0x118] sm:$0xff]
    %v1196 = vld [vmem:[%s1159 + $0x120] sm:$0xff]
    %v1197 = vld [vmem:[%s1159 + $0x128] sm:$0xff]
    %v1198 = vld [vmem:[%s1159 + $0x130] sm:$0xff]
    %v1199 = vld [vmem:[%s1159 + $0x138] sm:$0xff]
    %v1200 = vld [vmem:[%s1159 + $0x140] sm:$0xff]
    %v1201 = vld [vmem:[%s1159 + $0x148] sm:$0xff]
    %v1202 = vld [vmem:[%s1159 + $0x150] sm:$0xff]
    %v1203 = vld [vmem:[%s1159 + $0x158] sm:$0xff]
    %v1204 = vld [vmem:[%s1159 + $0x160] sm:$0xff]
    %v1205 = vld [vmem:[%s1159 + $0x168] sm:$0xff]
    %v1206 = vld [vmem:[%s1159 + $0x170] sm:$0xff]
    %v1207 = vld [vmem:[%s1159 + $0x178] sm:$0xff]
    %v1208 = vld [vmem:[%s1159 + $0x180] sm:$0xff]
    %v1209 = vld [vmem:[%s1159 + $0x188] sm:$0xff]
    %v1210 = vld [vmem:[%s1159 + $0x190] sm:$0xff]
    %v1211 = vld [vmem:[%s1159 + $0x198] sm:$0xff]
    %v1212 = vld [vmem:[%s1159 + $0x1a0] sm:$0xff]
    %v1213 = vld [vmem:[%s1159 + $0x1a8] sm:$0xff]
    %v1214 = vld [vmem:[%s1159 + $0x1b0] sm:$0xff]
    %v1215 = vld [vmem:[%s1159 + $0x1b8] sm:$0xff]
    %v1216 = vld [vmem:[%s1159 + $0x1c0] sm:$0xff]
    %v1217 = vld [vmem:[%s1159 + $0x1c8] sm:$0xff]
    %v1218 = vld [vmem:[%s1159 + $0x1d0] sm:$0xff]
    %v1219 = vld [vmem:[%s1159 + $0x1d8] sm:$0xff]
    %v1220 = vld [vmem:[%s1159 + $0x1e0] sm:$0xff]
    %v1221 = vld [vmem:[%s1159 + $0x1e8] sm:$0xff]
    %v1222 = vld [vmem:[%s1159 + $0x1f0] sm:$0xff]
    %v1223 = vld [vmem:[%s1159 + $0x1f8] sm:$0xff]
    %1224 = vmatprep.subr.mxu0 %v1161
    %1225 = vmatpush1.msra.mxu0 %v1160
    %1226 = vmatprep.subr.mxu0 %v1163
    %1227 = vmatpush1.msra.mxu0 %v1162
    %1228 = vmatprep.subr.mxu0 %v1165
    %1229 = vmatpush1.msra.mxu0 %v1164
    %1230 = vmatprep.subr.mxu0 %v1167
    %1231 = vmatpush1.msra.mxu0 %v1166
    %1232 = vmatprep.subr.mxu0 %v1169
    %1233 = vmatpush1.msra.mxu0 %v1168
    %1234 = vmatprep.subr.mxu0 %v1171
    %1235 = vmatpush1.msra.mxu0 %v1170
    %1236 = vmatprep.subr.mxu0 %v1173
    %1237 = vmatpush1.msra.mxu0 %v1172
    %1238 = vmatprep.subr.mxu0 %v1175
    %1239 = vmatpush1.msra.mxu0 %v1174
    %1240 = vmatprep.subr.mxu0 %v1177
    %1241 = vmatpush1.msra.mxu0 %v1176
    %1242 = vmatprep.subr.mxu0 %v1179
    %1243 = vmatpush1.msra.mxu0 %v1178
    %1244 = vmatprep.subr.mxu0 %v1181
    %1245 = vmatpush1.msra.mxu0 %v1180
    %1246 = vmatprep.subr.mxu0 %v1183
    %1247 = vmatpush1.msra.mxu0 %v1182
    %1248 = vmatprep.subr.mxu0 %v1185
    %1249 = vmatpush1.msra.mxu0 %v1184
    %1250 = vmatprep.subr.mxu0 %v1187
    %1251 = vmatpush1.msra.mxu0 %v1186
    %1252 = vmatprep.subr.mxu0 %v1189
    %1253 = vmatpush1.msra.mxu0 %v1188
    %1254 = vmatprep.subr.mxu0 %v1191
    %1255 = vmatpush1.msra.mxu0 %v1190
    %1256 = vmatprep.subr.mxu0 %v1193
    %1257 = vmatpush1.msra.mxu0 %v1192
    %1258 = vmatprep.subr.mxu0 %v1195
    %1259 = vmatpush1.msra.mxu0 %v1194
    %1260 = vmatprep.subr.mxu0 %v1197
    %1261 = vmatpush1.msra.mxu0 %v1196
    %1262 = vmatprep.subr.mxu0 %v1199
    %1263 = vmatpush1.msra.mxu0 %v1198
    %1264 = vmatprep.subr.mxu0 %v1201
    %1265 = vmatpush1.msra.mxu0 %v1200
    %1266 = vmatprep.subr.mxu0 %v1203
    %1267 = vmatpush1.msra.mxu0 %v1202
    %1268 = vmatprep.subr.mxu0 %v1205
    %1269 = vmatpush1.msra.mxu0 %v1204
    %1270 = vmatprep.subr.mxu0 %v1207
    %1271 = vmatpush1.msra.mxu0 %v1206
    %1272 = vmatprep.subr.mxu0 %v1209
    %1273 = vmatpush1.msra.mxu0 %v1208
    %1274 = vmatprep.subr.mxu0 %v1211
    %1275 = vmatpush1.msra.mxu0 %v1210
    %1276 = vmatprep.subr.mxu0 %v1213
    %1277 = vmatpush1.msra.mxu0 %v1212
    %1278 = vmatprep.subr.mxu0 %v1215
    %1279 = vmatpush1.msra.mxu0 %v1214
    %1280 = vmatprep.subr.mxu0 %v1217
    %1281 = vmatpush1.msra.mxu0 %v1216
    %1282 = vmatprep.subr.mxu0 %v1219
    %1283 = vmatpush1.msra.mxu0 %v1218
    %1284 = vmatprep.subr.mxu0 %v1221
    %1285 = vmatpush1.msra.mxu0 %v1220
    %1286 = vmatprep.subr.mxu0 %v1223
    %1287 = vmatpush1.msra.mxu0 %v1222
    %1288 = vmatprep.mubr.f32.mxu0 %v716
    %1289 = vmatmul.mubr.f32.gmra.mrb[0].mxu0 %v715
    %v1290 = vpop.f32.mrb[0].mxu0
    %v1291 = vadd.f32 0.0, %v1290
    %v1292 = vpop.f32.mrb[0].mxu0
    %v1293 = vadd.f32 0.0, %v1292
    %1294 = vdwg.mxu0
    %s1295 = scalar_lea.vmem %s4, 32
    %v1296 = vld [vmem:[%s1295] sm:$0xff]
    %v1297 = vld [vmem:[%s1295 + $0x8] sm:$0xff]
    %v1299 = vsel %vm96, %v1296, 0
    %v1302 = vsel %vm96, %v1297, 0
    %1304 = vmatprep.subr.mxu0 %v1293
    %1305 = vmatpush1.msra.mxu0 %v1291
    %1306 = vmatprep.subr.mxu0 0.0
    %1307 = vmatpush1.msra.mxu0 0.0
    %1308 = vmatprep.subr.mxu0 0.0
    %1309 = vmatpush1.msra.mxu0 0.0
    %1310 = vmatprep.subr.mxu0 0.0
    %1311 = vmatpush1.msra.mxu0 0.0
    %1312 = vmatprep.subr.mxu0 0.0
    %1313 = vmatpush1.msra.mxu0 0.0
    %1314 = vmatprep.subr.mxu0 0.0
    %1315 = vmatpush1.msra.mxu0 0.0
    %1316 = vmatprep.subr.mxu0 0.0
    %1317 = vmatpush1.msra.mxu0 0.0
    %1318 = vmatprep.subr.mxu0 0.0
    %1319 = vmatpush1.msra.mxu0 0.0
    %1320 = vmatprep.subr.mxu0 0.0
    %1321 = vmatpush1.msra.mxu0 0.0
    %1322 = vmatprep.subr.mxu0 0.0
    %1323 = vmatpush1.msra.mxu0 0.0
    %1324 = vmatprep.subr.mxu0 0.0
    %1325 = vmatpush1.msra.mxu0 0.0
    %1326 = vmatprep.subr.mxu0 0.0
    %1327 = vmatpush1.msra.mxu0 0.0
    %1328 = vmatprep.subr.mxu0 0.0
    %1329 = vmatpush1.msra.mxu0 0.0
    %1330 = vmatprep.subr.mxu0 0.0
    %1331 = vmatpush1.msra.mxu0 0.0
    %1332 = vmatprep.subr.mxu0 0.0
    %1333 = vmatpush1.msra.mxu0 0.0
    %1334 = vmatprep.subr.mxu0 0.0
    %1335 = vmatpush1.msra.mxu0 0.0
    %1336 = vmatprep.subr.mxu0 0.0
    %1337 = vmatpush1.msra.mxu0 0.0
    %1338 = vmatprep.subr.mxu0 0.0
    %1339 = vmatpush1.msra.mxu0 0.0
    %1340 = vmatprep.subr.mxu0 0.0
    %1341 = vmatpush1.msra.mxu0 0.0
    %1342 = vmatprep.subr.mxu0 0.0
    %1343 = vmatpush1.msra.mxu0 0.0
    %1344 = vmatprep.subr.mxu0 0.0
    %1345 = vmatpush1.msra.mxu0 0.0
    %1346 = vmatprep.subr.mxu0 0.0
    %1347 = vmatpush1.msra.mxu0 0.0
    %1348 = vmatprep.subr.mxu0 0.0
    %1349 = vmatpush1.msra.mxu0 0.0
    %1350 = vmatprep.subr.mxu0 0.0
    %1351 = vmatpush1.msra.mxu0 0.0
    %1352 = vmatprep.subr.mxu0 0.0
    %1353 = vmatpush1.msra.mxu0 0.0
    %1354 = vmatprep.subr.mxu0 0.0
    %1355 = vmatpush1.msra.mxu0 0.0
    %1356 = vmatprep.subr.mxu0 0.0
    %1357 = vmatpush1.msra.mxu0 0.0
    %1358 = vmatprep.subr.mxu0 0.0
    %1359 = vmatpush1.msra.mxu0 0.0
    %1360 = vmatprep.subr.mxu0 0.0
    %1361 = vmatpush1.msra.mxu0 0.0
    %1362 = vmatprep.subr.mxu0 0.0
    %1363 = vmatpush1.msra.mxu0 0.0
    %1364 = vmatprep.subr.mxu0 0.0
    %1365 = vmatpush1.msra.mxu0 0.0
    %1366 = vmatprep.subr.mxu0 0.0
    %1367 = vmatpush1.msra.mxu0 0.0
    %1368 = vmatprep.mubr.f32.mxu0 0.0
    %1369 = vmatmul.mubr.f32.gmra.mrb[0].mxu0 %v1299
    %v1370 = vpop.f32.mrb[0].mxu0
    %v1371 = vadd.f32 0.0, %v1370
    %v1372 = vpop.f32.mrb[0].mxu0
    %v1373 = vadd.f32 0.0, %v1372
    %1374 = vmatprep.mubr.f32.mxu0 0.0
    %1375 = vmatmul.mubr.f32.gmra.mrb[0].mxu0 %v1302
    %v1376 = vpop.f32.mrb[0].mxu0
    %v1377 = vadd.f32 0.0, %v1376
    %v1378 = vpop.f32.mrb[0].mxu0
    %v1379 = vadd.f32 0.0, %v1378
    %1380 = vdwg.mxu0
    %v1381 = vadd.f32 %v1149, %v1371
    %v1382 = vadd.f32 %v1151, %v1373
    %v1383 = vadd.f32 %v1155, %v1377
    %v1384 = vadd.f32 %v1157, %v1379
    %v1385 = vld [vmem:[%s6] sm:$0x3]
    %v1387 = vlaneseq
    %v1388 = vshrl.u32 %v1387, 7
    %v1389 = vsub.s32 0, %v1388
    %v1390 = vrot.slane %v1385, %v1389
    %v1391 = vlaneseq
    %v1392 = vshrl.u32 %v1391, 7
    %v1393 = vsub.s32 1, %v1392
    %v1394 = vrot.slane %v1385, %v1393
    %v1397 = vadd.f32 %v1381, %v1390
    %v1398 = vadd.f32 %v1382, %v1394
    %v1399 = vadd.f32 %v1383, %v1390
    %v1400 = vadd.f32 %v1384, %v1394
    %v1401 = vmax.f32 %v1397, 0.0
    %v1402 = vmax.f32 %v1398, 0.0
    %v1403 = vmax.f32 %v1399, 0.0
    %v1404 = vmax.f32 %v1400, 0.0
    %v1405 = vld [vmem:[%s8] sm:$0xff]
    %v1406 = vld [vmem:[%s8 + $0x8] sm:$0xff]
    %v1407 = vld [vmem:[%s8 + $0x10] sm:$0xff]
    %v1408 = vld [vmem:[%s8 + $0x18] sm:$0xff]
    %v1409 = vld [vmem:[%s8 + $0x20] sm:$0xff]
    %v1410 = vld [vmem:[%s8 + $0x28] sm:$0xff]
    %v1411 = vld [vmem:[%s8 + $0x30] sm:$0xff]
    %v1412 = vld [vmem:[%s8 + $0x38] sm:$0xff]
    %v1413 = vld [vmem:[%s8 + $0x40] sm:$0xff]
    %v1414 = vld [vmem:[%s8 + $0x48] sm:$0xff]
    %v1415 = vld [vmem:[%s8 + $0x50] sm:$0xff]
    %v1416 = vld [vmem:[%s8 + $0x58] sm:$0xff]
    %v1417 = vld [vmem:[%s8 + $0x60] sm:$0xff]
    %v1418 = vld [vmem:[%s8 + $0x68] sm:$0xff]
    %v1419 = vld [vmem:[%s8 + $0x70] sm:$0xff]
    %v1420 = vld [vmem:[%s8 + $0x78] sm:$0xff]
    %v1421 = vld [vmem:[%s8 + $0x80] sm:$0xff]
    %v1422 = vld [vmem:[%s8 + $0x88] sm:$0xff]
    %v1423 = vld [vmem:[%s8 + $0x90] sm:$0xff]
    %v1424 = vld [vmem:[%s8 + $0x98] sm:$0xff]
    %v1425 = vld [vmem:[%s8 + $0xa0] sm:$0xff]
    %v1426 = vld [vmem:[%s8 + $0xa8] sm:$0xff]
    %v1427 = vld [vmem:[%s8 + $0xb0] sm:$0xff]
    %v1428 = vld [vmem:[%s8 + $0xb8] sm:$0xff]
    %v1429 = vld [vmem:[%s8 + $0xc0] sm:$0xff]
    %v1430 = vld [vmem:[%s8 + $0xc8] sm:$0xff]
    %v1431 = vld [vmem:[%s8 + $0xd0] sm:$0xff]
    %v1432 = vld [vmem:[%s8 + $0xd8] sm:$0xff]
    %v1433 = vld [vmem:[%s8 + $0xe0] sm:$0xff]
    %v1434 = vld [vmem:[%s8 + $0xe8] sm:$0xff]
    %v1435 = vld [vmem:[%s8 + $0xf0] sm:$0xff]
    %v1436 = vld [vmem:[%s8 + $0xf8] sm:$0xff]
    %v1437 = vld [vmem:[%s8 + $0x100] sm:$0xff]
    %v1438 = vld [vmem:[%s8 + $0x108] sm:$0xff]
    %v1439 = vld [vmem:[%s8 + $0x110] sm:$0xff]
    %v1440 = vld [vmem:[%s8 + $0x118] sm:$0xff]
    %v1441 = vld [vmem:[%s8 + $0x120] sm:$0xff]
    %v1442 = vld [vmem:[%s8 + $0x128] sm:$0xff]
    %v1443 = vld [vmem:[%s8 + $0x130] sm:$0xff]
    %v1444 = vld [vmem:[%s8 + $0x138] sm:$0xff]
    %v1445 = vld [vmem:[%s8 + $0x140] sm:$0xff]
    %v1446 = vld [vmem:[%s8 + $0x148] sm:$0xff]
    %v1447 = vld [vmem:[%s8 + $0x150] sm:$0xff]
    %v1448 = vld [vmem:[%s8 + $0x158] sm:$0xff]
    %v1449 = vld [vmem:[%s8 + $0x160] sm:$0xff]
    %v1450 = vld [vmem:[%s8 + $0x168] sm:$0xff]
    %v1451 = vld [vmem:[%s8 + $0x170] sm:$0xff]
    %v1452 = vld [vmem:[%s8 + $0x178] sm:$0xff]
    %v1453 = vld [vmem:[%s8 + $0x180] sm:$0xff]
    %v1454 = vld [vmem:[%s8 + $0x188] sm:$0xff]
    %v1455 = vld [vmem:[%s8 + $0x190] sm:$0xff]
    %v1456 = vld [vmem:[%s8 + $0x198] sm:$0xff]
    %v1457 = vld [vmem:[%s8 + $0x1a0] sm:$0xff]
    %v1458 = vld [vmem:[%s8 + $0x1a8] sm:$0xff]
    %v1459 = vld [vmem:[%s8 + $0x1b0] sm:$0xff]
    %v1460 = vld [vmem:[%s8 + $0x1b8] sm:$0xff]
    %v1461 = vld [vmem:[%s8 + $0x1c0] sm:$0xff]
    %v1462 = vld [vmem:[%s8 + $0x1c8] sm:$0xff]
    %v1463 = vld [vmem:[%s8 + $0x1d0] sm:$0xff]
    %v1464 = vld [vmem:[%s8 + $0x1d8] sm:$0xff]
    %v1465 = vld [vmem:[%s8 + $0x1e0] sm:$0xff]
    %v1466 = vld [vmem:[%s8 + $0x1e8] sm:$0xff]
    %v1467 = vld [vmem:[%s8 + $0x1f0] sm:$0xff]
    %v1468 = vld [vmem:[%s8 + $0x1f8] sm:$0xff]
    %1469 = vmatprep.subr.mxu0 %v1406
    %1470 = vmatpush1.msra.mxu0 %v1405
    %1471 = vmatprep.subr.mxu0 %v1408
    %1472 = vmatpush1.msra.mxu0 %v1407
    %1473 = vmatprep.subr.mxu0 %v1410
    %1474 = vmatpush1.msra.mxu0 %v1409
    %1475 = vmatprep.subr.mxu0 %v1412
    %1476 = vmatpush1.msra.mxu0 %v1411
    %1477 = vmatprep.subr.mxu0 %v1414
    %1478 = vmatpush1.msra.mxu0 %v1413
    %1479 = vmatprep.subr.mxu0 %v1416
    %1480 = vmatpush1.msra.mxu0 %v1415
    %1481 = vmatprep.subr.mxu0 %v1418
    %1482 = vmatpush1.msra.mxu0 %v1417
    %1483 = vmatprep.subr.mxu0 %v1420
    %1484 = vmatpush1.msra.mxu0 %v1419
    %1485 = vmatprep.subr.mxu0 %v1422
    %1486 = vmatpush1.msra.mxu0 %v1421
    %1487 = vmatprep.subr.mxu0 %v1424
    %1488 = vmatpush1.msra.mxu0 %v1423
    %1489 = vmatprep.subr.mxu0 %v1426
    %1490 = vmatpush1.msra.mxu0 %v1425
    %1491 = vmatprep.subr.mxu0 %v1428
    %1492 = vmatpush1.msra.mxu0 %v1427
    %1493 = vmatprep.subr.mxu0 %v1430
    %1494 = vmatpush1.msra.mxu0 %v1429
    %1495 = vmatprep.subr.mxu0 %v1432
    %1496 = vmatpush1.msra.mxu0 %v1431
    %1497 = vmatprep.subr.mxu0 %v1434
    %1498 = vmatpush1.msra.mxu0 %v1433
    %1499 = vmatprep.subr.mxu0 %v1436
    %1500 = vmatpush1.msra.mxu0 %v1435
    %1501 = vmatprep.subr.mxu0 %v1438
    %1502 = vmatpush1.msra.mxu0 %v1437
    %1503 = vmatprep.subr.mxu0 %v1440
    %1504 = vmatpush1.msra.mxu0 %v1439
    %1505 = vmatprep.subr.mxu0 %v1442
    %1506 = vmatpush1.msra.mxu0 %v1441
    %1507 = vmatprep.subr.mxu0 %v1444
    %1508 = vmatpush1.msra.mxu0 %v1443
    %1509 = vmatprep.subr.mxu0 %v1446
    %1510 = vmatpush1.msra.mxu0 %v1445
    %1511 = vmatprep.subr.mxu0 %v1448
    %1512 = vmatpush1.msra.mxu0 %v1447
    %1513 = vmatprep.subr.mxu0 %v1450
    %1514 = vmatpush1.msra.mxu0 %v1449
    %1515 = vmatprep.subr.mxu0 %v1452
    %1516 = vmatpush1.msra.mxu0 %v1451
    %1517 = vmatprep.subr.mxu0 %v1454
    %1518 = vmatpush1.msra.mxu0 %v1453
    %1519 = vmatprep.subr.mxu0 %v1456
    %1520 = vmatpush1.msra.mxu0 %v1455
    %1521 = vmatprep.subr.mxu0 %v1458
    %1522 = vmatpush1.msra.mxu0 %v1457
    %1523 = vmatprep.subr.mxu0 %v1460
    %1524 = vmatpush1.msra.mxu0 %v1459
    %1525 = vmatprep.subr.mxu0 %v1462
    %1526 = vmatpush1.msra.mxu0 %v1461
    %1527 = vmatprep.subr.mxu0 %v1464
    %1528 = vmatpush1.msra.mxu0 %v1463
    %1529 = vmatprep.subr.mxu0 %v1466
    %1530 = vmatpush1.msra.mxu0 %v1465
    %1531 = vmatprep.subr.mxu0 %v1468
    %1532 = vmatpush1.msra.mxu0 %v1467
    %1533 = vmatprep.mubr.f32.mxu0 %v1402
    %1534 = vmatmul.mubr.f32.gmra.mrb[0].mxu0 %v1401
    %v1535 = vpop.f32.mrb[0].mxu0
    %v1536 = vadd.f32 0.0, %v1535
    %v1537 = vpop.f32.mrb[0].mxu0
    %v1538 = vadd.f32 0.0, %v1537
    %1539 = vmatprep.mubr.f32.mxu0 %v1404
    %1540 = vmatmul.mubr.f32.gmra.mrb[0].mxu0 %v1403
    %v1541 = vpop.f32.mrb[0].mxu0
    %v1542 = vadd.f32 0.0, %v1541
    %v1543 = vpop.f32.mrb[0].mxu0
    %v1544 = vadd.f32 0.0, %v1543
    %1545 = vdwg.mxu0
    %v1546 = vld [vmem:[%s7] sm:$0xff]
    %v1547 = vld [vmem:[%s7 + $0x8] sm:$0xff]
    %v1548 = vld [vmem:[%s7 + $0x10] sm:$0xff]
    %v1549 = vld [vmem:[%s7 + $0x18] sm:$0xf]
    %s1550 = scalar_lea.vmem %s8, 512
    %v1551 = vld [vmem:[%s1550] sm:$0xff]
    %v1552 = vld [vmem:[%s1550 + $0x8] sm:$0xff]
    %v1553 = vld [vmem:[%s1550 + $0x10] sm:$0xff]
    %v1554 = vld [vmem:[%s1550 + $0x18] sm:$0xff]
    %v1555 = vld [vmem:[%s1550 + $0x20] sm:$0xff]
    %v1556 = vld [vmem:[%s1550 + $0x28] sm:$0xff]
    %v1557 = vld [vmem:[%s1550 + $0x30] sm:$0xff]
    %v1558 = vld [vmem:[%s1550 + $0x38] sm:$0xff]
    %v1559 = vld [vmem:[%s1550 + $0x40] sm:$0xff]
    %v1560 = vld [vmem:[%s1550 + $0x48] sm:$0xff]
    %v1561 = vld [vmem:[%s1550 + $0x50] sm:$0xff]
    %v1562 = vld [vmem:[%s1550 + $0x58] sm:$0xff]
    %v1563 = vld [vmem:[%s1550 + $0x60] sm:$0xff]
    %v1564 = vld [vmem:[%s1550 + $0x68] sm:$0xff]
    %v1565 = vld [vmem:[%s1550 + $0x70] sm:$0xff]
    %v1566 = vld [vmem:[%s1550 + $0x78] sm:$0xff]
    %v1567 = vld [vmem:[%s1550 + $0x80] sm:$0xff]
    %v1568 = vld [vmem:[%s1550 + $0x88] sm:$0xff]
    %v1569 = vld [vmem:[%s1550 + $0x90] sm:$0xff]
    %v1570 = vld [vmem:[%s1550 + $0x98] sm:$0xff]
    %v1571 = vld [vmem:[%s1550 + $0xa0] sm:$0xff]
    %v1572 = vld [vmem:[%s1550 + $0xa8] sm:$0xff]
    %v1573 = vld [vmem:[%s1550 + $0xb0] sm:$0xff]
    %v1574 = vld [vmem:[%s1550 + $0xb8] sm:$0xff]
    %v1575 = vld [vmem:[%s1550 + $0xc0] sm:$0xff]
    %v1576 = vld [vmem:[%s1550 + $0xc8] sm:$0xff]
    %v1577 = vld [vmem:[%s1550 + $0xd0] sm:$0xff]
    %v1578 = vld [vmem:[%s1550 + $0xd8] sm:$0xff]
    %v1579 = vld [vmem:[%s1550 + $0xe0] sm:$0xff]
    %v1580 = vld [vmem:[%s1550 + $0xe8] sm:$0xff]
    %v1581 = vld [vmem:[%s1550 + $0xf0] sm:$0xff]
    %v1582 = vld [vmem:[%s1550 + $0xf8] sm:$0xff]
    %v1583 = vld [vmem:[%s1550 + $0x100] sm:$0xff]
    %v1584 = vld [vmem:[%s1550 + $0x108] sm:$0xff]
    %v1585 = vld [vmem:[%s1550 + $0x110] sm:$0xff]
    %v1586 = vld [vmem:[%s1550 + $0x118] sm:$0xff]
    %v1587 = vld [vmem:[%s1550 + $0x120] sm:$0xff]
    %v1588 = vld [vmem:[%s1550 + $0x128] sm:$0xff]
    %v1589 = vld [vmem:[%s1550 + $0x130] sm:$0xff]
    %v1590 = vld [vmem:[%s1550 + $0x138] sm:$0xff]
    %v1591 = vld [vmem:[%s1550 + $0x140] sm:$0xff]
    %v1592 = vld [vmem:[%s1550 + $0x148] sm:$0xff]
    %v1593 = vld [vmem:[%s1550 + $0x150] sm:$0xff]
    %v1594 = vld [vmem:[%s1550 + $0x158] sm:$0xff]
    %v1595 = vld [vmem:[%s1550 + $0x160] sm:$0xff]
    %v1596 = vld [vmem:[%s1550 + $0x168] sm:$0xff]
    %v1597 = vld [vmem:[%s1550 + $0x170] sm:$0xff]
    %v1598 = vld [vmem:[%s1550 + $0x178] sm:$0xff]
    %v1599 = vld [vmem:[%s1550 + $0x180] sm:$0xff]
    %v1600 = vld [vmem:[%s1550 + $0x188] sm:$0xff]
    %v1601 = vld [vmem:[%s1550 + $0x190] sm:$0xff]
    %v1602 = vld [vmem:[%s1550 + $0x198] sm:$0xff]
    %v1603 = vld [vmem:[%s1550 + $0x1a0] sm:$0xff]
    %v1604 = vld [vmem:[%s1550 + $0x1a8] sm:$0xff]
    %v1605 = vld [vmem:[%s1550 + $0x1b0] sm:$0xff]
    %v1606 = vld [vmem:[%s1550 + $0x1b8] sm:$0xff]
    %v1607 = vld [vmem:[%s1550 + $0x1c0] sm:$0xff]
    %v1608 = vld [vmem:[%s1550 + $0x1c8] sm:$0xff]
    %v1609 = vld [vmem:[%s1550 + $0x1d0] sm:$0xff]
    %v1610 = vld [vmem:[%s1550 + $0x1d8] sm:$0xff]
    %v1611 = vld [vmem:[%s1550 + $0x1e0] sm:$0xff]
    %v1612 = vld [vmem:[%s1550 + $0x1e8] sm:$0xff]
    %v1613 = vld [vmem:[%s1550 + $0x1f0] sm:$0xff]
    %v1614 = vld [vmem:[%s1550 + $0x1f8] sm:$0xff]
    %1615 = vmatprep.subr.mxu0 %v1552
    %1616 = vmatpush1.msra.mxu0 %v1551
    %1617 = vmatprep.subr.mxu0 %v1554
    %1618 = vmatpush1.msra.mxu0 %v1553
    %1619 = vmatprep.subr.mxu0 %v1556
    %1620 = vmatpush1.msra.mxu0 %v1555
    %1621 = vmatprep.subr.mxu0 %v1558
    %1622 = vmatpush1.msra.mxu0 %v1557
    %1623 = vmatprep.subr.mxu0 %v1560
    %1624 = vmatpush1.msra.mxu0 %v1559
    %1625 = vmatprep.subr.mxu0 %v1562
    %1626 = vmatpush1.msra.mxu0 %v1561
    %1627 = vmatprep.subr.mxu0 %v1564
    %1628 = vmatpush1.msra.mxu0 %v1563
    %1629 = vmatprep.subr.mxu0 %v1566
    %1630 = vmatpush1.msra.mxu0 %v1565
    %1631 = vmatprep.subr.mxu0 %v1568
    %1632 = vmatpush1.msra.mxu0 %v1567
    %1633 = vmatprep.subr.mxu0 %v1570
    %1634 = vmatpush1.msra.mxu0 %v1569
    %1635 = vmatprep.subr.mxu0 %v1572
    %1636 = vmatpush1.msra.mxu0 %v1571
    %1637 = vmatprep.subr.mxu0 %v1574
    %1638 = vmatpush1.msra.mxu0 %v1573
    %1639 = vmatprep.subr.mxu0 %v1576
    %1640 = vmatpush1.msra.mxu0 %v1575
    %1641 = vmatprep.subr.mxu0 %v1578
    %1642 = vmatpush1.msra.mxu0 %v1577
    %1643 = vmatprep.subr.mxu0 %v1580
    %1644 = vmatpush1.msra.mxu0 %v1579
    %1645 = vmatprep.subr.mxu0 %v1582
    %1646 = vmatpush1.msra.mxu0 %v1581
    %1647 = vmatprep.subr.mxu0 %v1584
    %1648 = vmatpush1.msra.mxu0 %v1583
    %1649 = vmatprep.subr.mxu0 %v1586
    %1650 = vmatpush1.msra.mxu0 %v1585
    %1651 = vmatprep.subr.mxu0 %v1588
    %1652 = vmatpush1.msra.mxu0 %v1587
    %1653 = vmatprep.subr.mxu0 %v1590
    %1654 = vmatpush1.msra.mxu0 %v1589
    %1655 = vmatprep.subr.mxu0 %v1592
    %1656 = vmatpush1.msra.mxu0 %v1591
    %1657 = vmatprep.subr.mxu0 %v1594
    %1658 = vmatpush1.msra.mxu0 %v1593
    %1659 = vmatprep.subr.mxu0 %v1596
    %1660 = vmatpush1.msra.mxu0 %v1595
    %1661 = vmatprep.subr.mxu0 %v1598
    %1662 = vmatpush1.msra.mxu0 %v1597
    %1663 = vmatprep.subr.mxu0 %v1600
    %1664 = vmatpush1.msra.mxu0 %v1599
    %1665 = vmatprep.subr.mxu0 %v1602
    %1666 = vmatpush1.msra.mxu0 %v1601
    %1667 = vmatprep.subr.mxu0 %v1604
    %1668 = vmatpush1.msra.mxu0 %v1603
    %1669 = vmatprep.subr.mxu0 %v1606
    %1670 = vmatpush1.msra.mxu0 %v1605
    %1671 = vmatprep.subr.mxu0 %v1608
    %1672 = vmatpush1.msra.mxu0 %v1607
    %1673 = vmatprep.subr.mxu0 %v1610
    %1674 = vmatpush1.msra.mxu0 %v1609
    %1675 = vmatprep.subr.mxu0 %v1612
    %1676 = vmatpush1.msra.mxu0 %v1611
    %1677 = vmatprep.subr.mxu0 %v1614
    %1678 = vmatpush1.msra.mxu0 %v1613
    %1679 = vmatprep.mubr.f32.mxu0 %v1402
    %1680 = vmatmul.mubr.f32.gmra.mrb[0].mxu0 %v1401
    %v1681 = vpop.f32.mrb[0].mxu0
    %v1682 = vadd.f32 0.0, %v1681
    %v1683 = vpop.f32.mrb[0].mxu0
    %v1684 = vadd.f32 0.0, %v1683
    %1685 = vmatprep.mubr.f32.mxu0 %v1404
    %1686 = vmatmul.mubr.f32.gmra.mrb[0].mxu0 %v1403
    %v1687 = vpop.f32.mrb[0].mxu0
    %v1688 = vadd.f32 0.0, %v1687
    %v1689 = vpop.f32.mrb[0].mxu0
    %v1690 = vadd.f32 0.0, %v1689
    %1691 = vdwg.mxu0
    %s1692 = scalar_lea.vmem %s7, 32
    %v1693 = vld [vmem:[%s1692] sm:$0xff]
    %v1694 = vld [vmem:[%s1692 + $0x8] sm:$0xff]
    %v1695 = vld [vmem:[%s1692 + $0x10] sm:$0xff]
    %v1696 = vld [vmem:[%s1692 + $0x18] sm:$0xf]
    %vm1697 = vcmask 130048
    %v1699 = vsel %vm1697, %v1693, 0
    %v1702 = vsel %vm1697, %v1694, 0
    %v1705 = vsel %vm1697, %v1695, 0
    %v1708 = vsel %vm1697, %v1696, 0
    %1710 = vmatprep.subr.mxu0 %v1684
    %1711 = vmatpush1.msra.mxu0 %v1682
    %1712 = vmatprep.subr.mxu0 %v1690
    %1713 = vmatpush1.msra.mxu0 %v1688
    %1714 = vmatprep.subr.mxu0 0.0
    %1715 = vmatpush1.msra.mxu0 0.0
    %1716 = vmatprep.subr.mxu0 0.0
    %1717 = vmatpush1.msra.mxu0 0.0
    %1718 = vmatprep.subr.mxu0 0.0
    %1719 = vmatpush1.msra.mxu0 0.0
    %1720 = vmatprep.subr.mxu0 0.0
    %1721 = vmatpush1.msra.mxu0 0.0
    %1722 = vmatprep.subr.mxu0 0.0
    %1723 = vmatpush1.msra.mxu0 0.0
    %1724 = vmatprep.subr.mxu0 0.0
    %1725 = vmatpush1.msra.mxu0 0.0
    %1726 = vmatprep.subr.mxu0 0.0
    %1727 = vmatpush1.msra.mxu0 0.0
    %1728 = vmatprep.subr.mxu0 0.0
    %1729 = vmatpush1.msra.mxu0 0.0
    %1730 = vmatprep.subr.mxu0 0.0
    %1731 = vmatpush1.msra.mxu0 0.0
    %1732 = vmatprep.subr.mxu0 0.0
    %1733 = vmatpush1.msra.mxu0 0.0
    %1734 = vmatprep.subr.mxu0 0.0
    %1735 = vmatpush1.msra.mxu0 0.0
    %1736 = vmatprep.subr.mxu0 0.0
    %1737 = vmatpush1.msra.mxu0 0.0
    %1738 = vmatprep.subr.mxu0 0.0
    %1739 = vmatpush1.msra.mxu0 0.0
    %1740 = vmatprep.subr.mxu0 0.0
    %1741 = vmatpush1.msra.mxu0 0.0
    %1742 = vmatprep.subr.mxu0 0.0
    %1743 = vmatpush1.msra.mxu0 0.0
    %1744 = vmatprep.subr.mxu0 0.0
    %1745 = vmatpush1.msra.mxu0 0.0
    %1746 = vmatprep.subr.mxu0 0.0
    %1747 = vmatpush1.msra.mxu0 0.0
    %1748 = vmatprep.subr.mxu0 0.0
    %1749 = vmatpush1.msra.mxu0 0.0
    %1750 = vmatprep.subr.mxu0 0.0
    %1751 = vmatpush1.msra.mxu0 0.0
    %1752 = vmatprep.subr.mxu0 0.0
    %1753 = vmatpush1.msra.mxu0 0.0
    %1754 = vmatprep.subr.mxu0 0.0
    %1755 = vmatpush1.msra.mxu0 0.0
    %1756 = vmatprep.subr.mxu0 0.0
    %1757 = vmatpush1.msra.mxu0 0.0
    %1758 = vmatprep.subr.mxu0 0.0
    %1759 = vmatpush1.msra.mxu0 0.0
    %1760 = vmatprep.subr.mxu0 0.0
    %1761 = vmatpush1.msra.mxu0 0.0
    %1762 = vmatprep.subr.mxu0 0.0
    %1763 = vmatpush1.msra.mxu0 0.0
    %1764 = vmatprep.subr.mxu0 0.0
    %1765 = vmatpush1.msra.mxu0 0.0
    %1766 = vmatprep.subr.mxu0 0.0
    %1767 = vmatpush1.msra.mxu0 0.0
    %1768 = vmatprep.subr.mxu0 0.0
    %1769 = vmatpush1.msra.mxu0 0.0
    %1770 = vmatprep.subr.mxu0 0.0
    %1771 = vmatpush1.msra.mxu0 0.0
    %1772 = vmatprep.subr.mxu0 0.0
    %1773 = vmatpush1.msra.mxu0 0.0
    %1774 = vmatprep.mubr.f32.mxu0 0.0
    %1775 = vmatmul.mubr.f32.gmra.mrb[0].mxu0 %v1699
    %v1776 = vpop.f32.mrb[0].mxu0
    %v1777 = vadd.f32 0.0, %v1776
    %v1778 = vpop.f32.mrb[0].mxu0
    %v1779 = vadd.f32 0.0, %v1778
    %1780 = vmatprep.mubr.f32.mxu0 0.0
    %1781 = vmatmul.mubr.f32.gmra.mrb[0].mxu0 %v1702
    %v1782 = vpop.f32.mrb[0].mxu0
    %v1783 = vadd.f32 0.0, %v1782
    %v1784 = vpop.f32.mrb[0].mxu0
    %v1785 = vadd.f32 0.0, %v1784
    %1786 = vmatprep.mubr.f32.mxu0 0.0
    %1787 = vmatmul.mubr.f32.gmra.mrb[0].mxu0 %v1705
    %v1788 = vpop.f32.mrb[0].mxu0
    %v1789 = vadd.f32 0.0, %v1788
    %v1790 = vpop.f32.mrb[0].mxu0
    %v1791 = vadd.f32 0.0, %v1790
    %1792 = vmatprep.mubr.f32.mxu0 0.0
    %1793 = vmatmul.mubr.f32.gmra.mrb[0].mxu0 %v1708
    %v1794 = vpop.f32.mrb[0].mxu0
    %v1795 = vadd.f32 0.0, %v1794
    %v1796 = vpop.f32.mrb[0].mxu0
    %v1797 = vadd.f32 0.0, %v1796
    %1798 = vdwg.mxu0
    %v1800 = vsel %vm1697, %v1546, 0
    %v1803 = vsel %vm1697, %v1547, 0
    %v1806 = vsel %vm1697, %v1548, 0
    %v1809 = vsel %vm1697, %v1549, 0
    %1811 = vmatprep.subr.mxu0 %v1538
    %1812 = vmatpush1.msra.mxu0 %v1536
    %1813 = vmatprep.subr.mxu0 %v1544
    %1814 = vmatpush1.msra.mxu0 %v1542
    %1815 = vmatprep.subr.mxu0 0.0
    %1816 = vmatpush1.msra.mxu0 0.0
    %1817 = vmatprep.subr.mxu0 0.0
    %1818 = vmatpush1.msra.mxu0 0.0
    %1819 = vmatprep.subr.mxu0 0.0
    %1820 = vmatpush1.msra.mxu0 0.0
    %1821 = vmatprep.subr.mxu0 0.0
    %1822 = vmatpush1.msra.mxu0 0.0
    %1823 = vmatprep.subr.mxu0 0.0
    %1824 = vmatpush1.msra.mxu0 0.0
    %1825 = vmatprep.subr.mxu0 0.0
    %1826 = vmatpush1.msra.mxu0 0.0
    %1827 = vmatprep.subr.mxu0 0.0
    %1828 = vmatpush1.msra.mxu0 0.0
    %1829 = vmatprep.subr.mxu0 0.0
    %1830 = vmatpush1.msra.mxu0 0.0
    %1831 = vmatprep.subr.mxu0 0.0
    %1832 = vmatpush1.msra.mxu0 0.0
    %1833 = vmatprep.subr.mxu0 0.0
    %1834 = vmatpush1.msra.mxu0 0.0
    %1835 = vmatprep.subr.mxu0 0.0
    %1836 = vmatpush1.msra.mxu0 0.0
    %1837 = vmatprep.subr.mxu0 0.0
    %1838 = vmatpush1.msra.mxu0 0.0
    %1839 = vmatprep.subr.mxu0 0.0
    %1840 = vmatpush1.msra.mxu0 0.0
    %1841 = vmatprep.subr.mxu0 0.0
    %1842 = vmatpush1.msra.mxu0 0.0
    %1843 = vmatprep.subr.mxu0 0.0
    %1844 = vmatpush1.msra.mxu0 0.0
    %1845 = vmatprep.subr.mxu0 0.0
    %1846 = vmatpush1.msra.mxu0 0.0
    %1847 = vmatprep.subr.mxu0 0.0
    %1848 = vmatpush1.msra.mxu0 0.0
    %1849 = vmatprep.subr.mxu0 0.0
    %1850 = vmatpush1.msra.mxu0 0.0
    %1851 = vmatprep.subr.mxu0 0.0
    %1852 = vmatpush1.msra.mxu0 0.0
    %1853 = vmatprep.subr.mxu0 0.0
    %1854 = vmatpush1.msra.mxu0 0.0
    %1855 = vmatprep.subr.mxu0 0.0
    %1856 = vmatpush1.msra.mxu0 0.0
    %1857 = vmatprep.subr.mxu0 0.0
    %1858 = vmatpush1.msra.mxu0 0.0
    %1859 = vmatprep.subr.mxu0 0.0
    %1860 = vmatpush1.msra.mxu0 0.0
    %1861 = vmatprep.subr.mxu0 0.0
    %1862 = vmatpush1.msra.mxu0 0.0
    %1863 = vmatprep.subr.mxu0 0.0
    %1864 = vmatpush1.msra.mxu0 0.0
    %1865 = vmatprep.subr.mxu0 0.0
    %1866 = vmatpush1.msra.mxu0 0.0
    %1867 = vmatprep.subr.mxu0 0.0
    %1868 = vmatpush1.msra.mxu0 0.0
    %1869 = vmatprep.subr.mxu0 0.0
    %1870 = vmatpush1.msra.mxu0 0.0
    %1871 = vmatprep.subr.mxu0 0.0
    %1872 = vmatpush1.msra.mxu0 0.0
    %1873 = vmatprep.subr.mxu0 0.0
    %1874 = vmatpush1.msra.mxu0 0.0
    %1875 = vmatprep.mubr.f32.mxu0 0.0
    %1876 = vmatmul.mubr.f32.gmra.mrb[0].mxu0 %v1800
    %v1877 = vpop.f32.mrb[0].mxu0
    %v1878 = vadd.f32 %v1777, %v1877
    %v1879 = vpop.f32.mrb[0].mxu0
    %v1880 = vadd.f32 %v1779, %v1879
    %1881 = vmatprep.mubr.f32.mxu0 0.0
    %1882 = vmatmul.mubr.f32.gmra.mrb[0].mxu0 %v1803
    %v1883 = vpop.f32.mrb[0].mxu0
    %v1884 = vadd.f32 %v1783, %v1883
    %v1885 = vpop.f32.mrb[0].mxu0
    %v1886 = vadd.f32 %v1785, %v1885
    %1887 = vmatprep.mubr.f32.mxu0 0.0
    %1888 = vmatmul.mubr.f32.gmra.mrb[0].mxu0 %v1806
    %v1889 = vpop.f32.mrb[0].mxu0
    %v1890 = vadd.f32 %v1789, %v1889
    %v1891 = vpop.f32.mrb[0].mxu0
    %v1892 = vadd.f32 %v1791, %v1891
    %1893 = vmatprep.mubr.f32.mxu0 0.0
    %1894 = vmatmul.mubr.f32.gmra.mrb[0].mxu0 %v1809
    %v1895 = vpop.f32.mrb[0].mxu0
    %v1896 = vadd.f32 %v1795, %v1895
    %v1897 = vpop.f32.mrb[0].mxu0
    %v1898 = vadd.f32 %v1797, %v1897
    %1899 = vdwg.mxu0
    %s1900 = scalar_lea.vmem %s8, 1024
    %v1901 = vld [vmem:[%s1900] sm:$0xff]
    %v1902 = vld [vmem:[%s1900 + $0x8] sm:$0xff]
    %v1903 = vld [vmem:[%s1900 + $0x10] sm:$0xff]
    %v1904 = vld [vmem:[%s1900 + $0x18] sm:$0xff]
    %v1905 = vld [vmem:[%s1900 + $0x20] sm:$0xff]
    %v1906 = vld [vmem:[%s1900 + $0x28] sm:$0xff]
    %v1907 = vld [vmem:[%s1900 + $0x30] sm:$0xff]
    %v1908 = vld [vmem:[%s1900 + $0x38] sm:$0xff]
    %v1909 = vld [vmem:[%s1900 + $0x40] sm:$0xff]
    %v1910 = vld [vmem:[%s1900 + $0x48] sm:$0xff]
    %v1911 = vld [vmem:[%s1900 + $0x50] sm:$0xff]
    %v1912 = vld [vmem:[%s1900 + $0x58] sm:$0xff]
    %v1913 = vld [vmem:[%s1900 + $0x60] sm:$0xff]
    %v1914 = vld [vmem:[%s1900 + $0x68] sm:$0xff]
    %v1915 = vld [vmem:[%s1900 + $0x70] sm:$0xff]
    %v1916 = vld [vmem:[%s1900 + $0x78] sm:$0xff]
    %v1917 = vld [vmem:[%s1900 + $0x80] sm:$0xff]
    %v1918 = vld [vmem:[%s1900 + $0x88] sm:$0xff]
    %v1919 = vld [vmem:[%s1900 + $0x90] sm:$0xff]
    %v1920 = vld [vmem:[%s1900 + $0x98] sm:$0xff]
    %v1921 = vld [vmem:[%s1900 + $0xa0] sm:$0xff]
    %v1922 = vld [vmem:[%s1900 + $0xa8] sm:$0xff]
    %v1923 = vld [vmem:[%s1900 + $0xb0] sm:$0xff]
    %v1924 = vld [vmem:[%s1900 + $0xb8] sm:$0xff]
    %v1925 = vld [vmem:[%s1900 + $0xc0] sm:$0xff]
    %v1926 = vld [vmem:[%s1900 + $0xc8] sm:$0xff]
    %v1927 = vld [vmem:[%s1900 + $0xd0] sm:$0xff]
    %v1928 = vld [vmem:[%s1900 + $0xd8] sm:$0xff]
    %v1929 = vld [vmem:[%s1900 + $0xe0] sm:$0xff]
    %v1930 = vld [vmem:[%s1900 + $0xe8] sm:$0xff]
    %v1931 = vld [vmem:[%s1900 + $0xf0] sm:$0xff]
    %v1932 = vld [vmem:[%s1900 + $0xf8] sm:$0xff]
    %v1933 = vld [vmem:[%s1900 + $0x100] sm:$0xff]
    %v1934 = vld [vmem:[%s1900 + $0x108] sm:$0xff]
    %v1935 = vld [vmem:[%s1900 + $0x110] sm:$0xff]
    %v1936 = vld [vmem:[%s1900 + $0x118] sm:$0xff]
    %v1937 = vld [vmem:[%s1900 + $0x120] sm:$0xff]
    %v1938 = vld [vmem:[%s1900 + $0x128] sm:$0xff]
    %v1939 = vld [vmem:[%s1900 + $0x130] sm:$0xff]
    %v1940 = vld [vmem:[%s1900 + $0x138] sm:$0xff]
    %v1941 = vld [vmem:[%s1900 + $0x140] sm:$0xff]
    %v1942 = vld [vmem:[%s1900 + $0x148] sm:$0xff]
    %v1943 = vld [vmem:[%s1900 + $0x150] sm:$0xff]
    %v1944 = vld [vmem:[%s1900 + $0x158] sm:$0xff]
    %v1945 = vld [vmem:[%s1900 + $0x160] sm:$0xff]
    %v1946 = vld [vmem:[%s1900 + $0x168] sm:$0xff]
    %v1947 = vld [vmem:[%s1900 + $0x170] sm:$0xff]
    %v1948 = vld [vmem:[%s1900 + $0x178] sm:$0xff]
    %v1949 = vld [vmem:[%s1900 + $0x180] sm:$0xff]
    %v1950 = vld [vmem:[%s1900 + $0x188] sm:$0xff]
    %v1951 = vld [vmem:[%s1900 + $0x190] sm:$0xff]
    %v1952 = vld [vmem:[%s1900 + $0x198] sm:$0xff]
    %v1953 = vld [vmem:[%s1900 + $0x1a0] sm:$0xff]
    %v1954 = vld [vmem:[%s1900 + $0x1a8] sm:$0xff]
    %v1955 = vld [vmem:[%s1900 + $0x1b0] sm:$0xff]
    %v1956 = vld [vmem:[%s1900 + $0x1b8] sm:$0xff]
    %v1957 = vld [vmem:[%s1900 + $0x1c0] sm:$0xff]
    %v1958 = vld [vmem:[%s1900 + $0x1c8] sm:$0xff]
    %v1959 = vld [vmem:[%s1900 + $0x1d0] sm:$0xff]
    %v1960 = vld [vmem:[%s1900 + $0x1d8] sm:$0xff]
    %v1961 = vld [vmem:[%s1900 + $0x1e0] sm:$0xff]
    %v1962 = vld [vmem:[%s1900 + $0x1e8] sm:$0xff]
    %v1963 = vld [vmem:[%s1900 + $0x1f0] sm:$0xff]
    %v1964 = vld [vmem:[%s1900 + $0x1f8] sm:$0xff]
    %1965 = vmatprep.subr.mxu0 %v1902
    %1966 = vmatpush1.msra.mxu0 %v1901
    %1967 = vmatprep.subr.mxu0 %v1904
    %1968 = vmatpush1.msra.mxu0 %v1903
    %1969 = vmatprep.subr.mxu0 %v1906
    %1970 = vmatpush1.msra.mxu0 %v1905
    %1971 = vmatprep.subr.mxu0 %v1908
    %1972 = vmatpush1.msra.mxu0 %v1907
    %1973 = vmatprep.subr.mxu0 %v1910
    %1974 = vmatpush1.msra.mxu0 %v1909
    %1975 = vmatprep.subr.mxu0 %v1912
    %1976 = vmatpush1.msra.mxu0 %v1911
    %1977 = vmatprep.subr.mxu0 %v1914
    %1978 = vmatpush1.msra.mxu0 %v1913
    %1979 = vmatprep.subr.mxu0 %v1916
    %1980 = vmatpush1.msra.mxu0 %v1915
    %1981 = vmatprep.subr.mxu0 %v1918
    %1982 = vmatpush1.msra.mxu0 %v1917
    %1983 = vmatprep.subr.mxu0 %v1920
    %1984 = vmatpush1.msra.mxu0 %v1919
    %1985 = vmatprep.subr.mxu0 %v1922
    %1986 = vmatpush1.msra.mxu0 %v1921
    %1987 = vmatprep.subr.mxu0 %v1924
    %1988 = vmatpush1.msra.mxu0 %v1923
    %1989 = vmatprep.subr.mxu0 %v1926
    %1990 = vmatpush1.msra.mxu0 %v1925
    %1991 = vmatprep.subr.mxu0 %v1928
    %1992 = vmatpush1.msra.mxu0 %v1927
    %1993 = vmatprep.subr.mxu0 %v1930
    %1994 = vmatpush1.msra.mxu0 %v1929
    %1995 = vmatprep.subr.mxu0 %v1932
    %1996 = vmatpush1.msra.mxu0 %v1931
    %1997 = vmatprep.subr.mxu0 %v1934
    %1998 = vmatpush1.msra.mxu0 %v1933
    %1999 = vmatprep.subr.mxu0 %v1936
    %2000 = vmatpush1.msra.mxu0 %v1935
    %2001 = vmatprep.subr.mxu0 %v1938
    %2002 = vmatpush1.msra.mxu0 %v1937
    %2003 = vmatprep.subr.mxu0 %v1940
    %2004 = vmatpush1.msra.mxu0 %v1939
    %2005 = vmatprep.subr.mxu0 %v1942
    %2006 = vmatpush1.msra.mxu0 %v1941
    %2007 = vmatprep.subr.mxu0 %v1944
    %2008 = vmatpush1.msra.mxu0 %v1943
    %2009 = vmatprep.subr.mxu0 %v1946
    %2010 = vmatpush1.msra.mxu0 %v1945
    %2011 = vmatprep.subr.mxu0 %v1948
    %2012 = vmatpush1.msra.mxu0 %v1947
    %2013 = vmatprep.subr.mxu0 %v1950
    %2014 = vmatpush1.msra.mxu0 %v1949
    %2015 = vmatprep.subr.mxu0 %v1952
    %2016 = vmatpush1.msra.mxu0 %v1951
    %2017 = vmatprep.subr.mxu0 %v1954
    %2018 = vmatpush1.msra.mxu0 %v1953
    %2019 = vmatprep.subr.mxu0 %v1956
    %2020 = vmatpush1.msra.mxu0 %v1955
    %2021 = vmatprep.subr.mxu0 %v1958
    %2022 = vmatpush1.msra.mxu0 %v1957
    %2023 = vmatprep.subr.mxu0 %v1960
    %2024 = vmatpush1.msra.mxu0 %v1959
    %2025 = vmatprep.subr.mxu0 %v1962
    %2026 = vmatpush1.msra.mxu0 %v1961
    %2027 = vmatprep.subr.mxu0 %v1964
    %2028 = vmatpush1.msra.mxu0 %v1963
    %2029 = vmatprep.mubr.f32.mxu0 %v1402
    %2030 = vmatmul.mubr.f32.gmra.mrb[0].mxu0 %v1401
    %v2031 = vpop.f32.mrb[0].mxu0
    %v2032 = vadd.f32 0.0, %v2031
    %v2033 = vpop.f32.mrb[0].mxu0
    %v2034 = vadd.f32 0.0, %v2033
    %2035 = vmatprep.mubr.f32.mxu0 %v1404
    %2036 = vmatmul.mubr.f32.gmra.mrb[0].mxu0 %v1403
    %v2037 = vpop.f32.mrb[0].mxu0
    %v2038 = vadd.f32 0.0, %v2037
    %v2039 = vpop.f32.mrb[0].mxu0
    %v2040 = vadd.f32 0.0, %v2039
    %2041 = vdwg.mxu0
    %s2042 = scalar_lea.vmem %s7, 64
    %v2043 = vld [vmem:[%s2042] sm:$0xff]
    %v2044 = vld [vmem:[%s2042 + $0x8] sm:$0xff]
    %v2045 = vld [vmem:[%s2042 + $0x10] sm:$0xff]
    %v2046 = vld [vmem:[%s2042 + $0x18] sm:$0xf]
    %v2048 = vsel %vm1697, %v2043, 0
    %v2051 = vsel %vm1697, %v2044, 0
    %v2054 = vsel %vm1697, %v2045, 0
    %v2057 = vsel %vm1697, %v2046, 0
    %2059 = vmatprep.subr.mxu0 %v2034
    %2060 = vmatpush1.msra.mxu0 %v2032
    %2061 = vmatprep.subr.mxu0 %v2040
    %2062 = vmatpush1.msra.mxu0 %v2038
    %2063 = vmatprep.subr.mxu0 0.0
    %2064 = vmatpush1.msra.mxu0 0.0
    %2065 = vmatprep.subr.mxu0 0.0
    %2066 = vmatpush1.msra.mxu0 0.0
    %2067 = vmatprep.subr.mxu0 0.0
    %2068 = vmatpush1.msra.mxu0 0.0
    %2069 = vmatprep.subr.mxu0 0.0
    %2070 = vmatpush1.msra.mxu0 0.0
    %2071 = vmatprep.subr.mxu0 0.0
    %2072 = vmatpush1.msra.mxu0 0.0
    %2073 = vmatprep.subr.mxu0 0.0
    %2074 = vmatpush1.msra.mxu0 0.0
    %2075 = vmatprep.subr.mxu0 0.0
    %2076 = vmatpush1.msra.mxu0 0.0
    %2077 = vmatprep.subr.mxu0 0.0
    %2078 = vmatpush1.msra.mxu0 0.0
    %2079 = vmatprep.subr.mxu0 0.0
    %2080 = vmatpush1.msra.mxu0 0.0
    %2081 = vmatprep.subr.mxu0 0.0
    %2082 = vmatpush1.msra.mxu0 0.0
    %2083 = vmatprep.subr.mxu0 0.0
    %2084 = vmatpush1.msra.mxu0 0.0
    %2085 = vmatprep.subr.mxu0 0.0
    %2086 = vmatpush1.msra.mxu0 0.0
    %2087 = vmatprep.subr.mxu0 0.0
    %2088 = vmatpush1.msra.mxu0 0.0
    %2089 = vmatprep.subr.mxu0 0.0
    %2090 = vmatpush1.msra.mxu0 0.0
    %2091 = vmatprep.subr.mxu0 0.0
    %2092 = vmatpush1.msra.mxu0 0.0
    %2093 = vmatprep.subr.mxu0 0.0
    %2094 = vmatpush1.msra.mxu0 0.0
    %2095 = vmatprep.subr.mxu0 0.0
    %2096 = vmatpush1.msra.mxu0 0.0
    %2097 = vmatprep.subr.mxu0 0.0
    %2098 = vmatpush1.msra.mxu0 0.0
    %2099 = vmatprep.subr.mxu0 0.0
    %2100 = vmatpush1.msra.mxu0 0.0
    %2101 = vmatprep.subr.mxu0 0.0
    %2102 = vmatpush1.msra.mxu0 0.0
    %2103 = vmatprep.subr.mxu0 0.0
    %2104 = vmatpush1.msra.mxu0 0.0
    %2105 = vmatprep.subr.mxu0 0.0
    %2106 = vmatpush1.msra.mxu0 0.0
    %2107 = vmatprep.subr.mxu0 0.0
    %2108 = vmatpush1.msra.mxu0 0.0
    %2109 = vmatprep.subr.mxu0 0.0
    %2110 = vmatpush1.msra.mxu0 0.0
    %2111 = vmatprep.subr.mxu0 0.0
    %2112 = vmatpush1.msra.mxu0 0.0
    %2113 = vmatprep.subr.mxu0 0.0
    %2114 = vmatpush1.msra.mxu0 0.0
    %2115 = vmatprep.subr.mxu0 0.0
    %2116 = vmatpush1.msra.mxu0 0.0
    %2117 = vmatprep.subr.mxu0 0.0
    %2118 = vmatpush1.msra.mxu0 0.0
    %2119 = vmatprep.subr.mxu0 0.0
    %2120 = vmatpush1.msra.mxu0 0.0
    %2121 = vmatprep.subr.mxu0 0.0
    %2122 = vmatpush1.msra.mxu0 0.0
    %2123 = vmatprep.mubr.f32.mxu0 0.0
    %2124 = vmatmul.mubr.f32.gmra.mrb[0].mxu0 %v2048
    %v2125 = vpop.f32.mrb[0].mxu0
    %v2126 = vadd.f32 0.0, %v2125
    %v2127 = vpop.f32.mrb[0].mxu0
    %v2128 = vadd.f32 0.0, %v2127
    %2129 = vmatprep.mubr.f32.mxu0 0.0
    %2130 = vmatmul.mubr.f32.gmra.mrb[0].mxu0 %v2051
    %v2131 = vpop.f32.mrb[0].mxu0
    %v2132 = vadd.f32 0.0, %v2131
    %v2133 = vpop.f32.mrb[0].mxu0
    %v2134 = vadd.f32 0.0, %v2133
    %2135 = vmatprep.mubr.f32.mxu0 0.0
    %2136 = vmatmul.mubr.f32.gmra.mrb[0].mxu0 %v2054
    %v2137 = vpop.f32.mrb[0].mxu0
    %v2138 = vadd.f32 0.0, %v2137
    %v2139 = vpop.f32.mrb[0].mxu0
    %v2140 = vadd.f32 0.0, %v2139
    %2141 = vmatprep.mubr.f32.mxu0 0.0
    %2142 = vmatmul.mubr.f32.gmra.mrb[0].mxu0 %v2057
    %v2143 = vpop.f32.mrb[0].mxu0
    %v2144 = vadd.f32 0.0, %v2143
    %v2145 = vpop.f32.mrb[0].mxu0
    %v2146 = vadd.f32 0.0, %v2145
    %2147 = vdwg.mxu0
    %v2148 = vadd.f32 %v1878, %v2126
    %v2149 = vadd.f32 %v1880, %v2128
    %v2150 = vadd.f32 %v1884, %v2132
    %v2151 = vadd.f32 %v1886, %v2134
    %v2152 = vadd.f32 %v1890, %v2138
    %v2153 = vadd.f32 %v1892, %v2140
    %v2154 = vadd.f32 %v1896, %v2144
    %v2155 = vadd.f32 %v1898, %v2146
    %v2156 = vld [vmem:[%s9] sm:$0x3]
    %v2158 = vlaneseq
    %v2159 = vshrl.u32 %v2158, 7
    %v2160 = vsub.s32 0, %v2159
    %v2161 = vrot.slane %v2156, %v2160
    %v2162 = vlaneseq
    %v2163 = vshrl.u32 %v2162, 7
    %v2164 = vsub.s32 1, %v2163
    %v2165 = vrot.slane %v2156, %v2164
    %v2168 = vadd.f32 %v2148, %v2161
    %v2169 = vadd.f32 %v2149, %v2165
    %v2170 = vadd.f32 %v2150, %v2161
    %v2171 = vadd.f32 %v2151, %v2165
    %v2172 = vadd.f32 %v2152, %v2161
    %v2173 = vadd.f32 %v2153, %v2165
    %v2174 = vadd.f32 %v2154, %v2161
    %v2175 = vadd.f32 %v2155, %v2165
    %v2176 = vmax.f32 %v2168, 0.0
    %v2177 = vmax.f32 %v2169, 0.0
    %v2178 = vmax.f32 %v2170, 0.0
    %v2179 = vmax.f32 %v2171, 0.0
    %v2180 = vmax.f32 %v2172, 0.0
    %v2181 = vmax.f32 %v2173, 0.0
    %v2182 = vmax.f32 %v2174, 0.0
    %v2183 = vmax.f32 %v2175, 0.0
    %v2184 = vld [vmem:[%s11] sm:$0xff]
    %v2185 = vld [vmem:[%s11 + $0x8] sm:$0xff]
    %v2186 = vld [vmem:[%s11 + $0x10] sm:$0xff]
    %v2187 = vld [vmem:[%s11 + $0x18] sm:$0xff]
    %v2188 = vld [vmem:[%s11 + $0x20] sm:$0xff]
    %v2189 = vld [vmem:[%s11 + $0x28] sm:$0xff]
    %v2190 = vld [vmem:[%s11 + $0x30] sm:$0xff]
    %v2191 = vld [vmem:[%s11 + $0x38] sm:$0xff]
    %v2192 = vld [vmem:[%s11 + $0x40] sm:$0xff]
    %v2193 = vld [vmem:[%s11 + $0x48] sm:$0xff]
    %v2194 = vld [vmem:[%s11 + $0x50] sm:$0xff]
    %v2195 = vld [vmem:[%s11 + $0x58] sm:$0xff]
    %v2196 = vld [vmem:[%s11 + $0x60] sm:$0xff]
    %v2197 = vld [vmem:[%s11 + $0x68] sm:$0xff]
    %v2198 = vld [vmem:[%s11 + $0x70] sm:$0xff]
    %v2199 = vld [vmem:[%s11 + $0x78] sm:$0xff]
    %v2200 = vld [vmem:[%s11 + $0x80] sm:$0xff]
    %v2201 = vld [vmem:[%s11 + $0x88] sm:$0xff]
    %v2202 = vld [vmem:[%s11 + $0x90] sm:$0xff]
    %v2203 = vld [vmem:[%s11 + $0x98] sm:$0xff]
    %v2204 = vld [vmem:[%s11 + $0xa0] sm:$0xff]
    %v2205 = vld [vmem:[%s11 + $0xa8] sm:$0xff]
    %v2206 = vld [vmem:[%s11 + $0xb0] sm:$0xff]
    %v2207 = vld [vmem:[%s11 + $0xb8] sm:$0xff]
    %v2208 = vld [vmem:[%s11 + $0xc0] sm:$0xff]
    %v2209 = vld [vmem:[%s11 + $0xc8] sm:$0xff]
    %v2210 = vld [vmem:[%s11 + $0xd0] sm:$0xff]
    %v2211 = vld [vmem:[%s11 + $0xd8] sm:$0xff]
    %vm2212 = vcmask 785408
    %v2214 = vsel %vm2212, %v2177, 0
    %v2217 = vsel %vm2212, %v2179, 0
    %v2220 = vsel %vm2212, %v2181, 0
    %v2223 = vsel %vm2212, %v2183, 0
    %2225 = vmatprep.subr.mxu0 0.0
    %2226 = vmatpush1.msra.mxu0 %v2184
    %2227 = vmatprep.subr.mxu0 0.0
    %2228 = vmatpush1.msra.mxu0 %v2185
    %2229 = vmatprep.subr.mxu0 0.0
    %2230 = vmatpush1.msra.mxu0 %v2186
    %2231 = vmatprep.subr.mxu0 0.0
    %2232 = vmatpush1.msra.mxu0 %v2187
    %2233 = vmatprep.subr.mxu0 0.0
    %2234 = vmatpush1.msra.mxu0 %v2188
    %2235 = vmatprep.subr.mxu0 0.0
    %2236 = vmatpush1.msra.mxu0 %v2189
    %2237 = vmatprep.subr.mxu0 0.0
    %2238 = vmatpush1.msra.mxu0 %v2190
    %2239 = vmatprep.subr.mxu0 0.0
    %2240 = vmatpush1.msra.mxu0 %v2191
    %2241 = vmatprep.subr.mxu0 0.0
    %2242 = vmatpush1.msra.mxu0 %v2192
    %2243 = vmatprep.subr.mxu0 0.0
    %2244 = vmatpush1.msra.mxu0 %v2193
    %2245 = vmatprep.subr.mxu0 0.0
    %2246 = vmatpush1.msra.mxu0 %v2194
    %2247 = vmatprep.subr.mxu0 0.0
    %2248 = vmatpush1.msra.mxu0 %v2195
    %2249 = vmatprep.subr.mxu0 0.0
    %2250 = vmatpush1.msra.mxu0 %v2196
    %2251 = vmatprep.subr.mxu0 0.0
    %2252 = vmatpush1.msra.mxu0 %v2197
    %2253 = vmatprep.subr.mxu0 0.0
    %2254 = vmatpush1.msra.mxu0 %v2198
    %2255 = vmatprep.subr.mxu0 0.0
    %2256 = vmatpush1.msra.mxu0 %v2199
    %2257 = vmatprep.subr.mxu0 0.0
    %2258 = vmatpush1.msra.mxu0 %v2200
    %2259 = vmatprep.subr.mxu0 0.0
    %2260 = vmatpush1.msra.mxu0 %v2201
    %2261 = vmatprep.subr.mxu0 0.0
    %2262 = vmatpush1.msra.mxu0 %v2202
    %2263 = vmatprep.subr.mxu0 0.0
    %2264 = vmatpush1.msra.mxu0 %v2203
    %2265 = vmatprep.subr.mxu0 0.0
    %2266 = vmatpush1.msra.mxu0 %v2204
    %2267 = vmatprep.subr.mxu0 0.0
    %2268 = vmatpush1.msra.mxu0 %v2205
    %2269 = vmatprep.subr.mxu0 0.0
    %2270 = vmatpush1.msra.mxu0 %v2206
    %2271 = vmatprep.subr.mxu0 0.0
    %2272 = vmatpush1.msra.mxu0 %v2207
    %2273 = vmatprep.subr.mxu0 0.0
    %2274 = vmatpush1.msra.mxu0 %v2208
    %2275 = vmatprep.subr.mxu0 0.0
    %2276 = vmatpush1.msra.mxu0 %v2209
    %2277 = vmatprep.subr.mxu0 0.0
    %2278 = vmatpush1.msra.mxu0 %v2210
    %2279 = vmatprep.subr.mxu0 0.0
    %2280 = vmatpush1.msra.mxu0 %v2211
    %2281 = vmatprep.subr.mxu0 0.0
    %2282 = vmatpush1.msra.mxu0 0.0
    %2283 = vmatprep.subr.mxu0 0.0
    %2284 = vmatpush1.msra.mxu0 0.0
    %2285 = vmatprep.subr.mxu0 0.0
    %2286 = vmatpush1.msra.mxu0 0.0
    %2287 = vmatprep.subr.mxu0 0.0
    %2288 = vmatpush1.msra.mxu0 0.0
    %2289 = vmatprep.mubr.f32.mxu0 %v2214
    %2290 = vmatmul.mubr.f32.gmra.mrb[0].mxu0 %v2176
    %v2291 = vpop.f32.mrb[0].mxu0
    %v2292 = vadd.f32 0.0, %v2291
    %v2293 = vpop.f32.mrb[0].mxu0
    %2294 = vmatprep.mubr.f32.mxu0 %v2217
    %2295 = vmatmul.mubr.f32.gmra.mrb[0].mxu0 %v2178
    %v2296 = vpop.f32.mrb[0].mxu0
    %v2297 = vadd.f32 0.0, %v2296
    %v2298 = vpop.f32.mrb[0].mxu0
    %2299 = vmatprep.mubr.f32.mxu0 %v2220
    %2300 = vmatmul.mubr.f32.gmra.mrb[0].mxu0 %v2180
    %v2301 = vpop.f32.mrb[0].mxu0
    %v2302 = vadd.f32 0.0, %v2301
    %v2303 = vpop.f32.mrb[0].mxu0
    %2304 = vmatprep.mubr.f32.mxu0 %v2223
    %2305 = vmatmul.mubr.f32.gmra.mrb[0].mxu0 %v2182
    %v2306 = vpop.f32.mrb[0].mxu0
    %v2307 = vadd.f32 0.0, %v2306
    %v2308 = vpop.f32.mrb[0].mxu0
    %2309 = vdwg.mxu0
    %v2310 = vld [vmem:[%s10] sm:$0xff]
    %v2311 = vld [vmem:[%s10 + $0x8] sm:$0xff]
    %v2312 = vld [vmem:[%s10 + $0x10] sm:$0xff]
    %v2313 = vld [vmem:[%s10 + $0x18] sm:$0xff]
    %v2314 = vld [vmem:[%s10 + $0x20] sm:$0xff]
    %v2315 = vld [vmem:[%s10 + $0x28] sm:$0xff]
    %v2316 = vld [vmem:[%s10 + $0x30] sm:$0xff]
    %s2317 = scalar_lea.vmem %s11, 224
    %v2318 = vld [vmem:[%s2317] sm:$0xff]
    %v2319 = vld [vmem:[%s2317 + $0x8] sm:$0xff]
    %v2320 = vld [vmem:[%s2317 + $0x10] sm:$0xff]
    %v2321 = vld [vmem:[%s2317 + $0x18] sm:$0xff]
    %v2322 = vld [vmem:[%s2317 + $0x20] sm:$0xff]
    %v2323 = vld [vmem:[%s2317 + $0x28] sm:$0xff]
    %v2324 = vld [vmem:[%s2317 + $0x30] sm:$0xff]
    %v2325 = vld [vmem:[%s2317 + $0x38] sm:$0xff]
    %v2326 = vld [vmem:[%s2317 + $0x40] sm:$0xff]
    %v2327 = vld [vmem:[%s2317 + $0x48] sm:$0xff]
    %v2328 = vld [vmem:[%s2317 + $0x50] sm:$0xff]
    %v2329 = vld [vmem:[%s2317 + $0x58] sm:$0xff]
    %v2330 = vld [vmem:[%s2317 + $0x60] sm:$0xff]
    %v2331 = vld [vmem:[%s2317 + $0x68] sm:$0xff]
    %v2332 = vld [vmem:[%s2317 + $0x70] sm:$0xff]
    %v2333 = vld [vmem:[%s2317 + $0x78] sm:$0xff]
    %v2334 = vld [vmem:[%s2317 + $0x80] sm:$0xff]
    %v2335 = vld [vmem:[%s2317 + $0x88] sm:$0xff]
    %v2336 = vld [vmem:[%s2317 + $0x90] sm:$0xff]
    %v2337 = vld [vmem:[%s2317 + $0x98] sm:$0xff]
    %v2338 = vld [vmem:[%s2317 + $0xa0] sm:$0xff]
    %v2339 = vld [vmem:[%s2317 + $0xa8] sm:$0xff]
    %v2340 = vld [vmem:[%s2317 + $0xb0] sm:$0xff]
    %v2341 = vld [vmem:[%s2317 + $0xb8] sm:$0xff]
    %v2342 = vld [vmem:[%s2317 + $0xc0] sm:$0xff]
    %v2343 = vld [vmem:[%s2317 + $0xc8] sm:$0xff]
    %v2344 = vld [vmem:[%s2317 + $0xd0] sm:$0xff]
    %v2345 = vld [vmem:[%s2317 + $0xd8] sm:$0xff]
    %2346 = vmatprep.subr.mxu0 0.0
    %2347 = vmatpush1.msra.mxu0 %v2318
    %2348 = vmatprep.subr.mxu0 0.0
    %2349 = vmatpush1.msra.mxu0 %v2319
    %2350 = vmatprep.subr.mxu0 0.0
    %2351 = vmatpush1.msra.mxu0 %v2320
    %2352 = vmatprep.subr.mxu0 0.0
    %2353 = vmatpush1.msra.mxu0 %v2321
    %2354 = vmatprep.subr.mxu0 0.0
    %2355 = vmatpush1.msra.mxu0 %v2322
    %2356 = vmatprep.subr.mxu0 0.0
    %2357 = vmatpush1.msra.mxu0 %v2323
    %2358 = vmatprep.subr.mxu0 0.0
    %2359 = vmatpush1.msra.mxu0 %v2324
    %2360 = vmatprep.subr.mxu0 0.0
    %2361 = vmatpush1.msra.mxu0 %v2325
    %2362 = vmatprep.subr.mxu0 0.0
    %2363 = vmatpush1.msra.mxu0 %v2326
    %2364 = vmatprep.subr.mxu0 0.0
    %2365 = vmatpush1.msra.mxu0 %v2327
    %2366 = vmatprep.subr.mxu0 0.0
    %2367 = vmatpush1.msra.mxu0 %v2328
    %2368 = vmatprep.subr.mxu0 0.0
    %2369 = vmatpush1.msra.mxu0 %v2329
    %2370 = vmatprep.subr.mxu0 0.0
    %2371 = vmatpush1.msra.mxu0 %v2330
    %2372 = vmatprep.subr.mxu0 0.0
    %2373 = vmatpush1.msra.mxu0 %v2331
    %2374 = vmatprep.subr.mxu0 0.0
    %2375 = vmatpush1.msra.mxu0 %v2332
    %2376 = vmatprep.subr.mxu0 0.0
    %2377 = vmatpush1.msra.mxu0 %v2333
    %2378 = vmatprep.subr.mxu0 0.0
    %2379 = vmatpush1.msra.mxu0 %v2334
    %2380 = vmatprep.subr.mxu0 0.0
    %2381 = vmatpush1.msra.mxu0 %v2335
    %2382 = vmatprep.subr.mxu0 0.0
    %2383 = vmatpush1.msra.mxu0 %v2336
    %2384 = vmatprep.subr.mxu0 0.0
    %2385 = vmatpush1.msra.mxu0 %v2337
    %2386 = vmatprep.subr.mxu0 0.0
    %2387 = vmatpush1.msra.mxu0 %v2338
    %2388 = vmatprep.subr.mxu0 0.0
    %2389 = vmatpush1.msra.mxu0 %v2339
    %2390 = vmatprep.subr.mxu0 0.0
    %2391 = vmatpush1.msra.mxu0 %v2340
    %2392 = vmatprep.subr.mxu0 0.0
    %2393 = vmatpush1.msra.mxu0 %v2341
    %2394 = vmatprep.subr.mxu0 0.0
    %2395 = vmatpush1.msra.mxu0 %v2342
    %2396 = vmatprep.subr.mxu0 0.0
    %2397 = vmatpush1.msra.mxu0 %v2343
    %2398 = vmatprep.subr.mxu0 0.0
    %2399 = vmatpush1.msra.mxu0 %v2344
    %2400 = vmatprep.subr.mxu0 0.0
    %2401 = vmatpush1.msra.mxu0 %v2345
    %2402 = vmatprep.subr.mxu0 0.0
    %2403 = vmatpush1.msra.mxu0 0.0
    %2404 = vmatprep.subr.mxu0 0.0
    %2405 = vmatpush1.msra.mxu0 0.0
    %2406 = vmatprep.subr.mxu0 0.0
    %2407 = vmatpush1.msra.mxu0 0.0
    %2408 = vmatprep.subr.mxu0 0.0
    %2409 = vmatpush1.msra.mxu0 0.0
    %2410 = vmatprep.mubr.f32.mxu0 %v2214
    %2411 = vmatmul.mubr.f32.gmra.mrb[0].mxu0 %v2176
    %v2412 = vpop.f32.mrb[0].mxu0
    %v2413 = vadd.f32 0.0, %v2412
    %v2414 = vpop.f32.mrb[0].mxu0
    %2415 = vmatprep.mubr.f32.mxu0 %v2217
    %2416 = vmatmul.mubr.f32.gmra.mrb[0].mxu0 %v2178
    %v2417 = vpop.f32.mrb[0].mxu0
    %v2418 = vadd.f32 0.0, %v2417
    %v2419 = vpop.f32.mrb[0].mxu0
    %2420 = vmatprep.mubr.f32.mxu0 %v2220
    %2421 = vmatmul.mubr.f32.gmra.mrb[0].mxu0 %v2180
    %v2422 = vpop.f32.mrb[0].mxu0
    %v2423 = vadd.f32 0.0, %v2422
    %v2424 = vpop.f32.mrb[0].mxu0
    %2425 = vmatprep.mubr.f32.mxu0 %v2223
    %2426 = vmatmul.mubr.f32.gmra.mrb[0].mxu0 %v2182
    %v2427 = vpop.f32.mrb[0].mxu0
    %v2428 = vadd.f32 0.0, %v2427
    %v2429 = vpop.f32.mrb[0].mxu0
    %2430 = vdwg.mxu0
    %s2431 = scalar_lea.vmem %s10, 56
    %v2432 = vld [vmem:[%s2431] sm:$0xff]
    %v2433 = vld [vmem:[%s2431 + $0x8] sm:$0xff]
    %v2434 = vld [vmem:[%s2431 + $0x10] sm:$0xff]
    %v2435 = vld [vmem:[%s2431 + $0x18] sm:$0xff]
    %v2436 = vld [vmem:[%s2431 + $0x20] sm:$0xff]
    %v2437 = vld [vmem:[%s2431 + $0x28] sm:$0xff]
    %v2438 = vld [vmem:[%s2431 + $0x30] sm:$0xff]
    %vm2439 = vcmask 228352
    %v2441 = vsel %vm2439, %v2432, 0
    %v2444 = vsel %vm2439, %v2433, 0
    %v2447 = vsel %vm2439, %v2434, 0
    %v2450 = vsel %vm2439, %v2435, 0
    %v2453 = vsel %vm2439, %v2436, 0
    %v2456 = vsel %vm2439, %v2437, 0
    %v2459 = vsel %vm2439, %v2438, 0
    %vm2461 = vcmask 1043456
    %v2463 = vsel %vm2461, %v2428, 0
    %2465 = vmatprep.subr.mxu0 0.0
    %2466 = vmatpush1.msra.mxu0 %v2413
    %2467 = vmatprep.subr.mxu0 0.0
    %2468 = vmatpush1.msra.mxu0 %v2418
    %2469 = vmatprep.subr.mxu0 0.0
    %2470 = vmatpush1.msra.mxu0 %v2423
    %2471 = vmatprep.subr.mxu0 0.0
    %2472 = vmatpush1.msra.mxu0 %v2463
    %2473 = vmatprep.subr.mxu0 0.0
    %2474 = vmatpush1.msra.mxu0 0.0
    %2475 = vmatprep.subr.mxu0 0.0
    %2476 = vmatpush1.msra.mxu0 0.0
    %2477 = vmatprep.subr.mxu0 0.0
    %2478 = vmatpush1.msra.mxu0 0.0
    %2479 = vmatprep.subr.mxu0 0.0
    %2480 = vmatpush1.msra.mxu0 0.0
    %2481 = vmatprep.subr.mxu0 0.0
    %2482 = vmatpush1.msra.mxu0 0.0
    %2483 = vmatprep.subr.mxu0 0.0
    %2484 = vmatpush1.msra.mxu0 0.0
    %2485 = vmatprep.subr.mxu0 0.0
    %2486 = vmatpush1.msra.mxu0 0.0
    %2487 = vmatprep.subr.mxu0 0.0
    %2488 = vmatpush1.msra.mxu0 0.0
    %2489 = vmatprep.subr.mxu0 0.0
    %2490 = vmatpush1.msra.mxu0 0.0
    %2491 = vmatprep.subr.mxu0 0.0
    %2492 = vmatpush1.msra.mxu0 0.0
    %2493 = vmatprep.subr.mxu0 0.0
    %2494 = vmatpush1.msra.mxu0 0.0
    %2495 = vmatprep.subr.mxu0 0.0
    %2496 = vmatpush1.msra.mxu0 0.0
    %2497 = vmatprep.subr.mxu0 0.0
    %2498 = vmatpush1.msra.mxu0 0.0
    %2499 = vmatprep.subr.mxu0 0.0
    %2500 = vmatpush1.msra.mxu0 0.0
    %2501 = vmatprep.subr.mxu0 0.0
    %2502 = vmatpush1.msra.mxu0 0.0
    %2503 = vmatprep.subr.mxu0 0.0
    %2504 = vmatpush1.msra.mxu0 0.0
    %2505 = vmatprep.subr.mxu0 0.0
    %2506 = vmatpush1.msra.mxu0 0.0
    %2507 = vmatprep.subr.mxu0 0.0
    %2508 = vmatpush1.msra.mxu0 0.0
    %2509 = vmatprep.subr.mxu0 0.0
    %2510 = vmatpush1.msra.mxu0 0.0
    %2511 = vmatprep.subr.mxu0 0.0
    %2512 = vmatpush1.msra.mxu0 0.0
    %2513 = vmatprep.subr.mxu0 0.0
    %2514 = vmatpush1.msra.mxu0 0.0
    %2515 = vmatprep.subr.mxu0 0.0
    %2516 = vmatpush1.msra.mxu0 0.0
    %2517 = vmatprep.subr.mxu0 0.0
    %2518 = vmatpush1.msra.mxu0 0.0
    %2519 = vmatprep.subr.mxu0 0.0
    %2520 = vmatpush1.msra.mxu0 0.0
    %2521 = vmatprep.subr.mxu0 0.0
    %2522 = vmatpush1.msra.mxu0 0.0
    %2523 = vmatprep.subr.mxu0 0.0
    %2524 = vmatpush1.msra.mxu0 0.0
    %2525 = vmatprep.subr.mxu0 0.0
    %2526 = vmatpush1.msra.mxu0 0.0
    %2527 = vmatprep.subr.mxu0 0.0
    %2528 = vmatpush1.msra.mxu0 0.0
    %2529 = vmatprep.mubr.f32.mxu0 0.0
    %2530 = vmatmul.mubr.f32.gmra.mrb[0].mxu0 %v2441
    %v2531 = vpop.f32.mrb[0].mxu0
    %v2532 = vadd.f32 0.0, %v2531
    %v2533 = vpop.f32.mrb[0].mxu0
    %2534 = vmatprep.mubr.f32.mxu0 0.0
    %2535 = vmatmul.mubr.f32.gmra.mrb[0].mxu0 %v2444
    %v2536 = vpop.f32.mrb[0].mxu0
    %v2537 = vadd.f32 0.0, %v2536
    %v2538 = vpop.f32.mrb[0].mxu0
    %2539 = vmatprep.mubr.f32.mxu0 0.0
    %2540 = vmatmul.mubr.f32.gmra.mrb[0].mxu0 %v2447
    %v2541 = vpop.f32.mrb[0].mxu0
    %v2542 = vadd.f32 0.0, %v2541
    %v2543 = vpop.f32.mrb[0].mxu0
    %2544 = vmatprep.mubr.f32.mxu0 0.0
    %2545 = vmatmul.mubr.f32.gmra.mrb[0].mxu0 %v2450
    %v2546 = vpop.f32.mrb[0].mxu0
    %v2547 = vadd.f32 0.0, %v2546
    %v2548 = vpop.f32.mrb[0].mxu0
    %2549 = vmatprep.mubr.f32.mxu0 0.0
    %2550 = vmatmul.mubr.f32.gmra.mrb[0].mxu0 %v2453
    %v2551 = vpop.f32.mrb[0].mxu0
    %v2552 = vadd.f32 0.0, %v2551
    %v2553 = vpop.f32.mrb[0].mxu0
    %2554 = vmatprep.mubr.f32.mxu0 0.0
    %2555 = vmatmul.mubr.f32.gmra.mrb[0].mxu0 %v2456
    %v2556 = vpop.f32.mrb[0].mxu0
    %v2557 = vadd.f32 0.0, %v2556
    %v2558 = vpop.f32.mrb[0].mxu0
    %2559 = vmatprep.mubr.f32.mxu0 0.0
    %2560 = vmatmul.mubr.f32.gmra.mrb[0].mxu0 %v2459
    %v2561 = vpop.f32.mrb[0].mxu0
    %v2562 = vadd.f32 0.0, %v2561
    %v2563 = vpop.f32.mrb[0].mxu0
    %2564 = vdwg.mxu0
    %v2566 = vsel %vm2439, %v2310, 0
    %v2569 = vsel %vm2439, %v2311, 0
    %v2572 = vsel %vm2439, %v2312, 0
    %v2575 = vsel %vm2439, %v2313, 0
    %v2578 = vsel %vm2439, %v2314, 0
    %v2581 = vsel %vm2439, %v2315, 0
    %v2584 = vsel %vm2439, %v2316, 0
    %v2587 = vsel %vm2461, %v2307, 0
    %2589 = vmatprep.subr.mxu0 0.0
    %2590 = vmatpush1.msra.mxu0 %v2292
    %2591 = vmatprep.subr.mxu0 0.0
    %2592 = vmatpush1.msra.mxu0 %v2297
    %2593 = vmatprep.subr.mxu0 0.0
    %2594 = vmatpush1.msra.mxu0 %v2302
    %2595 = vmatprep.subr.mxu0 0.0
    %2596 = vmatpush1.msra.mxu0 %v2587
    %2597 = vmatprep.subr.mxu0 0.0
    %2598 = vmatpush1.msra.mxu0 0.0
    %2599 = vmatprep.subr.mxu0 0.0
    %2600 = vmatpush1.msra.mxu0 0.0
    %2601 = vmatprep.subr.mxu0 0.0
    %2602 = vmatpush1.msra.mxu0 0.0
    %2603 = vmatprep.subr.mxu0 0.0
    %2604 = vmatpush1.msra.mxu0 0.0
    %2605 = vmatprep.subr.mxu0 0.0
    %2606 = vmatpush1.msra.mxu0 0.0
    %2607 = vmatprep.subr.mxu0 0.0
    %2608 = vmatpush1.msra.mxu0 0.0
    %2609 = vmatprep.subr.mxu0 0.0
    %2610 = vmatpush1.msra.mxu0 0.0
    %2611 = vmatprep.subr.mxu0 0.0
    %2612 = vmatpush1.msra.mxu0 0.0
    %2613 = vmatprep.subr.mxu0 0.0
    %2614 = vmatpush1.msra.mxu0 0.0
    %2615 = vmatprep.subr.mxu0 0.0
    %2616 = vmatpush1.msra.mxu0 0.0
    %2617 = vmatprep.subr.mxu0 0.0
    %2618 = vmatpush1.msra.mxu0 0.0
    %2619 = vmatprep.subr.mxu0 0.0
    %2620 = vmatpush1.msra.mxu0 0.0
    %2621 = vmatprep.subr.mxu0 0.0
    %2622 = vmatpush1.msra.mxu0 0.0
    %2623 = vmatprep.subr.mxu0 0.0
    %2624 = vmatpush1.msra.mxu0 0.0
    %2625 = vmatprep.subr.mxu0 0.0
    %2626 = vmatpush1.msra.mxu0 0.0
    %2627 = vmatprep.subr.mxu0 0.0
    %2628 = vmatpush1.msra.mxu0 0.0
    %2629 = vmatprep.subr.mxu0 0.0
    %2630 = vmatpush1.msra.mxu0 0.0
    %2631 = vmatprep.subr.mxu0 0.0
    %2632 = vmatpush1.msra.mxu0 0.0
    %2633 = vmatprep.subr.mxu0 0.0
    %2634 = vmatpush1.msra.mxu0 0.0
    %2635 = vmatprep.subr.mxu0 0.0
    %2636 = vmatpush1.msra.mxu0 0.0
    %2637 = vmatprep.subr.mxu0 0.0
    %2638 = vmatpush1.msra.mxu0 0.0
    %2639 = vmatprep.subr.mxu0 0.0
    %2640 = vmatpush1.msra.mxu0 0.0
    %2641 = vmatprep.subr.mxu0 0.0
    %2642 = vmatpush1.msra.mxu0 0.0
    %2643 = vmatprep.subr.mxu0 0.0
    %2644 = vmatpush1.msra.mxu0 0.0
    %2645 = vmatprep.subr.mxu0 0.0
    %2646 = vmatpush1.msra.mxu0 0.0
    %2647 = vmatprep.subr.mxu0 0.0
    %2648 = vmatpush1.msra.mxu0 0.0
    %2649 = vmatprep.subr.mxu0 0.0
    %2650 = vmatpush1.msra.mxu0 0.0
    %2651 = vmatprep.subr.mxu0 0.0
    %2652 = vmatpush1.msra.mxu0 0.0
    %2653 = vmatprep.mubr.f32.mxu0 0.0
    %2654 = vmatmul.mubr.f32.gmra.mrb[0].mxu0 %v2566
    %v2655 = vpop.f32.mrb[0].mxu0
    %v2656 = vadd.f32 %v2532, %v2655
    %v2657 = vpop.f32.mrb[0].mxu0
    %2658 = vmatprep.mubr.f32.mxu0 0.0
    %2659 = vmatmul.mubr.f32.gmra.mrb[0].mxu0 %v2569
    %v2660 = vpop.f32.mrb[0].mxu0
    %v2661 = vadd.f32 %v2537, %v2660
    %v2662 = vpop.f32.mrb[0].mxu0
    %2663 = vmatprep.mubr.f32.mxu0 0.0
    %2664 = vmatmul.mubr.f32.gmra.mrb[0].mxu0 %v2572
    %v2665 = vpop.f32.mrb[0].mxu0
    %v2666 = vadd.f32 %v2542, %v2665
    %v2667 = vpop.f32.mrb[0].mxu0
    %2668 = vmatprep.mubr.f32.mxu0 0.0
    %2669 = vmatmul.mubr.f32.gmra.mrb[0].mxu0 %v2575
    %v2670 = vpop.f32.mrb[0].mxu0
    %v2671 = vadd.f32 %v2547, %v2670
    %v2672 = vpop.f32.mrb[0].mxu0
    %2673 = vmatprep.mubr.f32.mxu0 0.0
    %2674 = vmatmul.mubr.f32.gmra.mrb[0].mxu0 %v2578
    %v2675 = vpop.f32.mrb[0].mxu0
    %v2676 = vadd.f32 %v2552, %v2675
    %v2677 = vpop.f32.mrb[0].mxu0
    %2678 = vmatprep.mubr.f32.mxu0 0.0
    %2679 = vmatmul.mubr.f32.gmra.mrb[0].mxu0 %v2581
    %v2680 = vpop.f32.mrb[0].mxu0
    %v2681 = vadd.f32 %v2557, %v2680
    %v2682 = vpop.f32.mrb[0].mxu0
    %2683 = vmatprep.mubr.f32.mxu0 0.0
    %2684 = vmatmul.mubr.f32.gmra.mrb[0].mxu0 %v2584
    %v2685 = vpop.f32.mrb[0].mxu0
    %v2686 = vadd.f32 %v2562, %v2685
    %v2687 = vpop.f32.mrb[0].mxu0
    %2688 = vdwg.mxu0
    %s2689 = scalar_lea.vmem %s11, 448
    %v2690 = vld [vmem:[%s2689] sm:$0xff]
    %v2691 = vld [vmem:[%s2689 + $0x8] sm:$0xff]
    %v2692 = vld [vmem:[%s2689 + $0x10] sm:$0xff]
    %v2693 = vld [vmem:[%s2689 + $0x18] sm:$0xff]
    %v2694 = vld [vmem:[%s2689 + $0x20] sm:$0xff]
    %v2695 = vld [vmem:[%s2689 + $0x28] sm:$0xff]
    %v2696 = vld [vmem:[%s2689 + $0x30] sm:$0xff]
    %v2697 = vld [vmem:[%s2689 + $0x38] sm:$0xff]
    %v2698 = vld [vmem:[%s2689 + $0x40] sm:$0xff]
    %v2699 = vld [vmem:[%s2689 + $0x48] sm:$0xff]
    %v2700 = vld [vmem:[%s2689 + $0x50] sm:$0xff]
    %v2701 = vld [vmem:[%s2689 + $0x58] sm:$0xff]
    %v2702 = vld [vmem:[%s2689 + $0x60] sm:$0xff]
    %v2703 = vld [vmem:[%s2689 + $0x68] sm:$0xff]
    %v2704 = vld [vmem:[%s2689 + $0x70] sm:$0xff]
    %v2705 = vld [vmem:[%s2689 + $0x78] sm:$0xff]
    %v2706 = vld [vmem:[%s2689 + $0x80] sm:$0xff]
    %v2707 = vld [vmem:[%s2689 + $0x88] sm:$0xff]
    %v2708 = vld [vmem:[%s2689 + $0x90] sm:$0xff]
    %v2709 = vld [vmem:[%s2689 + $0x98] sm:$0xff]
    %v2710 = vld [vmem:[%s2689 + $0xa0] sm:$0xff]
    %v2711 = vld [vmem:[%s2689 + $0xa8] sm:$0xff]
    %v2712 = vld [vmem:[%s2689 + $0xb0] sm:$0xff]
    %v2713 = vld [vmem:[%s2689 + $0xb8] sm:$0xff]
    %v2714 = vld [vmem:[%s2689 + $0xc0] sm:$0xff]
    %v2715 = vld [vmem:[%s2689 + $0xc8] sm:$0xff]
    %v2716 = vld [vmem:[%s2689 + $0xd0] sm:$0xff]
    %v2717 = vld [vmem:[%s2689 + $0xd8] sm:$0xff]
    %2718 = vmatprep.subr.mxu0 0.0
    %2719 = vmatpush1.msra.mxu0 %v2690
    %2720 = vmatprep.subr.mxu0 0.0
    %2721 = vmatpush1.msra.mxu0 %v2691
    %2722 = vmatprep.subr.mxu0 0.0
    %2723 = vmatpush1.msra.mxu0 %v2692
    %2724 = vmatprep.subr.mxu0 0.0
    %2725 = vmatpush1.msra.mxu0 %v2693
    %2726 = vmatprep.subr.mxu0 0.0
    %2727 = vmatpush1.msra.mxu0 %v2694
    %2728 = vmatprep.subr.mxu0 0.0
    %2729 = vmatpush1.msra.mxu0 %v2695
    %2730 = vmatprep.subr.mxu0 0.0
    %2731 = vmatpush1.msra.mxu0 %v2696
    %2732 = vmatprep.subr.mxu0 0.0
    %2733 = vmatpush1.msra.mxu0 %v2697
    %2734 = vmatprep.subr.mxu0 0.0
    %2735 = vmatpush1.msra.mxu0 %v2698
    %2736 = vmatprep.subr.mxu0 0.0
    %2737 = vmatpush1.msra.mxu0 %v2699
    %2738 = vmatprep.subr.mxu0 0.0
    %2739 = vmatpush1.msra.mxu0 %v2700
    %2740 = vmatprep.subr.mxu0 0.0
    %2741 = vmatpush1.msra.mxu0 %v2701
    %2742 = vmatprep.subr.mxu0 0.0
    %2743 = vmatpush1.msra.mxu0 %v2702
    %2744 = vmatprep.subr.mxu0 0.0
    %2745 = vmatpush1.msra.mxu0 %v2703
    %2746 = vmatprep.subr.mxu0 0.0
    %2747 = vmatpush1.msra.mxu0 %v2704
    %2748 = vmatprep.subr.mxu0 0.0
    %2749 = vmatpush1.msra.mxu0 %v2705
    %2750 = vmatprep.subr.mxu0 0.0
    %2751 = vmatpush1.msra.mxu0 %v2706
    %2752 = vmatprep.subr.mxu0 0.0
    %2753 = vmatpush1.msra.mxu0 %v2707
    %2754 = vmatprep.subr.mxu0 0.0
    %2755 = vmatpush1.msra.mxu0 %v2708
    %2756 = vmatprep.subr.mxu0 0.0
    %2757 = vmatpush1.msra.mxu0 %v2709
    %2758 = vmatprep.subr.mxu0 0.0
    %2759 = vmatpush1.msra.mxu0 %v2710
    %2760 = vmatprep.subr.mxu0 0.0
    %2761 = vmatpush1.msra.mxu0 %v2711
    %2762 = vmatprep.subr.mxu0 0.0
    %2763 = vmatpush1.msra.mxu0 %v2712
    %2764 = vmatprep.subr.mxu0 0.0
    %2765 = vmatpush1.msra.mxu0 %v2713
    %2766 = vmatprep.subr.mxu0 0.0
    %2767 = vmatpush1.msra.mxu0 %v2714
    %2768 = vmatprep.subr.mxu0 0.0
    %2769 = vmatpush1.msra.mxu0 %v2715
    %2770 = vmatprep.subr.mxu0 0.0
    %2771 = vmatpush1.msra.mxu0 %v2716
    %2772 = vmatprep.subr.mxu0 0.0
    %2773 = vmatpush1.msra.mxu0 %v2717
    %2774 = vmatprep.subr.mxu0 0.0
    %2775 = vmatpush1.msra.mxu0 0.0
    %2776 = vmatprep.subr.mxu0 0.0
    %2777 = vmatpush1.msra.mxu0 0.0
    %2778 = vmatprep.subr.mxu0 0.0
    %2779 = vmatpush1.msra.mxu0 0.0
    %2780 = vmatprep.subr.mxu0 0.0
    %2781 = vmatpush1.msra.mxu0 0.0
    %2782 = vmatprep.mubr.f32.mxu0 %v2214
    %2783 = vmatmul.mubr.f32.gmra.mrb[0].mxu0 %v2176
    %v2784 = vpop.f32.mrb[0].mxu0
    %v2785 = vadd.f32 0.0, %v2784
    %v2786 = vpop.f32.mrb[0].mxu0
    %2787 = vmatprep.mubr.f32.mxu0 %v2217
    %2788 = vmatmul.mubr.f32.gmra.mrb[0].mxu0 %v2178
    %v2789 = vpop.f32.mrb[0].mxu0
    %v2790 = vadd.f32 0.0, %v2789
    %v2791 = vpop.f32.mrb[0].mxu0
    %2792 = vmatprep.mubr.f32.mxu0 %v2220
    %2793 = vmatmul.mubr.f32.gmra.mrb[0].mxu0 %v2180
    %v2794 = vpop.f32.mrb[0].mxu0
    %v2795 = vadd.f32 0.0, %v2794
    %v2796 = vpop.f32.mrb[0].mxu0
    %2797 = vmatprep.mubr.f32.mxu0 %v2223
    %2798 = vmatmul.mubr.f32.gmra.mrb[0].mxu0 %v2182
    %v2799 = vpop.f32.mrb[0].mxu0
    %v2800 = vadd.f32 0.0, %v2799
    %v2801 = vpop.f32.mrb[0].mxu0
    %2802 = vdwg.mxu0
    %s2803 = scalar_lea.vmem %s10, 112
    %v2804 = vld [vmem:[%s2803] sm:$0xff]
    %v2805 = vld [vmem:[%s2803 + $0x8] sm:$0xff]
    %v2806 = vld [vmem:[%s2803 + $0x10] sm:$0xff]
    %v2807 = vld [vmem:[%s2803 + $0x18] sm:$0xff]
    %v2808 = vld [vmem:[%s2803 + $0x20] sm:$0xff]
    %v2809 = vld [vmem:[%s2803 + $0x28] sm:$0xff]
    %v2810 = vld [vmem:[%s2803 + $0x30] sm:$0xff]
    %v2812 = vsel %vm2439, %v2804, 0
    %v2815 = vsel %vm2439, %v2805, 0
    %v2818 = vsel %vm2439, %v2806, 0
    %v2821 = vsel %vm2439, %v2807, 0
    %v2824 = vsel %vm2439, %v2808, 0
    %v2827 = vsel %vm2439, %v2809, 0
    %v2830 = vsel %vm2439, %v2810, 0
    %v2833 = vsel %vm2461, %v2800, 0
    %2835 = vmatprep.subr.mxu0 0.0
    %2836 = vmatpush1.msra.mxu0 %v2785
    %2837 = vmatprep.subr.mxu0 0.0
    %2838 = vmatpush1.msra.mxu0 %v2790
    %2839 = vmatprep.subr.mxu0 0.0
    %2840 = vmatpush1.msra.mxu0 %v2795
    %2841 = vmatprep.subr.mxu0 0.0
    %2842 = vmatpush1.msra.mxu0 %v2833
    %2843 = vmatprep.subr.mxu0 0.0
    %2844 = vmatpush1.msra.mxu0 0.0
    %2845 = vmatprep.subr.mxu0 0.0
    %2846 = vmatpush1.msra.mxu0 0.0
    %2847 = vmatprep.subr.mxu0 0.0
    %2848 = vmatpush1.msra.mxu0 0.0
    %2849 = vmatprep.subr.mxu0 0.0
    %2850 = vmatpush1.msra.mxu0 0.0
    %2851 = vmatprep.subr.mxu0 0.0
    %2852 = vmatpush1.msra.mxu0 0.0
    %2853 = vmatprep.subr.mxu0 0.0
    %2854 = vmatpush1.msra.mxu0 0.0
    %2855 = vmatprep.subr.mxu0 0.0
    %2856 = vmatpush1.msra.mxu0 0.0
    %2857 = vmatprep.subr.mxu0 0.0
    %2858 = vmatpush1.msra.mxu0 0.0
    %2859 = vmatprep.subr.mxu0 0.0
    %2860 = vmatpush1.msra.mxu0 0.0
    %2861 = vmatprep.subr.mxu0 0.0
    %2862 = vmatpush1.msra.mxu0 0.0
    %2863 = vmatprep.subr.mxu0 0.0
    %2864 = vmatpush1.msra.mxu0 0.0
    %2865 = vmatprep.subr.mxu0 0.0
    %2866 = vmatpush1.msra.mxu0 0.0
    %2867 = vmatprep.subr.mxu0 0.0
    %2868 = vmatpush1.msra.mxu0 0.0
    %2869 = vmatprep.subr.mxu0 0.0
    %2870 = vmatpush1.msra.mxu0 0.0
    %2871 = vmatprep.subr.mxu0 0.0
    %2872 = vmatpush1.msra.mxu0 0.0
    %2873 = vmatprep.subr.mxu0 0.0
    %2874 = vmatpush1.msra.mxu0 0.0
    %2875 = vmatprep.subr.mxu0 0.0
    %2876 = vmatpush1.msra.mxu0 0.0
    %2877 = vmatprep.subr.mxu0 0.0
    %2878 = vmatpush1.msra.mxu0 0.0
    %2879 = vmatprep.subr.mxu0 0.0
    %2880 = vmatpush1.msra.mxu0 0.0
    %2881 = vmatprep.subr.mxu0 0.0
    %2882 = vmatpush1.msra.mxu0 0.0
    %2883 = vmatprep.subr.mxu0 0.0
    %2884 = vmatpush1.msra.mxu0 0.0
    %2885 = vmatprep.subr.mxu0 0.0
    %2886 = vmatpush1.msra.mxu0 0.0
    %2887 = vmatprep.subr.mxu0 0.0
    %2888 = vmatpush1.msra.mxu0 0.0
    %2889 = vmatprep.subr.mxu0 0.0
    %2890 = vmatpush1.msra.mxu0 0.0
    %2891 = vmatprep.subr.mxu0 0.0
    %2892 = vmatpush1.msra.mxu0 0.0
    %2893 = vmatprep.subr.mxu0 0.0
    %2894 = vmatpush1.msra.mxu0 0.0
    %2895 = vmatprep.subr.mxu0 0.0
    %2896 = vmatpush1.msra.mxu0 0.0
    %2897 = vmatprep.subr.mxu0 0.0
    %2898 = vmatpush1.msra.mxu0 0.0
    %2899 = vmatprep.mubr.f32.mxu0 0.0
    %2900 = vmatmul.mubr.f32.gmra.mrb[0].mxu0 %v2812
    %v2901 = vpop.f32.mrb[0].mxu0
    %v2902 = vadd.f32 0.0, %v2901
    %v2903 = vpop.f32.mrb[0].mxu0
    %2904 = vmatprep.mubr.f32.mxu0 0.0
    %2905 = vmatmul.mubr.f32.gmra.mrb[0].mxu0 %v2815
    %v2906 = vpop.f32.mrb[0].mxu0
    %v2907 = vadd.f32 0.0, %v2906
    %v2908 = vpop.f32.mrb[0].mxu0
    %2909 = vmatprep.mubr.f32.mxu0 0.0
    %2910 = vmatmul.mubr.f32.gmra.mrb[0].mxu0 %v2818
    %v2911 = vpop.f32.mrb[0].mxu0
    %v2912 = vadd.f32 0.0, %v2911
    %v2913 = vpop.f32.mrb[0].mxu0
    %2914 = vmatprep.mubr.f32.mxu0 0.0
    %2915 = vmatmul.mubr.f32.gmra.mrb[0].mxu0 %v2821
    %v2916 = vpop.f32.mrb[0].mxu0
    %v2917 = vadd.f32 0.0, %v2916
    %v2918 = vpop.f32.mrb[0].mxu0
    %2919 = vmatprep.mubr.f32.mxu0 0.0
    %2920 = vmatmul.mubr.f32.gmra.mrb[0].mxu0 %v2824
    %v2921 = vpop.f32.mrb[0].mxu0
    %v2922 = vadd.f32 0.0, %v2921
    %v2923 = vpop.f32.mrb[0].mxu0
    %2924 = vmatprep.mubr.f32.mxu0 0.0
    %2925 = vmatmul.mubr.f32.gmra.mrb[0].mxu0 %v2827
    %v2926 = vpop.f32.mrb[0].mxu0
    %v2927 = vadd.f32 0.0, %v2926
    %v2928 = vpop.f32.mrb[0].mxu0
    %2929 = vmatprep.mubr.f32.mxu0 0.0
    %2930 = vmatmul.mubr.f32.gmra.mrb[0].mxu0 %v2830
    %v2931 = vpop.f32.mrb[0].mxu0
    %v2932 = vadd.f32 0.0, %v2931
    %v2933 = vpop.f32.mrb[0].mxu0
    %2934 = vdwg.mxu0
    %v2935 = vadd.f32 %v2656, %v2902
    %v2936 = vadd.f32 %v2661, %v2907
    %v2937 = vadd.f32 %v2666, %v2912
    %v2938 = vadd.f32 %v2671, %v2917
    %v2939 = vadd.f32 %v2676, %v2922
    %v2940 = vadd.f32 %v2681, %v2927
    %v2941 = vadd.f32 %v2686, %v2932
    %v2942 = vld [vmem:[%s12] sm:$0x1]
    %v2944 = vlaneseq
    %v2945 = vshrl.u32 %v2944, 7
    %v2946 = vsub.s32 0, %v2945
    %v2947 = vrot.slane %v2942, %v2946
    %v2949 = vadd.f32 %v2935, %v2947
    %v2950 = vadd.f32 %v2936, %v2947
    %v2951 = vadd.f32 %v2937, %v2947
    %v2952 = vadd.f32 %v2938, %v2947
    %v2953 = vadd.f32 %v2939, %v2947
    %v2954 = vadd.f32 %v2940, %v2947
    %v2955 = vadd.f32 %v2941, %v2947
    %v2956 = vxor.u32 %v2949, 2147483648
    %v2957 = vxor.u32 %v2950, 2147483648
    %v2958 = vxor.u32 %v2951, 2147483648
    %v2959 = vxor.u32 %v2952, 2147483648
    %v2960 = vxor.u32 %v2953, 2147483648
    %v2961 = vxor.u32 %v2954, 2147483648
    %v2962 = vxor.u32 %v2955, 2147483648
    %v2963 = vmul.f32 %v2956, 1.442695
    %v2964 = vpow.pop %v2963
    %v2965 = vmul.f32 %v2957, 1.442695
    %v2966 = vpow.pop %v2965
    %v2967 = vmul.f32 %v2958, 1.442695
    %v2968 = vpow.pop %v2967
    %v2969 = vmul.f32 %v2959, 1.442695
    %v2970 = vpow.pop %v2969
    %v2971 = vmul.f32 %v2960, 1.442695
    %v2972 = vpow.pop %v2971
    %v2973 = vmul.f32 %v2961, 1.442695
    %v2974 = vpow.pop %v2973
    %v2975 = vmul.f32 %v2962, 1.442695
    %v2976 = vpow.pop %v2975
    %v2977 = vadd.f32 %v2964, 1.0
    %v2978 = vadd.f32 %v2966, 1.0
    %v2979 = vadd.f32 %v2968, 1.0
    %v2980 = vadd.f32 %v2970, 1.0
    %v2981 = vadd.f32 %v2972, 1.0
    %v2982 = vadd.f32 %v2974, 1.0
    %v2983 = vadd.f32 %v2976, 1.0
    %v2984 = vrcp.pop %v2977
    %v2985 = vmul.f32 1.0, %v2984
    %v2986 = vrcp.pop %v2978
    %v2987 = vmul.f32 1.0, %v2986
    %v2988 = vrcp.pop %v2979
    %v2989 = vmul.f32 1.0, %v2988
    %v2990 = vrcp.pop %v2980
    %v2991 = vmul.f32 1.0, %v2990
    %v2992 = vrcp.pop %v2981
    %v2993 = vmul.f32 1.0, %v2992
    %v2994 = vrcp.pop %v2982
    %v2995 = vmul.f32 1.0, %v2994
    %v2996 = vrcp.pop %v2983
    %v2997 = vmul.f32 1.0, %v2996
    %2998 = vst.msk [vmem:[#allocation2] sm:$0xff] %vm2439, %v2985
    %2999 = vst.msk [vmem:[#allocation2 + $0x8] sm:$0xff] %vm2439, %v2987
    %3000 = vst.msk [vmem:[#allocation2 + $0x10] sm:$0xff] %vm2439, %v2989
    %3001 = vst.msk [vmem:[#allocation2 + $0x18] sm:$0xff] %vm2439, %v2991
    %3002 = vst.msk [vmem:[#allocation2 + $0x20] sm:$0xff] %vm2439, %v2993
    %3003 = vst.msk [vmem:[#allocation2 + $0x28] sm:$0xff] %vm2439, %v2995
    %3004 = vst.msk [vmem:[#allocation2 + $0x30] sm:$0xff] %vm2439, %v2997
    // Predicated region
    $region54: #{decoder_forward.1} parent=1 // pred_check
      _
    $region55: #{decoder_forward.1} parent=1 // pred_check_branch
      %3006 = sbr.rel (0) target = $region57
    $region56: #{decoder_forward.1} parent=1 // pred_region
      %s3008 = ssub.s32 896, 896
      %3009 = vsyncadd [#allocation3], %s3008
      %s3010 = sshll.u32 [#allocation2], 4
      %s3011 = int_to_ptr.vmem [resolvable:$true] %s3010
      %3016 = dma.vmem_to_hbm [thread:$0]  %s3011, 896, %s13, [#allocation3], 128, 128, 8
    $region57: #{decoder_forward.1} parent=1 // pred_fallthru
      _
    // Predicated region
    $region58: #{decoder_forward.1} parent=1 // pred_check
      _
    $region59: #{decoder_forward.1} parent=1 // pred_check_branch
      %3018 = sbr.rel (0) target = $region61
    $region60: #{decoder_forward.1} parent=1 // pred_region
      %3019 = dma.done [#allocation3], 896
    $region61: #{decoder_forward.1} parent=1 // pred_fallthru
      _
    %3020 = vsyncpa [#allocation3], 1

</llo_original>
